<compile_context>
chip_gen: v5e
topology: v5e:2x2
jax: 0.10.0
libtpu: 0.0.40
codegen_flags: <defaults>
</compile_context>

<pallas_src>
import numpy as np
import jax
import jax.numpy as jnp
from jax.experimental import pallas as pl
from jax.experimental.pallas import tpu as pltpu

# ----------------- small, self-consistent hyper-parameters -----------------
BATCH        = 2
MODEL_DIM    = 32            # exp.model_dim == event_latent_dim
LATENT_DIM   = MODEL_DIM
N_SAMPLES    = 2048          # exp.n_samples (scaled down from 2**15)
N_FRAMES     = 64            # exp.n_frames
N_BANDS      = 16            # scale.n_bands (MusicalScale)
RESOLUTION   = 32
SAMPLERATE   = 22050.0
WEIGHT_INIT  = 0.05
ENV_START    = 4
ENV_END      = N_FRAMES * 2  # 128 -> 5 nearest-x2 upsample blocks
TF_START     = 8
TF_END       = N_BANDS       # 16  -> 1 nearest-x2 upsample block
N_ENV_LAYERS = 5
N_TF_LAYERS  = 1
LEAKY_SLOPE  = 0.2

TILE_N = 1024                        # lane tile over n_samples
NT     = N_SAMPLES // TILE_N         # grid size (parallel axis)
assert N_SAMPLES % TILE_N == 0 and TILE_N % 128 == 0


# ---------------------------------------------------------------------------
# host-side constant builders (upsample / shift / interpolation matrices)
# ---------------------------------------------------------------------------

def _up_shift_mats(l_in):
    """U_k (l_in, 2*l_in): x @ U_k == tap-k window of pad(nearest_x2(x), 1)."""
    l_out = 2 * l_in
    mats = np.zeros((3, l_in, l_out), np.float32)
    for k in range(3):
        for j in range(l_out):
            src = j + k - 1
            if 0 <= src < l_out:
                mats[k, src // 2, j] = 1.0
    return mats


def _shift_mats(l):
    """S_k (l, l): x @ S_k == tap-k window of pad(x, 1)."""
    mats = np.zeros((3, l, l), np.float32)
    for k in range(3):
        for j in range(l):
            src = j + k - 1
            if 0 <= src < l:
                mats[k, src, j] = 1.0
    return mats


def _interp_mat(in_size, out_size):
    """F.interpolate(mode='linear', align_corners=False) as an (in, out) matrix."""
    pos = (np.arange(out_size, dtype=np.float64) + 0.5) * (in_size / out_size) - 0.5
    pos = np.clip(pos, 0.0, in_size - 1)
    lo = np.floor(pos).astype(np.int64)
    hi = np.minimum(lo + 1, in_size - 1)
    w = (pos - lo).astype(np.float32)
    cols = np.arange(out_size)
    m = np.zeros((in_size, out_size), np.float32)
    np.add.at(m, (lo, cols), 1.0 - w)
    np.add.at(m, (hi, cols), w)
    return m


def _block_diag(mat, n):
    r, c = mat.shape
    out = np.zeros((n * r, n * c), np.float32)
    for b in range(n):
        out[b * r:(b + 1) * r, b * c:(b + 1) * c] = mat
    return out


def _const_spec(shape):
    nd = len(shape)
    return pl.BlockSpec(shape, lambda i, _nd=nd: (0,) * _nd)


# ---------------------------------------------------------------------------
# the single fused Pallas kernel (both branches, full batch, one n_samples tile)
# ---------------------------------------------------------------------------

def _fused_kernel(env_h0_ref, tf_h0_ref,
                  env_wbd_ref, env_bbd_ref,
                  u0_ref, u1_ref, u2_ref, u3_ref, u4_ref,
                  env_wfbd_ref, env_bf_ref,
                  tf_ubd_ref, tf_w1t_ref, tf_b1_ref,
                  tf_sbd_ref, tf_wf_ref, tf_bf_ref,
                  decay_ref, avg_ref,
                  env_interp_ref, tf_interp_ref, osc_ref, noise_ref,
                  orig_env_ref, env_out_ref, tf_out_ref):
    bc = env_h0_ref.shape[0]                       # BATCH * MODEL_DIM

    # ---------------- env branch: 5x(nearest-x2 + Conv1d(3) + LeakyReLU) ----------------
    # activations (B*C, L): batch stacked along sublanes, channel mix via block-diag W.
    h = env_h0_ref[...]                            # (B*C, 4)
    for li, u_ref in enumerate((u0_ref, u1_ref, u2_ref, u3_ref, u4_ref)):
        t = jnp.dot(env_wbd_ref[li], h, preferred_element_type=jnp.float32)  # (3*B*C, L)
        acc = env_bbd_ref[li]                                                # (B*C, 1)
        for k in range(3):
            acc = acc + jnp.dot(t[k * bc:(k + 1) * bc], u_ref[k],
                                preferred_element_type=jnp.float32)
        h = jnp.where(acc > 0.0, acc, LEAKY_SLOPE * acc)                     # (B*C, 2L)

    # final Conv1d(C -> 1, k=3, pad=1): tap shifts via XLU roll (no 128x128 shift matmuls)
    v0 = jnp.dot(env_wfbd_ref[0], h, preferred_element_type=jnp.float32)     # (B, 128)
    v1 = jnp.dot(env_wfbd_ref[1], h, preferred_element_type=jnp.float32)
    v2 = jnp.dot(env_wfbd_ref[2], h, preferred_element_type=jnp.float32)
    length = v1.shape[-1]
    col = jax.lax.broadcasted_iota(jnp.int32, v1.shape, 1)
    v0 = jnp.where(col == 0, 0.0, pltpu.roll(v0, 1, axis=1))                 # shift right
    v2 = jnp.where(col == length - 1, 0.0, pltpu.roll(v2, length - 1, axis=1))  # shift left
    env_sig = jax.nn.sigmoid(env_bf_ref[...] + v0 + v1 + v2)                 # (B, 128)
    orig_env_ref[0] = env_sig                                                # identical per tile

    # linear-interp to this n_samples tile (one lane-dense matmul) + noise product
    env_up = jnp.dot(env_sig, env_interp_ref[...], preferred_element_type=jnp.float32)
    env_out_ref[...] = env_up * noise_ref[...]                               # (B, tile)

    # ---------------- transfer branch + TransferFunction ----------------
    # activations (B*len, C): batch stacked along sublanes, block-diag upsample/shift.
    g = tf_h0_ref[...]                                                       # (B*8, C)
    acc = tf_b1_ref[...]                                                     # (1, C)
    for k in range(3):
        acc = acc + jnp.dot(jnp.dot(tf_ubd_ref[k], g, preferred_element_type=jnp.float32),
                            tf_w1t_ref[k], preferred_element_type=jnp.float32)
    g = jnp.where(acc > 0.0, acc, LEAKY_SLOPE * acc)                         # (B*16, C)

    acc = tf_bf_ref[...]                                                     # (1, res)
    for k in range(3):
        acc = acc + jnp.dot(jnp.dot(tf_sbd_ref[k], g, preferred_element_type=jnp.float32),
                            tf_wf_ref[k], preferred_element_type=jnp.float32)

    # softmax over resolution, decay-curve mixing, interp, oscillators, band mean.
    m = jnp.max(acc, axis=-1, keepdims=True)
    e = jnp.exp(acc - m)
    p = e / jnp.sum(e, axis=-1, keepdims=True)                               # (B*16, res)
    amp = jnp.dot(p, decay_ref[...], preferred_element_type=jnp.float32)     # (B*16, 64)
    amp_up = jnp.dot(amp, tf_interp_ref[...], preferred_element_type=jnp.float32)
    banded = amp_up * osc_ref[...]                                           # (B*16, tile)
    # band mean (commuted through the linear FFT convolution) as a tiny matmul
    tf_out_ref[...] = jnp.dot(avg_ref[...], banded, preferred_element_type=jnp.float32)


# ---------------------------------------------------------------------------
# pallas_call wrapper
# ---------------------------------------------------------------------------

def fused_branches(consts, env_h0, tf_h0, noise):
    const_inputs = [
        env_h0, tf_h0,
        consts['env_wbd'], consts['env_bbd'],
        *consts['env_umats'],
        consts['env_wfbd'], consts['env_bf'],
        consts['tf_ubd'], consts['tf_w1t'], consts['tf_b1'],
        consts['tf_sbd'], consts['tf_wf'], consts['tf_bf'],
        consts['decay'], consts['avg'],
    ]
    tiled_inputs = [consts['env_interp'], consts['tf_interp'], consts['osc_st'], noise]

    in_specs = [_const_spec(a.shape) for a in const_inputs] + [
        pl.BlockSpec((ENV_END, TILE_N), lambda i: (0, i)),
        pl.BlockSpec((N_FRAMES, TILE_N), lambda i: (0, i)),
        pl.BlockSpec((BATCH * N_BANDS, TILE_N), lambda i: (0, i)),
        pl.BlockSpec((1, TILE_N), lambda i: (0, i)),
    ]
    out_shape = (
        jax.ShapeDtypeStruct((NT, BATCH, ENV_END), jnp.float32),   # orig env per tile
        jax.ShapeDtypeStruct((BATCH, N_SAMPLES), jnp.float32),     # env * noise
        jax.ShapeDtypeStruct((BATCH, N_SAMPLES), jnp.float32),     # band-mean transfer
    )
    out_specs = (
        pl.BlockSpec((1, BATCH, ENV_END), lambda i: (i, 0, 0)),
        pl.BlockSpec((BATCH, TILE_N), lambda i: (0, i)),
        pl.BlockSpec((BATCH, TILE_N), lambda i: (0, i)),
    )
    return pl.pallas_call(
        _fused_kernel,
        grid=(NT,),
        out_shape=out_shape,
        in_specs=in_specs,
        out_specs=out_specs,
        compiler_params=pltpu.CompilerParams(
            dimension_semantics=("parallel",)),      # v7x: one tile per TensorCore
    )(*const_inputs, *tiled_inputs)


# ---------------------------------------------------------------------------
# parameters + fused-layout constants
# ---------------------------------------------------------------------------

def init_params(key):
    ks = jax.random.split(key, 8)

    def rn(k, shape):
        return jax.random.normal(k, shape, jnp.float32) * WEIGHT_INIT

    env = {
        'w0': rn(ks[0], (LATENT_DIM, MODEL_DIM * ENV_START)),
        'b0': jnp.zeros((MODEL_DIM * ENV_START,), jnp.float32),
        'ups': [(rn(jax.random.fold_in(ks[1], i), (3, MODEL_DIM, MODEL_DIM)),
                 jnp.zeros((MODEL_DIM,), jnp.float32)) for i in range(N_ENV_LAYERS)],
        'wf': rn(ks[2], (3, MODEL_DIM)),
        'bf': jnp.zeros((), jnp.float32),
    }
    transfer = {
        'w0': rn(ks[3], (LATENT_DIM, MODEL_DIM * TF_START)),
        'b0': jnp.zeros((MODEL_DIM * TF_START,), jnp.float32),
        'up': (rn(ks[4], (3, MODEL_DIM, MODEL_DIM)), jnp.zeros((MODEL_DIM,), jnp.float32)),
        'wf': rn(ks[5], (3, MODEL_DIM, RESOLUTION)),
        'bf': jnp.zeros((RESOLUTION,), jnp.float32),
    }

    # TransferFunction constants: MusicalScale band oscillators + per-resolution decay curves
    freqs = jnp.geomspace(40.0, SAMPLERATE / 2.0 * 0.9, N_BANDS)
    t = jnp.arange(N_SAMPLES, dtype=jnp.float32) / SAMPLERATE
    osc = jnp.sin(2.0 * jnp.pi * freqs[:, None] * t[None, :])            # (n_bands, n)
    decays = jnp.linspace(0.01, 0.999, RESOLUTION)
    frames = jnp.arange(N_FRAMES, dtype=jnp.float32)
    decay_curves = decays[:, None] ** frames[None, :]                    # (res, n_frames)

    return {'env': env, 'transfer': transfer,
            'noise_factor': jnp.full((1,), 1.0e5, jnp.float32),          # nn.Parameter(100000.)
            'osc': osc.astype(jnp.float32),
            'decay_curves': decay_curves.astype(jnp.float32)}


def prepare_constants(params):
    """Repack parameters into the fused-kernel layout: batch-block-diagonal conv taps,
    constant nearest-x2/shift matrices, interpolation matrices, band-average matrix."""
    c_dim = MODEL_DIM
    env, tfp = params['env'], params['transfer']
    consts = {}

    # --- env branch (activations (B*C, L)) ---
    consts['env_w0flat'] = env['w0']                                     # (K, C*start)
    consts['env_b0flat'] = env['b0'][None, :]                            # (1, C*start)

    wbd = np.zeros((N_ENV_LAYERS, 3 * BATCH * c_dim, BATCH * c_dim), np.float32)
    bbd = np.zeros((N_ENV_LAYERS, BATCH * c_dim, 1), np.float32)
    umats = []
    l_in = ENV_START
    for li, (w, b) in enumerate(env['ups']):
        w_np, b_np = np.asarray(w), np.asarray(b)
        for k in range(3):                                               # tap-major rows
            for bb in range(BATCH):                                      # block-diag over batch
                r0 = k * BATCH * c_dim + bb * c_dim
                wbd[li, r0:r0 + c_dim, bb * c_dim:(bb + 1) * c_dim] = w_np[k]
        bbd[li, :, 0] = np.tile(b_np, BATCH)
        umats.append(jnp.asarray(_up_shift_mats(l_in)))                  # (3, L, 2L), shared
        l_in *= 2
    consts['env_wbd'] = jnp.asarray(wbd)                                 # (5, 3BC, BC)
    consts['env_bbd'] = jnp.asarray(bbd)                                 # (5, BC, 1)
    consts['env_umats'] = umats

    wf_np = np.asarray(env['wf'])                                        # (3, C)
    wfbd = np.zeros((3, BATCH, BATCH * c_dim), np.float32)
    for k in range(3):
        for bb in range(BATCH):
            wfbd[k, bb, bb * c_dim:(bb + 1) * c_dim] = wf_np[k]
    consts['env_wfbd'] = jnp.asarray(wfbd)                               # (3, B, BC)
    consts['env_bf'] = jnp.reshape(env['bf'], (1, 1))
    consts['env_interp'] = jnp.asarray(_interp_mat(ENV_END, N_SAMPLES))  # (128, n)

    # --- transfer branch (activations (B*len, C)) ---
    consts['tf_w0flat'] = tfp['w0']                                      # (K, start*C)
    consts['tf_b0flat'] = tfp['b0'][None, :]

    u = _up_shift_mats(TF_START)                                         # (3, 8, 16)
    consts['tf_ubd'] = jnp.asarray(
        np.stack([_block_diag(u[k].T, BATCH) for k in range(3)]))        # (3, B*16, B*8)
    w1, b1 = tfp['up']
    consts['tf_w1t'] = jnp.transpose(w1, (0, 2, 1))                      # (3, C, C)
    consts['tf_b1'] = b1[None, :]                                        # (1, C)

    s = _shift_mats(TF_END)                                              # (3, 16, 16)
    consts['tf_sbd'] = jnp.asarray(
        np.stack([_block_diag(s[k].T, BATCH) for k in range(3)]))        # (3, B*16, B*16)
    consts['tf_wf'] = tfp['wf']                                          # (3, C, res)
    consts['tf_bf'] = tfp['bf'][None, :]                                 # (1, res)
    consts['decay'] = params['decay_curves']                             # (res, n_frames)
    consts['tf_interp'] = jnp.asarray(_interp_mat(N_FRAMES, N_SAMPLES))  # (64, n)
    consts['osc_st'] = jnp.tile(params['osc'], (BATCH, 1))               # (B*16, n)

    avg = np.zeros((BATCH, BATCH * N_BANDS), np.float32)                 # band mean matrix
    for bb in range(BATCH):
        avg[bb, bb * N_BANDS:(bb + 1) * N_BANDS] = 1.0 / N_BANDS
    consts['avg'] = jnp.asarray(avg)
    consts['noise_factor'] = params['noise_factor']
    return consts


# ---------------------------------------------------------------------------
# forward
# ---------------------------------------------------------------------------

def segment_generator_forward(consts, time, transfer, noise_key):
    del time                                          # unused by the reference forward
    z = transfer.reshape(-1, LATENT_DIM).astype(jnp.float32)
    bsz = z.shape[0]
    assert bsz == BATCH                               # fused constants are built for this batch

    # Shared-across-batch noise, exactly like the reference (torch.zeros(1,1,n).uniform_(-1,1)).
    noise = jax.random.uniform(noise_key, (1, N_SAMPLES), minval=-1.0, maxval=1.0,
                               dtype=jnp.float32) * consts['noise_factor']

    # The two Linear layers run as single MXU matmuls in XLA; the reshape into the kernel's
    # batch-stacked layouts is free here (vs. an in-kernel relayout or a 32-deep FMA chain).
    env_h0 = (z @ consts['env_w0flat'] + consts['env_b0flat']).reshape(bsz * MODEL_DIM, ENV_START)
    tf_h0 = (z @ consts['tf_w0flat'] + consts['tf_b0flat']).reshape(bsz * TF_START, MODEL_DIM)

    orig_env_tiles, env, tf_mean = fused_branches(consts, env_h0, tf_h0, noise)
    orig_env = orig_env_tiles[0]                      # every tile writes identical values

    loss = 0
    # fft_convolve + mean over bands (band mean already folded into tf_mean, valid by
    # linearity of rfft/irfft).  Spectrum product stays in XLA (no Pallas launch here).
    n = N_SAMPLES
    env_spec = jnp.fft.rfft(env, n=2 * n, axis=-1, norm='ortho')
    tf_spec = jnp.fft.rfft(tf_mean, n=2 * n, axis=-1, norm='ortho')
    final = jnp.fft.irfft(env_spec * tf_spec, n=2 * n, axis=-1, norm='ortho')[..., :n]

    final = final.reshape(bsz, 1, n)
    orig_env = orig_env.reshape(bsz, 1, ENV_END)
    orig_tf = None
    return final, orig_env, loss, orig_tf


if __name__ == "__main__":
    key = jax.random.PRNGKey(0)
    pkey, time_key, tr_key, noise_key = jax.random.split(key, 4)
    params = init_params(pkey)
    consts = prepare_constants(params)

    time_in = jax.random.normal(time_key, (BATCH, LATENT_DIM), jnp.float32)
    transfer_in = jax.random.normal(tr_key, (BATCH, LATENT_DIM), jnp.float32)

    fwd = jax.jit(segment_generator_forward)
    final, orig_env, loss, orig_tf = fwd(consts, time_in, transfer_in, noise_key)
    jax.block_until_ready(final)
    jax.block_until_ready(orig_env)

    assert final.shape == (BATCH, 1, N_SAMPLES)
    assert orig_env.shape == (BATCH, 1, ENV_END)
    assert bool(jnp.all(jnp.isfinite(final)))
    assert bool(jnp.all(jnp.isfinite(orig_env)))
    print("KERNEL_OK")
</pallas_src>

<mosaic_0001>
module attributes {stable_mosaic.version = 11 : i64} {
  func.func @_fused_kernel(%arg0: i32, %arg1: memref<64x4xf32, #tpu.memory_space<vmem>>, %arg2: memref<16x32xf32, #tpu.memory_space<vmem>>, %arg3: memref<5x192x64xf32, #tpu.memory_space<vmem>>, %arg4: memref<5x64x1xf32, #tpu.memory_space<vmem>>, %arg5: memref<3x4x8xf32, #tpu.memory_space<vmem>>, %arg6: memref<3x8x16xf32, #tpu.memory_space<vmem>>, %arg7: memref<3x16x32xf32, #tpu.memory_space<vmem>>, %arg8: memref<3x32x64xf32, #tpu.memory_space<vmem>>, %arg9: memref<3x64x128xf32, #tpu.memory_space<vmem>>, %arg10: memref<3x2x64xf32, #tpu.memory_space<vmem>>, %arg11: memref<1x1xf32, #tpu.memory_space<vmem>>, %arg12: memref<3x32x16xf32, #tpu.memory_space<vmem>>, %arg13: memref<3x32x32xf32, #tpu.memory_space<vmem>>, %arg14: memref<1x32xf32, #tpu.memory_space<vmem>>, %arg15: memref<3x32x32xf32, #tpu.memory_space<vmem>>, %arg16: memref<3x32x32xf32, #tpu.memory_space<vmem>>, %arg17: memref<1x32xf32, #tpu.memory_space<vmem>>, %arg18: memref<32x64xf32, #tpu.memory_space<vmem>>, %arg19: memref<2x32xf32, #tpu.memory_space<vmem>>, %arg20: memref<128x1024xf32, #tpu.memory_space<vmem>>, %arg21: memref<64x1024xf32, #tpu.memory_space<vmem>>, %arg22: memref<32x1024xf32, #tpu.memory_space<vmem>>, %arg23: memref<1x1024xf32, #tpu.memory_space<vmem>>, %arg24: memref<1x2x128xf32, #tpu.memory_space<vmem>>, %arg25: memref<2x1024xf32, #tpu.memory_space<vmem>>, %arg26: memref<2x1024xf32, #tpu.memory_space<vmem>>) attributes {dimension_semantics = [#tpu.dimension_semantics<parallel>], iteration_bounds = array<i64: 2>, scalar_prefetch = 0 : i64, scratch_operands = 0 : i64, tpu.core_type = #tpu.core_type<tc>, window_params = [{pipeline_mode = #tpu.pipeline_mode<synchronous>, transform_indices = @transform_0, window_bounds = array<i64: 64, 4>}, {pipeline_mode = #tpu.pipeline_mode<synchronous>, transform_indices = @transform_1, window_bounds = array<i64: 16, 32>}, {pipeline_mode = #tpu.pipeline_mode<synchronous>, transform_indices = @transform_2, window_bounds = array<i64: 5, 192, 64>}, {pipeline_mode = #tpu.pipeline_mode<synchronous>, transform_indices = @transform_3, window_bounds = array<i64: 5, 64, 1>}, {pipeline_mode = #tpu.pipeline_mode<synchronous>, transform_indices = @transform_4, window_bounds = array<i64: 3, 4, 8>}, {pipeline_mode = #tpu.pipeline_mode<synchronous>, transform_indices = @transform_5, window_bounds = array<i64: 3, 8, 16>}, {pipeline_mode = #tpu.pipeline_mode<synchronous>, transform_indices = @transform_6, window_bounds = array<i64: 3, 16, 32>}, {pipeline_mode = #tpu.pipeline_mode<synchronous>, transform_indices = @transform_7, window_bounds = array<i64: 3, 32, 64>}, {pipeline_mode = #tpu.pipeline_mode<synchronous>, transform_indices = @transform_8, window_bounds = array<i64: 3, 64, 128>}, {pipeline_mode = #tpu.pipeline_mode<synchronous>, transform_indices = @transform_9, window_bounds = array<i64: 3, 2, 64>}, {pipeline_mode = #tpu.pipeline_mode<synchronous>, transform_indices = @transform_10, window_bounds = array<i64: 1, 1>}, {pipeline_mode = #tpu.pipeline_mode<synchronous>, transform_indices = @transform_11, window_bounds = array<i64: 3, 32, 16>}, {pipeline_mode = #tpu.pipeline_mode<synchronous>, transform_indices = @transform_12, window_bounds = array<i64: 3, 32, 32>}, {pipeline_mode = #tpu.pipeline_mode<synchronous>, transform_indices = @transform_13, window_bounds = array<i64: 1, 32>}, {pipeline_mode = #tpu.pipeline_mode<synchronous>, transform_indices = @transform_14, window_bounds = array<i64: 3, 32, 32>}, {pipeline_mode = #tpu.pipeline_mode<synchronous>, transform_indices = @transform_15, window_bounds = array<i64: 3, 32, 32>}, {pipeline_mode = #tpu.pipeline_mode<synchronous>, transform_indices = @transform_16, window_bounds = array<i64: 1, 32>}, {pipeline_mode = #tpu.pipeline_mode<synchronous>, transform_indices = @transform_17, window_bounds = array<i64: 32, 64>}, {pipeline_mode = #tpu.pipeline_mode<synchronous>, transform_indices = @transform_18, window_bounds = array<i64: 2, 32>}, {transform_indices = @transform_19, window_bounds = array<i64: 128, 1024>}, {transform_indices = @transform_20, window_bounds = array<i64: 64, 1024>}, {transform_indices = @transform_21, window_bounds = array<i64: 32, 1024>}, {transform_indices = @transform_22, window_bounds = array<i64: 1, 1024>}, {transform_indices = @transform_23, window_bounds = array<i64: 1, 2, 128>}, {transform_indices = @transform_24, window_bounds = array<i64: 2, 1024>}, {transform_indices = @transform_25, window_bounds = array<i64: 2, 1024>}]} {
    %c0 = arith.constant 0 : index
    %c0_0 = arith.constant 0 : index
    %0 = vector.load %arg1[%c0, %c0_0] : memref<64x4xf32, #tpu.memory_space<vmem>>, vector<64x4xf32>
    %c0_1 = arith.constant 0 : index
    %c0_2 = arith.constant 0 : index
    %c0_3 = arith.constant 0 : index
    %1 = vector.load %arg3[%c0_1, %c0_2, %c0_3] : memref<5x192x64xf32, #tpu.memory_space<vmem>>, vector<1x192x64xf32>
    %2 = vector.shape_cast %1 : vector<1x192x64xf32> to vector<192x64xf32>
    %cst = arith.constant dense<0.000000e+00> : vector<192x4xf32>
    %3 = tpu.matmul %2, %0, %cst {dimension_numbers = #tpu.dot_dimension_numbers<[1], [0], [0], [1], [0, 0, 1, 1], [], []>} : vector<192x64xf32>, vector<64x4xf32>, vector<192x4xf32> -> vector<192x4xf32>
    %c0_4 = arith.constant 0 : index
    %c0_5 = arith.constant 0 : index
    %c0_6 = arith.constant 0 : index
    %4 = vector.load %arg4[%c0_4, %c0_5, %c0_6] : memref<5x64x1xf32, #tpu.memory_space<vmem>>, vector<1x64x1xf32>
    %5 = vector.shape_cast %4 : vector<1x64x1xf32> to vector<64x1xf32>
    %6 = vector.extract_strided_slice %3 {offsets = [0, 0], sizes = [64, 4], strides = [1, 1]} : vector<192x4xf32> to vector<64x4xf32>
    %c0_7 = arith.constant 0 : index
    %c0_8 = arith.constant 0 : index
    %c0_9 = arith.constant 0 : index
    %7 = vector.load %arg5[%c0_7, %c0_8, %c0_9] : memref<3x4x8xf32, #tpu.memory_space<vmem>>, vector<1x4x8xf32>
    %8 = vector.shape_cast %7 : vector<1x4x8xf32> to vector<4x8xf32>
    %cst_10 = arith.constant dense<0.000000e+00> : vector<64x8xf32>
    %9 = tpu.matmul %6, %8, %cst_10 {dimension_numbers = #tpu.dot_dimension_numbers<[1], [0], [0], [1], [0, 0, 1, 1], [], []>} : vector<64x4xf32>, vector<4x8xf32>, vector<64x8xf32> -> vector<64x8xf32>
    %10 = vector.broadcast %5 : vector<64x1xf32> to vector<64x8xf32>
    %11 = arith.addf %10, %9 : vector<64x8xf32>
    %12 = vector.extract_strided_slice %3 {offsets = [64, 0], sizes = [64, 4], strides = [1, 1]} : vector<192x4xf32> to vector<64x4xf32>
    %c1 = arith.constant 1 : index
    %c0_11 = arith.constant 0 : index
    %c0_12 = arith.constant 0 : index
    %13 = vector.load %arg5[%c1, %c0_11, %c0_12] : memref<3x4x8xf32, #tpu.memory_space<vmem>>, vector<1x4x8xf32>
    %14 = vector.shape_cast %13 : vector<1x4x8xf32> to vector<4x8xf32>
    %cst_13 = arith.constant dense<0.000000e+00> : vector<64x8xf32>
    %15 = tpu.matmul %12, %14, %cst_13 {dimension_numbers = #tpu.dot_dimension_numbers<[1], [0], [0], [1], [0, 0, 1, 1], [], []>} : vector<64x4xf32>, vector<4x8xf32>, vector<64x8xf32> -> vector<64x8xf32>
    %16 = arith.addf %11, %15 : vector<64x8xf32>
    %17 = vector.extract_strided_slice %3 {offsets = [128, 0], sizes = [64, 4], strides = [1, 1]} : vector<192x4xf32> to vector<64x4xf32>
    %c2 = arith.constant 2 : index
    %c0_14 = arith.constant 0 : index
    %c0_15 = arith.constant 0 : index
    %18 = vector.load %arg5[%c2, %c0_14, %c0_15] : memref<3x4x8xf32, #tpu.memory_space<vmem>>, vector<1x4x8xf32>
    %19 = vector.shape_cast %18 : vector<1x4x8xf32> to vector<4x8xf32>
    %cst_16 = arith.constant dense<0.000000e+00> : vector<64x8xf32>
    %20 = tpu.matmul %17, %19, %cst_16 {dimension_numbers = #tpu.dot_dimension_numbers<[1], [0], [0], [1], [0, 0, 1, 1], [], []>} : vector<64x4xf32>, vector<4x8xf32>, vector<64x8xf32> -> vector<64x8xf32>
    %21 = arith.addf %16, %20 : vector<64x8xf32>
    %cst_17 = arith.constant 0.000000e+00 : f32
    %22 = vector.broadcast %cst_17 : f32 to vector<64x8xf32>
    %23 = arith.cmpf ogt, %21, %22 : vector<64x8xf32>
    %cst_18 = arith.constant 2.000000e-01 : f32
    %24 = vector.broadcast %cst_18 : f32 to vector<64x8xf32>
    %25 = arith.mulf %24, %21 : vector<64x8xf32>
    %26 = arith.select %23, %21, %25 : vector<64x8xi1>, vector<64x8xf32>
    %c1_19 = arith.constant 1 : index
    %c0_20 = arith.constant 0 : index
    %c0_21 = arith.constant 0 : index
    %27 = vector.load %arg3[%c1_19, %c0_20, %c0_21] : memref<5x192x64xf32, #tpu.memory_space<vmem>>, vector<1x192x64xf32>
    %28 = vector.shape_cast %27 : vector<1x192x64xf32> to vector<192x64xf32>
    %cst_22 = arith.constant dense<0.000000e+00> : vector<192x8xf32>
    %29 = tpu.matmul %28, %26, %cst_22 {dimension_numbers = #tpu.dot_dimension_numbers<[1], [0], [0], [1], [0, 0, 1, 1], [], []>} : vector<192x64xf32>, vector<64x8xf32>, vector<192x8xf32> -> vector<192x8xf32>
    %c1_23 = arith.constant 1 : index
    %c0_24 = arith.constant 0 : index
    %c0_25 = arith.constant 0 : index
    %30 = vector.load %arg4[%c1_23, %c0_24, %c0_25] : memref<5x64x1xf32, #tpu.memory_space<vmem>>, vector<1x64x1xf32>
    %31 = vector.shape_cast %30 : vector<1x64x1xf32> to vector<64x1xf32>
    %32 = vector.extract_strided_slice %29 {offsets = [0, 0], sizes = [64, 8], strides = [1, 1]} : vector<192x8xf32> to vector<64x8xf32>
    %c0_26 = arith.constant 0 : index
    %c0_27 = arith.constant 0 : index
    %c0_28 = arith.constant 0 : index
    %33 = vector.load %arg6[%c0_26, %c0_27, %c0_28] : memref<3x8x16xf32, #tpu.memory_space<vmem>>, vector<1x8x16xf32>
    %34 = vector.shape_cast %33 : vector<1x8x16xf32> to vector<8x16xf32>
    %cst_29 = arith.constant dense<0.000000e+00> : vector<64x16xf32>
    %35 = tpu.matmul %32, %34, %cst_29 {dimension_numbers = #tpu.dot_dimension_numbers<[1], [0], [0], [1], [0, 0, 1, 1], [], []>} : vector<64x8xf32>, vector<8x16xf32>, vector<64x16xf32> -> vector<64x16xf32>
    %36 = vector.broadcast %31 : vector<64x1xf32> to vector<64x16xf32>
    %37 = arith.addf %36, %35 : vector<64x16xf32>
    %38 = vector.extract_strided_slice %29 {offsets = [64, 0], sizes = [64, 8], strides = [1, 1]} : vector<192x8xf32> to vector<64x8xf32>
    %c1_30 = arith.constant 1 : index
    %c0_31 = arith.constant 0 : index
    %c0_32 = arith.constant 0 : index
    %39 = vector.load %arg6[%c1_30, %c0_31, %c0_32] : memref<3x8x16xf32, #tpu.memory_space<vmem>>, vector<1x8x16xf32>
    %40 = vector.shape_cast %39 : vector<1x8x16xf32> to vector<8x16xf32>
    %cst_33 = arith.constant dense<0.000000e+00> : vector<64x16xf32>
    %41 = tpu.matmul %38, %40, %cst_33 {dimension_numbers = #tpu.dot_dimension_numbers<[1], [0], [0], [1], [0, 0, 1, 1], [], []>} : vector<64x8xf32>, vector<8x16xf32>, vector<64x16xf32> -> vector<64x16xf32>
    %42 = arith.addf %37, %41 : vector<64x16xf32>
    %43 = vector.extract_strided_slice %29 {offsets = [128, 0], sizes = [64, 8], strides = [1, 1]} : vector<192x8xf32> to vector<64x8xf32>
    %c2_34 = arith.constant 2 : index
    %c0_35 = arith.constant 0 : index
    %c0_36 = arith.constant 0 : index
    %44 = vector.load %arg6[%c2_34, %c0_35, %c0_36] : memref<3x8x16xf32, #tpu.memory_space<vmem>>, vector<1x8x16xf32>
    %45 = vector.shape_cast %44 : vector<1x8x16xf32> to vector<8x16xf32>
    %cst_37 = arith.constant dense<0.000000e+00> : vector<64x16xf32>
    %46 = tpu.matmul %43, %45, %cst_37 {dimension_numbers = #tpu.dot_dimension_numbers<[1], [0], [0], [1], [0, 0, 1, 1], [], []>} : vector<64x8xf32>, vector<8x16xf32>, vector<64x16xf32> -> vector<64x16xf32>
    %47 = arith.addf %42, %46 : vector<64x16xf32>
    %cst_38 = arith.constant 0.000000e+00 : f32
    %48 = vector.broadcast %cst_38 : f32 to vector<64x16xf32>
    %49 = arith.cmpf ogt, %47, %48 : vector<64x16xf32>
    %cst_39 = arith.constant 2.000000e-01 : f32
    %50 = vector.broadcast %cst_39 : f32 to vector<64x16xf32>
    %51 = arith.mulf %50, %47 : vector<64x16xf32>
    %52 = arith.select %49, %47, %51 : vector<64x16xi1>, vector<64x16xf32>
    %c2_40 = arith.constant 2 : index
    %c0_41 = arith.constant 0 : index
    %c0_42 = arith.constant 0 : index
    %53 = vector.load %arg3[%c2_40, %c0_41, %c0_42] : memref<5x192x64xf32, #tpu.memory_space<vmem>>, vector<1x192x64xf32>
    %54 = vector.shape_cast %53 : vector<1x192x64xf32> to vector<192x64xf32>
    %cst_43 = arith.constant dense<0.000000e+00> : vector<192x16xf32>
    %55 = tpu.matmul %54, %52, %cst_43 {dimension_numbers = #tpu.dot_dimension_numbers<[1], [0], [0], [1], [0, 0, 1, 1], [], []>} : vector<192x64xf32>, vector<64x16xf32>, vector<192x16xf32> -> vector<192x16xf32>
    %c2_44 = arith.constant 2 : index
    %c0_45 = arith.constant 0 : index
    %c0_46 = arith.constant 0 : index
    %56 = vector.load %arg4[%c2_44, %c0_45, %c0_46] : memref<5x64x1xf32, #tpu.memory_space<vmem>>, vector<1x64x1xf32>
    %57 = vector.shape_cast %56 : vector<1x64x1xf32> to vector<64x1xf32>
    %58 = vector.extract_strided_slice %55 {offsets = [0, 0], sizes = [64, 16], strides = [1, 1]} : vector<192x16xf32> to vector<64x16xf32>
    %c0_47 = arith.constant 0 : index
    %c0_48 = arith.constant 0 : index
    %c0_49 = arith.constant 0 : index
    %59 = vector.load %arg7[%c0_47, %c0_48, %c0_49] : memref<3x16x32xf32, #tpu.memory_space<vmem>>, vector<1x16x32xf32>
    %60 = vector.shape_cast %59 : vector<1x16x32xf32> to vector<16x32xf32>
    %cst_50 = arith.constant dense<0.000000e+00> : vector<64x32xf32>
    %61 = tpu.matmul %58, %60, %cst_50 {dimension_numbers = #tpu.dot_dimension_numbers<[1], [0], [0], [1], [0, 0, 1, 1], [], []>} : vector<64x16xf32>, vector<16x32xf32>, vector<64x32xf32> -> vector<64x32xf32>
    %62 = vector.broadcast %57 : vector<64x1xf32> to vector<64x32xf32>
    %63 = arith.addf %62, %61 : vector<64x32xf32>
    %64 = vector.extract_strided_slice %55 {offsets = [64, 0], sizes = [64, 16], strides = [1, 1]} : vector<192x16xf32> to vector<64x16xf32>
    %c1_51 = arith.constant 1 : index
    %c0_52 = arith.constant 0 : index
    %c0_53 = arith.constant 0 : index
    %65 = vector.load %arg7[%c1_51, %c0_52, %c0_53] : memref<3x16x32xf32, #tpu.memory_space<vmem>>, vector<1x16x32xf32>
    %66 = vector.shape_cast %65 : vector<1x16x32xf32> to vector<16x32xf32>
    %cst_54 = arith.constant dense<0.000000e+00> : vector<64x32xf32>
    %67 = tpu.matmul %64, %66, %cst_54 {dimension_numbers = #tpu.dot_dimension_numbers<[1], [0], [0], [1], [0, 0, 1, 1], [], []>} : vector<64x16xf32>, vector<16x32xf32>, vector<64x32xf32> -> vector<64x32xf32>
    %68 = arith.addf %63, %67 : vector<64x32xf32>
    %69 = vector.extract_strided_slice %55 {offsets = [128, 0], sizes = [64, 16], strides = [1, 1]} : vector<192x16xf32> to vector<64x16xf32>
    %c2_55 = arith.constant 2 : index
    %c0_56 = arith.constant 0 : index
    %c0_57 = arith.constant 0 : index
    %70 = vector.load %arg7[%c2_55, %c0_56, %c0_57] : memref<3x16x32xf32, #tpu.memory_space<vmem>>, vector<1x16x32xf32>
    %71 = vector.shape_cast %70 : vector<1x16x32xf32> to vector<16x32xf32>
    %cst_58 = arith.constant dense<0.000000e+00> : vector<64x32xf32>
    %72 = tpu.matmul %69, %71, %cst_58 {dimension_numbers = #tpu.dot_dimension_numbers<[1], [0], [0], [1], [0, 0, 1, 1], [], []>} : vector<64x16xf32>, vector<16x32xf32>, vector<64x32xf32> -> vector<64x32xf32>
    %73 = arith.addf %68, %72 : vector<64x32xf32>
    %cst_59 = arith.constant 0.000000e+00 : f32
    %74 = vector.broadcast %cst_59 : f32 to vector<64x32xf32>
    %75 = arith.cmpf ogt, %73, %74 : vector<64x32xf32>
    %cst_60 = arith.constant 2.000000e-01 : f32
    %76 = vector.broadcast %cst_60 : f32 to vector<64x32xf32>
    %77 = arith.mulf %76, %73 : vector<64x32xf32>
    %78 = arith.select %75, %73, %77 : vector<64x32xi1>, vector<64x32xf32>
    %c3 = arith.constant 3 : index
    %c0_61 = arith.constant 0 : index
    %c0_62 = arith.constant 0 : index
    %79 = vector.load %arg3[%c3, %c0_61, %c0_62] : memref<5x192x64xf32, #tpu.memory_space<vmem>>, vector<1x192x64xf32>
    %80 = vector.shape_cast %79 : vector<1x192x64xf32> to vector<192x64xf32>
    %cst_63 = arith.constant dense<0.000000e+00> : vector<192x32xf32>
    %81 = tpu.matmul %80, %78, %cst_63 {dimension_numbers = #tpu.dot_dimension_numbers<[1], [0], [0], [1], [0, 0, 1, 1], [], []>} : vector<192x64xf32>, vector<64x32xf32>, vector<192x32xf32> -> vector<192x32xf32>
    %c3_64 = arith.constant 3 : index
    %c0_65 = arith.constant 0 : index
    %c0_66 = arith.constant 0 : index
    %82 = vector.load %arg4[%c3_64, %c0_65, %c0_66] : memref<5x64x1xf32, #tpu.memory_space<vmem>>, vector<1x64x1xf32>
    %83 = vector.shape_cast %82 : vector<1x64x1xf32> to vector<64x1xf32>
    %84 = vector.extract_strided_slice %81 {offsets = [0, 0], sizes = [64, 32], strides = [1, 1]} : vector<192x32xf32> to vector<64x32xf32>
    %c0_67 = arith.constant 0 : index
    %c0_68 = arith.constant 0 : index
    %c0_69 = arith.constant 0 : index
    %85 = vector.load %arg8[%c0_67, %c0_68, %c0_69] : memref<3x32x64xf32, #tpu.memory_space<vmem>>, vector<1x32x64xf32>
    %86 = vector.shape_cast %85 : vector<1x32x64xf32> to vector<32x64xf32>
    %cst_70 = arith.constant dense<0.000000e+00> : vector<64x64xf32>
    %87 = tpu.matmul %84, %86, %cst_70 {dimension_numbers = #tpu.dot_dimension_numbers<[1], [0], [0], [1], [0, 0, 1, 1], [], []>} : vector<64x32xf32>, vector<32x64xf32>, vector<64x64xf32> -> vector<64x64xf32>
    %88 = vector.broadcast %83 : vector<64x1xf32> to vector<64x64xf32>
    %89 = arith.addf %88, %87 : vector<64x64xf32>
    %90 = vector.extract_strided_slice %81 {offsets = [64, 0], sizes = [64, 32], strides = [1, 1]} : vector<192x32xf32> to vector<64x32xf32>
    %c1_71 = arith.constant 1 : index
    %c0_72 = arith.constant 0 : index
    %c0_73 = arith.constant 0 : index
    %91 = vector.load %arg8[%c1_71, %c0_72, %c0_73] : memref<3x32x64xf32, #tpu.memory_space<vmem>>, vector<1x32x64xf32>
    %92 = vector.shape_cast %91 : vector<1x32x64xf32> to vector<32x64xf32>
    %cst_74 = arith.constant dense<0.000000e+00> : vector<64x64xf32>
    %93 = tpu.matmul %90, %92, %cst_74 {dimension_numbers = #tpu.dot_dimension_numbers<[1], [0], [0], [1], [0, 0, 1, 1], [], []>} : vector<64x32xf32>, vector<32x64xf32>, vector<64x64xf32> -> vector<64x64xf32>
    %94 = arith.addf %89, %93 : vector<64x64xf32>
    %95 = vector.extract_strided_slice %81 {offsets = [128, 0], sizes = [64, 32], strides = [1, 1]} : vector<192x32xf32> to vector<64x32xf32>
    %c2_75 = arith.constant 2 : index
    %c0_76 = arith.constant 0 : index
    %c0_77 = arith.constant 0 : index
    %96 = vector.load %arg8[%c2_75, %c0_76, %c0_77] : memref<3x32x64xf32, #tpu.memory_space<vmem>>, vector<1x32x64xf32>
    %97 = vector.shape_cast %96 : vector<1x32x64xf32> to vector<32x64xf32>
    %cst_78 = arith.constant dense<0.000000e+00> : vector<64x64xf32>
    %98 = tpu.matmul %95, %97, %cst_78 {dimension_numbers = #tpu.dot_dimension_numbers<[1], [0], [0], [1], [0, 0, 1, 1], [], []>} : vector<64x32xf32>, vector<32x64xf32>, vector<64x64xf32> -> vector<64x64xf32>
    %99 = arith.addf %94, %98 : vector<64x64xf32>
    %cst_79 = arith.constant 0.000000e+00 : f32
    %100 = vector.broadcast %cst_79 : f32 to vector<64x64xf32>
    %101 = arith.cmpf ogt, %99, %100 : vector<64x64xf32>
    %cst_80 = arith.constant 2.000000e-01 : f32
    %102 = vector.broadcast %cst_80 : f32 to vector<64x64xf32>
    %103 = arith.mulf %102, %99 : vector<64x64xf32>
    %104 = arith.select %101, %99, %103 : vector<64x64xi1>, vector<64x64xf32>
    %c4 = arith.constant 4 : index
    %c0_81 = arith.constant 0 : index
    %c0_82 = arith.constant 0 : index
    %105 = vector.load %arg3[%c4, %c0_81, %c0_82] : memref<5x192x64xf32, #tpu.memory_space<vmem>>, vector<1x192x64xf32>
    %106 = vector.shape_cast %105 : vector<1x192x64xf32> to vector<192x64xf32>
    %cst_83 = arith.constant dense<0.000000e+00> : vector<192x64xf32>
    %107 = tpu.matmul %106, %104, %cst_83 {dimension_numbers = #tpu.dot_dimension_numbers<[1], [0], [0], [1], [0, 0, 1, 1], [], []>} : vector<192x64xf32>, vector<64x64xf32>, vector<192x64xf32> -> vector<192x64xf32>
    %c4_84 = arith.constant 4 : index
    %c0_85 = arith.constant 0 : index
    %c0_86 = arith.constant 0 : index
    %108 = vector.load %arg4[%c4_84, %c0_85, %c0_86] : memref<5x64x1xf32, #tpu.memory_space<vmem>>, vector<1x64x1xf32>
    %109 = vector.shape_cast %108 : vector<1x64x1xf32> to vector<64x1xf32>
    %110 = vector.extract_strided_slice %107 {offsets = [0, 0], sizes = [64, 64], strides = [1, 1]} : vector<192x64xf32> to vector<64x64xf32>
    %c0_87 = arith.constant 0 : index
    %c0_88 = arith.constant 0 : index
    %c0_89 = arith.constant 0 : index
    %111 = vector.load %arg9[%c0_87, %c0_88, %c0_89] : memref<3x64x128xf32, #tpu.memory_space<vmem>>, vector<1x64x128xf32>
    %112 = vector.shape_cast %111 : vector<1x64x128xf32> to vector<64x128xf32>
    %cst_90 = arith.constant dense<0.000000e+00> : vector<64x128xf32>
    %113 = tpu.matmul %110, %112, %cst_90 {dimension_numbers = #tpu.dot_dimension_numbers<[1], [0], [0], [1], [0, 0, 1, 1], [], []>} : vector<64x64xf32>, vector<64x128xf32>, vector<64x128xf32> -> vector<64x128xf32>
    %114 = vector.broadcast %109 : vector<64x1xf32> to vector<64x128xf32>
    %115 = arith.addf %114, %113 : vector<64x128xf32>
    %116 = vector.extract_strided_slice %107 {offsets = [64, 0], sizes = [64, 64], strides = [1, 1]} : vector<192x64xf32> to vector<64x64xf32>
    %c1_91 = arith.constant 1 : index
    %c0_92 = arith.constant 0 : index
    %c0_93 = arith.constant 0 : index
    %117 = vector.load %arg9[%c1_91, %c0_92, %c0_93] : memref<3x64x128xf32, #tpu.memory_space<vmem>>, vector<1x64x128xf32>
    %118 = vector.shape_cast %117 : vector<1x64x128xf32> to vector<64x128xf32>
    %cst_94 = arith.constant dense<0.000000e+00> : vector<64x128xf32>
    %119 = tpu.matmul %116, %118, %cst_94 {dimension_numbers = #tpu.dot_dimension_numbers<[1], [0], [0], [1], [0, 0, 1, 1], [], []>} : vector<64x64xf32>, vector<64x128xf32>, vector<64x128xf32> -> vector<64x128xf32>
    %120 = arith.addf %115, %119 : vector<64x128xf32>
    %121 = vector.extract_strided_slice %107 {offsets = [128, 0], sizes = [64, 64], strides = [1, 1]} : vector<192x64xf32> to vector<64x64xf32>
    %c2_95 = arith.constant 2 : index
    %c0_96 = arith.constant 0 : index
    %c0_97 = arith.constant 0 : index
    %122 = vector.load %arg9[%c2_95, %c0_96, %c0_97] : memref<3x64x128xf32, #tpu.memory_space<vmem>>, vector<1x64x128xf32>
    %123 = vector.shape_cast %122 : vector<1x64x128xf32> to vector<64x128xf32>
    %cst_98 = arith.constant dense<0.000000e+00> : vector<64x128xf32>
    %124 = tpu.matmul %121, %123, %cst_98 {dimension_numbers = #tpu.dot_dimension_numbers<[1], [0], [0], [1], [0, 0, 1, 1], [], []>} : vector<64x64xf32>, vector<64x128xf32>, vector<64x128xf32> -> vector<64x128xf32>
    %125 = arith.addf %120, %124 : vector<64x128xf32>
    %cst_99 = arith.constant 0.000000e+00 : f32
    %126 = vector.broadcast %cst_99 : f32 to vector<64x128xf32>
    %127 = arith.cmpf ogt, %125, %126 : vector<64x128xf32>
    %cst_100 = arith.constant 2.000000e-01 : f32
    %128 = vector.broadcast %cst_100 : f32 to vector<64x128xf32>
    %129 = arith.mulf %128, %125 : vector<64x128xf32>
    %130 = arith.select %127, %125, %129 : vector<64x128xi1>, vector<64x128xf32>
    %c0_101 = arith.constant 0 : index
    %c0_102 = arith.constant 0 : index
    %c0_103 = arith.constant 0 : index
    %131 = vector.load %arg10[%c0_101, %c0_102, %c0_103] : memref<3x2x64xf32, #tpu.memory_space<vmem>>, vector<1x2x64xf32>
    %132 = vector.shape_cast %131 : vector<1x2x64xf32> to vector<2x64xf32>
    %cst_104 = arith.constant dense<0.000000e+00> : vector<2x128xf32>
    %133 = tpu.matmul %132, %130, %cst_104 {dimension_numbers = #tpu.dot_dimension_numbers<[1], [0], [0], [1], [0, 0, 1, 1], [], []>} : vector<2x64xf32>, vector<64x128xf32>, vector<2x128xf32> -> vector<2x128xf32>
    %c1_105 = arith.constant 1 : index
    %c0_106 = arith.constant 0 : index
    %c0_107 = arith.constant 0 : index
    %134 = vector.load %arg10[%c1_105, %c0_106, %c0_107] : memref<3x2x64xf32, #tpu.memory_space<vmem>>, vector<1x2x64xf32>
    %135 = vector.shape_cast %134 : vector<1x2x64xf32> to vector<2x64xf32>
    %cst_108 = arith.constant dense<0.000000e+00> : vector<2x128xf32>
    %136 = tpu.matmul %135, %130, %cst_108 {dimension_numbers = #tpu.dot_dimension_numbers<[1], [0], [0], [1], [0, 0, 1, 1], [], []>} : vector<2x64xf32>, vector<64x128xf32>, vector<2x128xf32> -> vector<2x128xf32>
    %c2_109 = arith.constant 2 : index
    %c0_110 = arith.constant 0 : index
    %c0_111 = arith.constant 0 : index
    %137 = vector.load %arg10[%c2_109, %c0_110, %c0_111] : memref<3x2x64xf32, #tpu.memory_space<vmem>>, vector<1x2x64xf32>
    %138 = vector.shape_cast %137 : vector<1x2x64xf32> to vector<2x64xf32>
    %cst_112 = arith.constant dense<0.000000e+00> : vector<2x128xf32>
    %139 = tpu.matmul %138, %130, %cst_112 {dimension_numbers = #tpu.dot_dimension_numbers<[1], [0], [0], [1], [0, 0, 1, 1], [], []>} : vector<2x64xf32>, vector<64x128xf32>, vector<2x128xf32> -> vector<2x128xf32>
    %140 = tpu.iota {dimensions = array<i32: 1>} : vector<2x128xi32>
    %c0_i32 = arith.constant 0 : i32
    %141 = vector.broadcast %c0_i32 : i32 to vector<2x128xi32>
    %142 = arith.cmpi eq, %140, %141 : vector<2x128xi32>
    %c1_i32 = arith.constant 1 : i32
    %143 = tpu.dynamic_rotate %133 by %c1_i32 dim 1 : vector<2x128xf32>, i32 -> vector<2x128xf32>
    %cst_113 = arith.constant 0.000000e+00 : f32
    %144 = vector.broadcast %cst_113 : f32 to vector<2x128xf32>
    %145 = arith.select %142, %144, %143 : vector<2x128xi1>, vector<2x128xf32>
    %c127_i32 = arith.constant 127 : i32
    %146 = vector.broadcast %c127_i32 : i32 to vector<2x128xi32>
    %147 = arith.cmpi eq, %140, %146 : vector<2x128xi32>
    %c127_i32_114 = arith.constant 127 : i32
    %148 = tpu.dynamic_rotate %139 by %c127_i32_114 dim 1 : vector<2x128xf32>, i32 -> vector<2x128xf32>
    %cst_115 = arith.constant 0.000000e+00 : f32
    %149 = vector.broadcast %cst_115 : f32 to vector<2x128xf32>
    %150 = arith.select %147, %149, %148 : vector<2x128xi1>, vector<2x128xf32>
    %c0_116 = arith.constant 0 : index
    %c0_117 = arith.constant 0 : index
    %151 = vector.load %arg11[%c0_116, %c0_117] : memref<1x1xf32, #tpu.memory_space<vmem>>, vector<1x1xf32>
    %152 = vector.broadcast %151 : vector<1x1xf32> to vector<2x128xf32>
    %153 = arith.addf %152, %145 : vector<2x128xf32>
    %154 = arith.addf %153, %136 : vector<2x128xf32>
    %155 = arith.addf %154, %150 : vector<2x128xf32>
    %156 = arith.negf %155 : vector<2x128xf32>
    %157 = math.exp %156 : vector<2x128xf32>
    %cst_118 = arith.constant 1.000000e+00 : f32
    %158 = vector.broadcast %cst_118 : f32 to vector<2x128xf32>
    %159 = arith.addf %158, %157 : vector<2x128xf32>
    %160 = arith.divf %158, %159 : vector<2x128xf32>
    %c0_119 = arith.constant 0 : index
    %c0_120 = arith.constant 0 : index
    %c0_121 = arith.constant 0 : index
    %161 = vector.load %arg24[%c0_119, %c0_120, %c0_121] : memref<1x2x128xf32, #tpu.memory_space<vmem>>, vector<1x2x128xf32>
    %162 = vector.shape_cast %161 : vector<1x2x128xf32> to vector<2x128xf32>
    %163 = vector.shape_cast %160 : vector<2x128xf32> to vector<1x2x128xf32>
    tpu.vector_store %arg24[%c0_119, %c0_120, %c0_121], %163 {strides = array<i32>} : memref<1x2x128xf32, #tpu.memory_space<vmem>>, vector<1x2x128xf32>,
    %c0_122 = arith.constant 0 : index
    %c0_123 = arith.constant 0 : index
    %164 = vector.load %arg20[%c0_122, %c0_123] : memref<128x1024xf32, #tpu.memory_space<vmem>>, vector<128x1024xf32>
    %cst_124 = arith.constant dense<0.000000e+00> : vector<2x1024xf32>
    %165 = tpu.matmul %160, %164, %cst_124 {dimension_numbers = #tpu.dot_dimension_numbers<[1], [0], [0], [1], [0, 0, 1, 1], [], []>} : vector<2x128xf32>, vector<128x1024xf32>, vector<2x1024xf32> -> vector<2x1024xf32>
    %c0_125 = arith.constant 0 : index
    %c0_126 = arith.constant 0 : index
    %166 = vector.load %arg23[%c0_125, %c0_126] : memref<1x1024xf32, #tpu.memory_space<vmem>>, vector<1x1024xf32>
    %167 = vector.broadcast %166 : vector<1x1024xf32> to vector<2x1024xf32>
    %168 = arith.mulf %165, %167 : vector<2x1024xf32>
    %c0_127 = arith.constant 0 : index
    %c0_128 = arith.constant 0 : index
    %169 = vector.load %arg25[%c0_127, %c0_128] : memref<2x1024xf32, #tpu.memory_space<vmem>>, vector<2x1024xf32>
    tpu.vector_store %arg25[%c0_127, %c0_128], %168 {strides = array<i32>} : memref<2x1024xf32, #tpu.memory_space<vmem>>, vector<2x1024xf32>,
    %c0_129 = arith.constant 0 : index
    %c0_130 = arith.constant 0 : index
    %170 = vector.load %arg2[%c0_129, %c0_130] : memref<16x32xf32, #tpu.memory_space<vmem>>, vector<16x32xf32>
    %c0_131 = arith.constant 0 : index
    %c0_132 = arith.constant 0 : index
    %171 = vector.load %arg14[%c0_131, %c0_132] : memref<1x32xf32, #tpu.memory_space<vmem>>, vector<1x32xf32>
    %c0_133 = arith.constant 0 : index
    %c0_134 = arith.constant 0 : index
    %c0_135 = arith.constant 0 : index
    %172 = vector.load %arg12[%c0_133, %c0_134, %c0_135] : memref<3x32x16xf32, #tpu.memory_space<vmem>>, vector<1x32x16xf32>
    %173 = vector.shape_cast %172 : vector<1x32x16xf32> to vector<32x16xf32>
    %cst_136 = arith.constant dense<0.000000e+00> : vector<32x32xf32>
    %174 = tpu.matmul %173, %170, %cst_136 {dimension_numbers = #tpu.dot_dimension_numbers<[1], [0], [0], [1], [0, 0, 1, 1], [], []>} : vector<32x16xf32>, vector<16x32xf32>, vector<32x32xf32> -> vector<32x32xf32>
    %c0_137 = arith.constant 0 : index
    %c0_138 = arith.constant 0 : index
    %c0_139 = arith.constant 0 : index
    %175 = vector.load %arg13[%c0_137, %c0_138, %c0_139] : memref<3x32x32xf32, #tpu.memory_space<vmem>>, vector<1x32x32xf32>
    %176 = vector.shape_cast %175 : vector<1x32x32xf32> to vector<32x32xf32>
    %cst_140 = arith.constant dense<0.000000e+00> : vector<32x32xf32>
    %177 = tpu.matmul %174, %176, %cst_140 {dimension_numbers = #tpu.dot_dimension_numbers<[1], [0], [0], [1], [0, 0, 1, 1], [], []>} : vector<32x32xf32>, vector<32x32xf32>, vector<32x32xf32> -> vector<32x32xf32>
    %178 = vector.broadcast %171 : vector<1x32xf32> to vector<32x32xf32>
    %179 = arith.addf %178, %177 : vector<32x32xf32>
    %c1_141 = arith.constant 1 : index
    %c0_142 = arith.constant 0 : index
    %c0_143 = arith.constant 0 : index
    %180 = vector.load %arg12[%c1_141, %c0_142, %c0_143] : memref<3x32x16xf32, #tpu.memory_space<vmem>>, vector<1x32x16xf32>
    %181 = vector.shape_cast %180 : vector<1x32x16xf32> to vector<32x16xf32>
    %cst_144 = arith.constant dense<0.000000e+00> : vector<32x32xf32>
    %182 = tpu.matmul %181, %170, %cst_144 {dimension_numbers = #tpu.dot_dimension_numbers<[1], [0], [0], [1], [0, 0, 1, 1], [], []>} : vector<32x16xf32>, vector<16x32xf32>, vector<32x32xf32> -> vector<32x32xf32>
    %c1_145 = arith.constant 1 : index
    %c0_146 = arith.constant 0 : index
    %c0_147 = arith.constant 0 : index
    %183 = vector.load %arg13[%c1_145, %c0_146, %c0_147] : memref<3x32x32xf32, #tpu.memory_space<vmem>>, vector<1x32x32xf32>
    %184 = vector.shape_cast %183 : vector<1x32x32xf32> to vector<32x32xf32>
    %cst_148 = arith.constant dense<0.000000e+00> : vector<32x32xf32>
    %185 = tpu.matmul %182, %184, %cst_148 {dimension_numbers = #tpu.dot_dimension_numbers<[1], [0], [0], [1], [0, 0, 1, 1], [], []>} : vector<32x32xf32>, vector<32x32xf32>, vector<32x32xf32> -> vector<32x32xf32>
    %186 = arith.addf %179, %185 : vector<32x32xf32>
    %c2_149 = arith.constant 2 : index
    %c0_150 = arith.constant 0 : index
    %c0_151 = arith.constant 0 : index
    %187 = vector.load %arg12[%c2_149, %c0_150, %c0_151] : memref<3x32x16xf32, #tpu.memory_space<vmem>>, vector<1x32x16xf32>
    %188 = vector.shape_cast %187 : vector<1x32x16xf32> to vector<32x16xf32>
    %cst_152 = arith.constant dense<0.000000e+00> : vector<32x32xf32>
    %189 = tpu.matmul %188, %170, %cst_152 {dimension_numbers = #tpu.dot_dimension_numbers<[1], [0], [0], [1], [0, 0, 1, 1], [], []>} : vector<32x16xf32>, vector<16x32xf32>, vector<32x32xf32> -> vector<32x32xf32>
    %c2_153 = arith.constant 2 : index
    %c0_154 = arith.constant 0 : index
    %c0_155 = arith.constant 0 : index
    %190 = vector.load %arg13[%c2_153, %c0_154, %c0_155] : memref<3x32x32xf32, #tpu.memory_space<vmem>>, vector<1x32x32xf32>
    %191 = vector.shape_cast %190 : vector<1x32x32xf32> to vector<32x32xf32>
    %cst_156 = arith.constant dense<0.000000e+00> : vector<32x32xf32>
    %192 = tpu.matmul %189, %191, %cst_156 {dimension_numbers = #tpu.dot_dimension_numbers<[1], [0], [0], [1], [0, 0, 1, 1], [], []>} : vector<32x32xf32>, vector<32x32xf32>, vector<32x32xf32> -> vector<32x32xf32>
    %193 = arith.addf %186, %192 : vector<32x32xf32>
    %cst_157 = arith.constant 0.000000e+00 : f32
    %194 = vector.broadcast %cst_157 : f32 to vector<32x32xf32>
    %195 = arith.cmpf ogt, %193, %194 : vector<32x32xf32>
    %cst_158 = arith.constant 2.000000e-01 : f32
    %196 = vector.broadcast %cst_158 : f32 to vector<32x32xf32>
    %197 = arith.mulf %196, %193 : vector<32x32xf32>
    %198 = arith.select %195, %193, %197 : vector<32x32xi1>, vector<32x32xf32>
    %c0_159 = arith.constant 0 : index
    %c0_160 = arith.constant 0 : index
    %199 = vector.load %arg17[%c0_159, %c0_160] : memref<1x32xf32, #tpu.memory_space<vmem>>, vector<1x32xf32>
    %c0_161 = arith.constant 0 : index
    %c0_162 = arith.constant 0 : index
    %c0_163 = arith.constant 0 : index
    %200 = vector.load %arg15[%c0_161, %c0_162, %c0_163] : memref<3x32x32xf32, #tpu.memory_space<vmem>>, vector<1x32x32xf32>
    %201 = vector.shape_cast %200 : vector<1x32x32xf32> to vector<32x32xf32>
    %cst_164 = arith.constant dense<0.000000e+00> : vector<32x32xf32>
    %202 = tpu.matmul %201, %198, %cst_164 {dimension_numbers = #tpu.dot_dimension_numbers<[1], [0], [0], [1], [0, 0, 1, 1], [], []>} : vector<32x32xf32>, vector<32x32xf32>, vector<32x32xf32> -> vector<32x32xf32>
    %c0_165 = arith.constant 0 : index
    %c0_166 = arith.constant 0 : index
    %c0_167 = arith.constant 0 : index
    %203 = vector.load %arg16[%c0_165, %c0_166, %c0_167] : memref<3x32x32xf32, #tpu.memory_space<vmem>>, vector<1x32x32xf32>
    %204 = vector.shape_cast %203 : vector<1x32x32xf32> to vector<32x32xf32>
    %cst_168 = arith.constant dense<0.000000e+00> : vector<32x32xf32>
    %205 = tpu.matmul %202, %204, %cst_168 {dimension_numbers = #tpu.dot_dimension_numbers<[1], [0], [0], [1], [0, 0, 1, 1], [], []>} : vector<32x32xf32>, vector<32x32xf32>, vector<32x32xf32> -> vector<32x32xf32>
    %206 = vector.broadcast %199 : vector<1x32xf32> to vector<32x32xf32>
    %207 = arith.addf %206, %205 : vector<32x32xf32>
    %c1_169 = arith.constant 1 : index
    %c0_170 = arith.constant 0 : index
    %c0_171 = arith.constant 0 : index
    %208 = vector.load %arg15[%c1_169, %c0_170, %c0_171] : memref<3x32x32xf32, #tpu.memory_space<vmem>>, vector<1x32x32xf32>
    %209 = vector.shape_cast %208 : vector<1x32x32xf32> to vector<32x32xf32>
    %cst_172 = arith.constant dense<0.000000e+00> : vector<32x32xf32>
    %210 = tpu.matmul %209, %198, %cst_172 {dimension_numbers = #tpu.dot_dimension_numbers<[1], [0], [0], [1], [0, 0, 1, 1], [], []>} : vector<32x32xf32>, vector<32x32xf32>, vector<32x32xf32> -> vector<32x32xf32>
    %c1_173 = arith.constant 1 : index
    %c0_174 = arith.constant 0 : index
    %c0_175 = arith.constant 0 : index
    %211 = vector.load %arg16[%c1_173, %c0_174, %c0_175] : memref<3x32x32xf32, #tpu.memory_space<vmem>>, vector<1x32x32xf32>
    %212 = vector.shape_cast %211 : vector<1x32x32xf32> to vector<32x32xf32>
    %cst_176 = arith.constant dense<0.000000e+00> : vector<32x32xf32>
    %213 = tpu.matmul %210, %212, %cst_176 {dimension_numbers = #tpu.dot_dimension_numbers<[1], [0], [0], [1], [0, 0, 1, 1], [], []>} : vector<32x32xf32>, vector<32x32xf32>, vector<32x32xf32> -> vector<32x32xf32>
    %214 = arith.addf %207, %213 : vector<32x32xf32>
    %c2_177 = arith.constant 2 : index
    %c0_178 = arith.constant 0 : index
    %c0_179 = arith.constant 0 : index
    %215 = vector.load %arg15[%c2_177, %c0_178, %c0_179] : memref<3x32x32xf32, #tpu.memory_space<vmem>>, vector<1x32x32xf32>
    %216 = vector.shape_cast %215 : vector<1x32x32xf32> to vector<32x32xf32>
    %cst_180 = arith.constant dense<0.000000e+00> : vector<32x32xf32>
    %217 = tpu.matmul %216, %198, %cst_180 {dimension_numbers = #tpu.dot_dimension_numbers<[1], [0], [0], [1], [0, 0, 1, 1], [], []>} : vector<32x32xf32>, vector<32x32xf32>, vector<32x32xf32> -> vector<32x32xf32>
    %c2_181 = arith.constant 2 : index
    %c0_182 = arith.constant 0 : index
    %c0_183 = arith.constant 0 : index
    %218 = vector.load %arg16[%c2_181, %c0_182, %c0_183] : memref<3x32x32xf32, #tpu.memory_space<vmem>>, vector<1x32x32xf32>
    %219 = vector.shape_cast %218 : vector<1x32x32xf32> to vector<32x32xf32>
    %cst_184 = arith.constant dense<0.000000e+00> : vector<32x32xf32>
    %220 = tpu.matmul %217, %219, %cst_184 {dimension_numbers = #tpu.dot_dimension_numbers<[1], [0], [0], [1], [0, 0, 1, 1], [], []>} : vector<32x32xf32>, vector<32x32xf32>, vector<32x32xf32> -> vector<32x32xf32>
    %221 = arith.addf %214, %220 : vector<32x32xf32>
    %cst_185 = arith.constant dense<0xFF800000> : vector<32xf32>
    %222 = vector.multi_reduction <maximumf>, %221, %cst_185 [1] : vector<32x32xf32> to vector<32xf32>
    %223 = vector.shape_cast %222 : vector<32xf32> to vector<32x1xf32>
    %224 = vector.broadcast %223 : vector<32x1xf32> to vector<32x32xf32>
    %225 = arith.subf %221, %224 : vector<32x32xf32>
    %226 = math.exp %225 : vector<32x32xf32>
    %cst_186 = arith.constant dense<0.000000e+00> : vector<32xf32>
    %227 = vector.multi_reduction <add>, %226, %cst_186 [1] : vector<32x32xf32> to vector<32xf32>
    %228 = vector.shape_cast %227 : vector<32xf32> to vector<32x1xf32>
    %229 = vector.broadcast %228 : vector<32x1xf32> to vector<32x32xf32>
    %230 = arith.divf %226, %229 : vector<32x32xf32>
    %c0_187 = arith.constant 0 : index
    %c0_188 = arith.constant 0 : index
    %231 = vector.load %arg18[%c0_187, %c0_188] : memref<32x64xf32, #tpu.memory_space<vmem>>, vector<32x64xf32>
    %cst_189 = arith.constant dense<0.000000e+00> : vector<32x64xf32>
    %232 = tpu.matmul %230, %231, %cst_189 {dimension_numbers = #tpu.dot_dimension_numbers<[1], [0], [0], [1], [0, 0, 1, 1], [], []>} : vector<32x32xf32>, vector<32x64xf32>, vector<32x64xf32> -> vector<32x64xf32>
    %c0_190 = arith.constant 0 : index
    %c0_191 = arith.constant 0 : index
    %233 = vector.load %arg21[%c0_190, %c0_191] : memref<64x1024xf32, #tpu.memory_space<vmem>>, vector<64x1024xf32>
    %cst_192 = arith.constant dense<0.000000e+00> : vector<32x1024xf32>
    %234 = tpu.matmul %232, %233, %cst_192 {dimension_numbers = #tpu.dot_dimension_numbers<[1], [0], [0], [1], [0, 0, 1, 1], [], []>} : vector<32x64xf32>, vector<64x1024xf32>, vector<32x1024xf32> -> vector<32x1024xf32>
    %c0_193 = arith.constant 0 : index
    %c0_194 = arith.constant 0 : index
    %235 = vector.load %arg22[%c0_193, %c0_194] : memref<32x1024xf32, #tpu.memory_space<vmem>>, vector<32x1024xf32>
    %236 = arith.mulf %234, %235 : vector<32x1024xf32>
    %c0_195 = arith.constant 0 : index
    %c0_196 = arith.constant 0 : index
    %237 = vector.load %arg19[%c0_195, %c0_196] : memref<2x32xf32, #tpu.memory_space<vmem>>, vector<2x32xf32>
    %cst_197 = arith.constant dense<0.000000e+00> : vector<2x1024xf32>
    %238 = tpu.matmul %237, %236, %cst_197 {dimension_numbers = #tpu.dot_dimension_numbers<[1], [0], [0], [1], [0, 0, 1, 1], [], []>} : vector<2x32xf32>, vector<32x1024xf32>, vector<2x1024xf32> -> vector<2x1024xf32>
    %c0_198 = arith.constant 0 : index
    %c0_199 = arith.constant 0 : index
    %239 = vector.load %arg26[%c0_198, %c0_199] : memref<2x1024xf32, #tpu.memory_space<vmem>>, vector<2x1024xf32>
    tpu.vector_store %arg26[%c0_198, %c0_199], %238 {strides = array<i32>} : memref<2x1024xf32, #tpu.memory_space<vmem>>, vector<2x1024xf32>,
    return
  }
  func.func @transform_0(%arg0: i32) -> (i32, i32) {
    %c0_i32 = arith.constant 0 : i32
    %c0_i32_0 = arith.constant 0 : i32
    %c0_i32_1 = arith.constant 0 : i32
    return %c0_i32, %c0_i32_0 : i32, i32
  }
  func.func @transform_1(%arg0: i32) -> (i32, i32) {
    %c0_i32 = arith.constant 0 : i32
    %c0_i32_0 = arith.constant 0 : i32
    %c0_i32_1 = arith.constant 0 : i32
    return %c0_i32, %c0_i32_0 : i32, i32
  }
  func.func @transform_2(%arg0: i32) -> (i32, i32, i32) {
    %c0_i32 = arith.constant 0 : i32
    %c0_i32_0 = arith.constant 0 : i32
    %c0_i32_1 = arith.constant 0 : i32
    %c0_i32_2 = arith.constant 0 : i32
    return %c0_i32, %c0_i32_0, %c0_i32_1 : i32, i32, i32
  }
  func.func @transform_3(%arg0: i32) -> (i32, i32, i32) {
    %c0_i32 = arith.constant 0 : i32
    %c0_i32_0 = arith.constant 0 : i32
    %c0_i32_1 = arith.constant 0 : i32
    %c0_i32_2 = arith.constant 0 : i32
    return %c0_i32, %c0_i32_0, %c0_i32_1 : i32, i32, i32
  }
  func.func @transform_4(%arg0: i32) -> (i32, i32, i32) {
    %c0_i32 = arith.constant 0 : i32
    %c0_i32_0 = arith.constant 0 : i32
    %c0_i32_1 = arith.constant 0 : i32
    %c0_i32_2 = arith.constant 0 : i32
    return %c0_i32, %c0_i32_0, %c0_i32_1 : i32, i32, i32
  }
  func.func @transform_5(%arg0: i32) -> (i32, i32, i32) {
    %c0_i32 = arith.constant 0 : i32
    %c0_i32_0 = arith.constant 0 : i32
    %c0_i32_1 = arith.constant 0 : i32
    %c0_i32_2 = arith.constant 0 : i32
    return %c0_i32, %c0_i32_0, %c0_i32_1 : i32, i32, i32
  }
  func.func @transform_6(%arg0: i32) -> (i32, i32, i32) {
    %c0_i32 = arith.constant 0 : i32
    %c0_i32_0 = arith.constant 0 : i32
    %c0_i32_1 = arith.constant 0 : i32
    %c0_i32_2 = arith.constant 0 : i32
    return %c0_i32, %c0_i32_0, %c0_i32_1 : i32, i32, i32
  }
  func.func @transform_7(%arg0: i32) -> (i32, i32, i32) {
    %c0_i32 = arith.constant 0 : i32
    %c0_i32_0 = arith.constant 0 : i32
    %c0_i32_1 = arith.constant 0 : i32
    %c0_i32_2 = arith.constant 0 : i32
    return %c0_i32, %c0_i32_0, %c0_i32_1 : i32, i32, i32
  }
  func.func @transform_8(%arg0: i32) -> (i32, i32, i32) {
    %c0_i32 = arith.constant 0 : i32
    %c0_i32_0 = arith.constant 0 : i32
    %c0_i32_1 = arith.constant 0 : i32
    %c0_i32_2 = arith.constant 0 : i32
    return %c0_i32, %c0_i32_0, %c0_i32_1 : i32, i32, i32
  }
  func.func @transform_9(%arg0: i32) -> (i32, i32, i32) {
    %c0_i32 = arith.constant 0 : i32
    %c0_i32_0 = arith.constant 0 : i32
    %c0_i32_1 = arith.constant 0 : i32
    %c0_i32_2 = arith.constant 0 : i32
    return %c0_i32, %c0_i32_0, %c0_i32_1 : i32, i32, i32
  }
  func.func @transform_10(%arg0: i32) -> (i32, i32) {
    %c0_i32 = arith.constant 0 : i32
    %c0_i32_0 = arith.constant 0 : i32
    %c0_i32_1 = arith.constant 0 : i32
    return %c0_i32, %c0_i32_0 : i32, i32
  }
  func.func @transform_11(%arg0: i32) -> (i32, i32, i32) {
    %c0_i32 = arith.constant 0 : i32
    %c0_i32_0 = arith.constant 0 : i32
    %c0_i32_1 = arith.constant 0 : i32
    %c0_i32_2 = arith.constant 0 : i32
    return %c0_i32, %c0_i32_0, %c0_i32_1 : i32, i32, i32
  }
  func.func @transform_12(%arg0: i32) -> (i32, i32, i32) {
    %c0_i32 = arith.constant 0 : i32
    %c0_i32_0 = arith.constant 0 : i32
    %c0_i32_1 = arith.constant 0 : i32
    %c0_i32_2 = arith.constant 0 : i32
    return %c0_i32, %c0_i32_0, %c0_i32_1 : i32, i32, i32
  }
  func.func @transform_13(%arg0: i32) -> (i32, i32) {
    %c0_i32 = arith.constant 0 : i32
    %c0_i32_0 = arith.constant 0 : i32
    %c0_i32_1 = arith.constant 0 : i32
    return %c0_i32, %c0_i32_0 : i32, i32
  }
  func.func @transform_14(%arg0: i32) -> (i32, i32, i32) {
    %c0_i32 = arith.constant 0 : i32
    %c0_i32_0 = arith.constant 0 : i32
    %c0_i32_1 = arith.constant 0 : i32
    %c0_i32_2 = arith.constant 0 : i32
    return %c0_i32, %c0_i32_0, %c0_i32_1 : i32, i32, i32
  }
  func.func @transform_15(%arg0: i32) -> (i32, i32, i32) {
    %c0_i32 = arith.constant 0 : i32
    %c0_i32_0 = arith.constant 0 : i32
    %c0_i32_1 = arith.constant 0 : i32
    %c0_i32_2 = arith.constant 0 : i32
    return %c0_i32, %c0_i32_0, %c0_i32_1 : i32, i32, i32
  }
  func.func @transform_16(%arg0: i32) -> (i32, i32) {
    %c0_i32 = arith.constant 0 : i32
    %c0_i32_0 = arith.constant 0 : i32
    %c0_i32_1 = arith.constant 0 : i32
    return %c0_i32, %c0_i32_0 : i32, i32
  }
  func.func @transform_17(%arg0: i32) -> (i32, i32) {
    %c0_i32 = arith.constant 0 : i32
    %c0_i32_0 = arith.constant 0 : i32
    %c0_i32_1 = arith.constant 0 : i32
    return %c0_i32, %c0_i32_0 : i32, i32
  }
  func.func @transform_18(%arg0: i32) -> (i32, i32) {
    %c0_i32 = arith.constant 0 : i32
    %c0_i32_0 = arith.constant 0 : i32
    %c0_i32_1 = arith.constant 0 : i32
    return %c0_i32, %c0_i32_0 : i32, i32
  }
  func.func @transform_19(%arg0: i32) -> (i32, i32) {
    %c0_i32 = arith.constant 0 : i32
    %c0_i32_0 = arith.constant 0 : i32
    return %c0_i32, %arg0 : i32, i32
  }
  func.func @transform_20(%arg0: i32) -> (i32, i32) {
    %c0_i32 = arith.constant 0 : i32
    %c0_i32_0 = arith.constant 0 : i32
    return %c0_i32, %arg0 : i32, i32
  }
  func.func @transform_21(%arg0: i32) -> (i32, i32) {
    %c0_i32 = arith.constant 0 : i32
    %c0_i32_0 = arith.constant 0 : i32
    return %c0_i32, %arg0 : i32, i32
  }
  func.func @transform_22(%arg0: i32) -> (i32, i32) {
    %c0_i32 = arith.constant 0 : i32
    %c0_i32_0 = arith.constant 0 : i32
    return %c0_i32, %arg0 : i32, i32
  }
  func.func @transform_23(%arg0: i32) -> (i32, i32, i32) {
    %c0_i32 = arith.constant 0 : i32
    %c0_i32_0 = arith.constant 0 : i32
    %c0_i32_1 = arith.constant 0 : i32
    return %arg0, %c0_i32, %c0_i32_0 : i32, i32, i32
  }
  func.func @transform_24(%arg0: i32) -> (i32, i32) {
    %c0_i32 = arith.constant 0 : i32
    %c0_i32_0 = arith.constant 0 : i32
    return %c0_i32, %arg0 : i32, i32
  }
  func.func @transform_25(%arg0: i32) -> (i32, i32) {
    %c0_i32 = arith.constant 0 : i32
    %c0_i32_0 = arith.constant 0 : i32
    return %c0_i32, %arg0 : i32, i32
  }
}

</mosaic_0001>

<llo_original>
// kernel: segment_generator_forward.1
$region0: #{segment_generator_forward.1}
  #allocation0 [shape = 'u32[]', space=smem, size = 0x4, offset = 0x4, fixed_abs, tag = 'smem constant byte address 0x4 - core index']
  #allocation1 [shape = 'u32[72,128]{1,0:T(1,128)}', space=vmem, size = 0x9000, scoped, tag = 'internal scratch']
  #allocation2 [shape = 'f32[1,1]{1,0:T(1,128)S(1)}', space=vmem, size = 0x200, scoped, tag = 'scoped memory for segment_generator_forward.1']
  %s0 = inlined_call_operand.vmem [shape: f32[64,4], index: 0, kind: input, shape index: {}]
  %s1 = inlined_call_operand.vmem [shape: f32[16,32], index: 1, kind: input, shape index: {}]
  %s2 = inlined_call_operand.vmem [shape: f32[5,192,64], index: 2, kind: input, shape index: {}]
  %s3 = inlined_call_operand.vmem [shape: f32[5,64,1], index: 3, kind: input, shape index: {}]
  %s4 = inlined_call_operand.hbm [shape: f32[3,4,8], index: 4, kind: input, shape index: {}]
  %s5 = inlined_call_operand.hbm [shape: f32[3,8,16], index: 5, kind: input, shape index: {}]
  %s6 = inlined_call_operand.vmem [shape: f32[3,16,32], index: 6, kind: input, shape index: {}]
  %s7 = inlined_call_operand.vmem [shape: f32[3,32,64], index: 7, kind: input, shape index: {}]
  %s8 = inlined_call_operand.vmem [shape: f32[3,64,128], index: 8, kind: input, shape index: {}]
  %s9 = inlined_call_operand.vmem [shape: f32[3,2,64], index: 9, kind: input, shape index: {}]
  %s10 = inlined_call_operand.<no memory space> [shape: f32[1,1], index: 10, kind: input, shape index: {}]
  %s11 = inlined_call_operand.vmem [shape: f32[3,32,16], index: 11, kind: input, shape index: {}]
  %s12 = inlined_call_operand.vmem [shape: f32[3,32,32], index: 12, kind: input, shape index: {}]
  %s13 = inlined_call_operand.vmem [shape: f32[1,32], index: 13, kind: input, shape index: {}]
  %s14 = inlined_call_operand.vmem [shape: f32[3,32,32], index: 14, kind: input, shape index: {}]
  %s15 = inlined_call_operand.vmem [shape: f32[3,32,32], index: 15, kind: input, shape index: {}]
  %s16 = inlined_call_operand.vmem [shape: f32[1,32], index: 16, kind: input, shape index: {}]
  %s17 = inlined_call_operand.vmem [shape: f32[32,64], index: 17, kind: input, shape index: {}]
  %s18 = inlined_call_operand.vmem [shape: f32[2,32], index: 18, kind: input, shape index: {}]
  %s19 = inlined_call_operand.hbm [shape: f32[128,2048], index: 19, kind: input, shape index: {}]
  %s20 = inlined_call_operand.vmem [shape: f32[64,2048], index: 20, kind: input, shape index: {}]
  %s21 = inlined_call_operand.vmem [shape: f32[32,2048], index: 21, kind: input, shape index: {}]
  %s22 = inlined_call_operand.vmem [shape: f32[1,2048], index: 22, kind: input, shape index: {}]
  %s23 = inlined_call_operand.vmem [shape: f32[2,2,128], index: 23, kind: output, shape index: {0}]
  %s24 = inlined_call_operand.vmem [shape: f32[2,2048], index: 24, kind: output, shape index: {1}]
  %s25 = inlined_call_operand.vmem [shape: f32[2,2048], index: 25, kind: output, shape index: {2}]
  %26 = xla_tuple %s23, %s24, %s25
  %s27 = sld [smem:[#allocation0]]
  $region199: #{segment_generator_forward.1} parent=0
    _
  %s29 = ssub.s32 1, %s27
  %s30 = scalar_select 0, %s29, %s27
  %v31 = vstv %s10
  %32 = vst [vmem:[#allocation2] sm:$0x1] %v31
  $region1: #{segment_generator_forward.1} parent=0
    #allocation3 [shape = 'u8[6144]{0}', space=vmem, size = 0x1800, scoped, tag = 'input window, operand 4, single buffered']
    #allocation4 [shape = 's32[2]{0}', space=sflag, size = 0x8, scoped, tag = 'scoped memory for segment_generator_forward.1']
    #allocation5 [shape = 'u8[12288]{0}', space=vmem, size = 0x3000, scoped, tag = 'input window, operand 5, single buffered']
    #allocation6 [shape = 's32[1]{0}', space=sflag, size = 0x4, scoped, tag = 'scoped memory for segment_generator_forward.1']
    #allocation7 [shape = 'u8[1048576]{0}', space=vmem, size = 0x100000, scoped, tag = 'input window, operand 19']
    #allocation8 [shape = 'u8[524288]{0}', space=vmem, size = 0x80000, scoped, tag = 'input window, operand 20']
    #allocation9 [shape = 'u8[262144]{0}', space=vmem, size = 0x40000, scoped, tag = 'input window, operand 21']
    %33 = vsyncpa [#allocation4], 0
    %34 = vsyncpa [#allocation6], 0
    loop: start=0, step=1, limit=4
    $region2: #{segment_generator_forward.1} parent=1 // loop_pre_header
      _
    $region3: #{segment_generator_forward.1} parent=1 // loop_header
      %s36 = sphi 0, %s40
      %p37 = scmp.ge.s32.totalorder %s36, 4
      %s44 = sphi 0, %s44
      %s46 = sphi 0, %s44
      %s47 = sphi 0, %s46
      %s61 = sphi 0, %s47
      %s65 = sphi 0, %s65
      %s67 = sphi 0, %s65
      %s68 = sphi 0, %s67
      %s82 = sphi 0, %s68
      %s86 = sphi 0, %s86
      %s88 = sphi 0, %s86
      %s89 = sphi 0, %s88
      %s103 = sphi 0, %s89
      %s107 = sphi 0, %s107
      %s109 = sphi 0, %s107
      %s110 = sphi 0, %s109
      %s124 = sphi 0, %s110
      %s128 = sphi 0, %s128
      %s130 = sphi 0, %s128
      %s131 = sphi 0, %s130
      %s145 = sphi 0, %s131
      %s149 = sphi 0, %s149
      %s151 = sphi 0, %s149
      %s152 = sphi 0, %s151
      %s166 = sphi 0, %s152
      %s170 = sphi 0, %s170
      %s172 = sphi 0, %s170
      %s173 = sphi 0, %s172
      %s187 = sphi 0, %s173
      %s191 = sphi 0, %s191
      %s193 = sphi 0, %s191
      %s194 = sphi 0, %s193
      %s208 = sphi 0, %s194
      %s212 = sphi 0, %s212
      %s214 = sphi 0, %s212
      %s215 = sphi 0, %s214
      %s229 = sphi 0, %s215
      %s233 = sphi 0, %s233
      %s235 = sphi 0, %s233
      %s236 = sphi 0, %s235
      %s250 = sphi 0, %s236
      %s254 = sphi 0, %s254
      %s256 = sphi 0, %s254
      %s257 = sphi 0, %s256
      %s271 = sphi 0, %s257
      %s275 = sphi 0, %s275
      %s277 = sphi 0, %s275
      %s278 = sphi 0, %s277
      %s292 = sphi 0, %s278
      %s296 = sphi 0, %s296
      %s298 = sphi 0, %s296
      %s299 = sphi 0, %s298
      %s313 = sphi 0, %s299
      %s317 = sphi 0, %s317
      %s319 = sphi 0, %s317
      %s320 = sphi 0, %s319
      %s334 = sphi 0, %s320
      %s338 = sphi 0, %s338
      %s340 = sphi 0, %s338
      %s341 = sphi 0, %s340
      %s355 = sphi 0, %s341
      %s359 = sphi 0, %s359
      %s361 = sphi 0, %s359
      %s362 = sphi 0, %s361
      %s376 = sphi 0, %s362
      %s380 = sphi 0, %s380
      %s382 = sphi 0, %s380
      %s383 = sphi 0, %s382
      %s397 = sphi 0, %s383
      %s401 = sphi 0, %s401
      %s403 = sphi 0, %s401
      %s404 = sphi 0, %s403
      %s418 = sphi 0, %s404
      %s422 = sphi 0, %s422
      %s424 = sphi 0, %s422
      %s425 = sphi 0, %s424
      %s439 = sphi 0, %s425
      %s445 = sphi 0, %s447
      %s448 = sphi 0, %s445
      %s449 = sphi 0, %s448
      %s465 = sphi 0, %s449
      %s471 = sphi 0, %s473
      %s474 = sphi 0, %s471
      %s475 = sphi 0, %s474
      %s491 = sphi 0, %s475
      %s497 = sphi 0, %s499
      %s500 = sphi 0, %s497
      %s501 = sphi 0, %s500
      %s517 = sphi 0, %s501
      %s523 = sphi 0, %s525
      %s526 = sphi 0, %s523
      %s527 = sphi 0, %s526
      %s543 = sphi 0, %s527
      %s549 = sphi 0, %s551
      %s552 = sphi 0, %s549
      %s553 = sphi 0, %s552
      %s569 = sphi 0, %s553
      %s575 = sphi 0, %s577
      %s578 = sphi 0, %s575
      %s579 = sphi 0, %s578
      %s595 = sphi 0, %s579
      %s601 = sphi 0, %s603
      %s604 = sphi 0, %s601
      %s605 = sphi 0, %s604
      %s621 = sphi 0, %s605
    $region4: #{segment_generator_forward.1} parent=1 // loop_header_branch
      %39 = sbr.rel (%p37) target = $region8
    $region5: #{segment_generator_forward.1} parent=1 // loop_body
      %s41 = ssub.s32 %s36, 1
      %s42 = ssub.s32 %s36, 2
      %s43 = sadd.s32 %s36, 1
      %s45 = sadd.s32 %s44, 1
      %p48 = scmp.eq.s32.totalorder %s36, 1
      %p49 = scmp.ne.s32.totalorder %s44, %s46
      %p50 = scmp.eq.s32.totalorder %s36, 0
      %p51 = por %p49, %p50
      %p52 = scmp.ne.s32.totalorder %s44, %s46
      %p53 = scmp.eq.s32.totalorder %s41, 1
      %p54 = por %p52, %p53
      %p55 = scmp.ne.s32.totalorder %s46, %s47
      %p56 = scmp.eq.s32.totalorder %s41, 0
      %p57 = por %p55, %p56
      %p58 = scmp.ne.s32.totalorder %s46, %s47
      %p59 = scmp.eq.s32.totalorder %s42, 1
      %p60 = por %p58, %p59
      %p62 = scmp.ne.s32.totalorder %s47, %s61
      %p63 = scmp.eq.s32.totalorder %s42, 0
      %p64 = por %p62, %p63
      %s66 = sadd.s32 %s65, 1
      %p69 = scmp.eq.s32.totalorder %s36, 1
      %p70 = scmp.ne.s32.totalorder %s65, %s67
      %p71 = scmp.eq.s32.totalorder %s36, 0
      %p72 = por %p70, %p71
      %p73 = scmp.ne.s32.totalorder %s65, %s67
      %p74 = scmp.eq.s32.totalorder %s41, 1
      %p75 = por %p73, %p74
      %p76 = scmp.ne.s32.totalorder %s67, %s68
      %p77 = scmp.eq.s32.totalorder %s41, 0
      %p78 = por %p76, %p77
      %p79 = scmp.ne.s32.totalorder %s67, %s68
      %p80 = scmp.eq.s32.totalorder %s42, 1
      %p81 = por %p79, %p80
      %p83 = scmp.ne.s32.totalorder %s68, %s82
      %p84 = scmp.eq.s32.totalorder %s42, 0
      %p85 = por %p83, %p84
      %s87 = sadd.s32 %s86, 1
      %p90 = scmp.eq.s32.totalorder %s36, 1
      %p91 = scmp.ne.s32.totalorder %s86, %s88
      %p92 = scmp.eq.s32.totalorder %s36, 0
      %p93 = por %p91, %p92
      %p94 = scmp.ne.s32.totalorder %s86, %s88
      %p95 = scmp.eq.s32.totalorder %s41, 1
      %p96 = por %p94, %p95
      %p97 = scmp.ne.s32.totalorder %s88, %s89
      %p98 = scmp.eq.s32.totalorder %s41, 0
      %p99 = por %p97, %p98
      %p100 = scmp.ne.s32.totalorder %s88, %s89
      %p101 = scmp.eq.s32.totalorder %s42, 1
      %p102 = por %p100, %p101
      %p104 = scmp.ne.s32.totalorder %s89, %s103
      %p105 = scmp.eq.s32.totalorder %s42, 0
      %p106 = por %p104, %p105
      %s108 = sadd.s32 %s107, 1
      %p111 = scmp.eq.s32.totalorder %s36, 1
      %p112 = scmp.ne.s32.totalorder %s107, %s109
      %p113 = scmp.eq.s32.totalorder %s36, 0
      %p114 = por %p112, %p113
      %p115 = scmp.ne.s32.totalorder %s107, %s109
      %p116 = scmp.eq.s32.totalorder %s41, 1
      %p117 = por %p115, %p116
      %p118 = scmp.ne.s32.totalorder %s109, %s110
      %p119 = scmp.eq.s32.totalorder %s41, 0
      %p120 = por %p118, %p119
      %p121 = scmp.ne.s32.totalorder %s109, %s110
      %p122 = scmp.eq.s32.totalorder %s42, 1
      %p123 = por %p121, %p122
      %p125 = scmp.ne.s32.totalorder %s110, %s124
      %p126 = scmp.eq.s32.totalorder %s42, 0
      %p127 = por %p125, %p126
      %s129 = sadd.s32 %s128, 1
      %p132 = scmp.eq.s32.totalorder %s36, 1
      %p133 = scmp.ne.s32.totalorder %s128, %s130
      %p134 = scmp.eq.s32.totalorder %s36, 0
      %p135 = por %p133, %p134
      %p136 = scmp.ne.s32.totalorder %s128, %s130
      %p137 = scmp.eq.s32.totalorder %s41, 1
      %p138 = por %p136, %p137
      %p139 = scmp.ne.s32.totalorder %s130, %s131
      %p140 = scmp.eq.s32.totalorder %s41, 0
      %p141 = por %p139, %p140
      %p142 = scmp.ne.s32.totalorder %s130, %s131
      %p143 = scmp.eq.s32.totalorder %s42, 1
      %p144 = por %p142, %p143
      %p146 = scmp.ne.s32.totalorder %s131, %s145
      %p147 = scmp.eq.s32.totalorder %s42, 0
      %p148 = por %p146, %p147
      %s150 = sadd.s32 %s149, 1
      %p153 = scmp.eq.s32.totalorder %s36, 1
      %p154 = scmp.ne.s32.totalorder %s149, %s151
      %p155 = scmp.eq.s32.totalorder %s36, 0
      %p156 = por %p154, %p155
      %p157 = scmp.ne.s32.totalorder %s149, %s151
      %p158 = scmp.eq.s32.totalorder %s41, 1
      %p159 = por %p157, %p158
      %p160 = scmp.ne.s32.totalorder %s151, %s152
      %p161 = scmp.eq.s32.totalorder %s41, 0
      %p162 = por %p160, %p161
      %p163 = scmp.ne.s32.totalorder %s151, %s152
      %p164 = scmp.eq.s32.totalorder %s42, 1
      %p165 = por %p163, %p164
      %p167 = scmp.ne.s32.totalorder %s152, %s166
      %p168 = scmp.eq.s32.totalorder %s42, 0
      %p169 = por %p167, %p168
      %s171 = sadd.s32 %s170, 1
      %p174 = scmp.eq.s32.totalorder %s36, 1
      %p175 = scmp.ne.s32.totalorder %s170, %s172
      %p176 = scmp.eq.s32.totalorder %s36, 0
      %p177 = por %p175, %p176
      %p178 = scmp.ne.s32.totalorder %s170, %s172
      %p179 = scmp.eq.s32.totalorder %s41, 1
      %p180 = por %p178, %p179
      %p181 = scmp.ne.s32.totalorder %s172, %s173
      %p182 = scmp.eq.s32.totalorder %s41, 0
      %p183 = por %p181, %p182
      %p184 = scmp.ne.s32.totalorder %s172, %s173
      %p185 = scmp.eq.s32.totalorder %s42, 1
      %p186 = por %p184, %p185
      %p188 = scmp.ne.s32.totalorder %s173, %s187
      %p189 = scmp.eq.s32.totalorder %s42, 0
      %p190 = por %p188, %p189
      %s192 = sadd.s32 %s191, 1
      %p195 = scmp.eq.s32.totalorder %s36, 1
      %p196 = scmp.ne.s32.totalorder %s191, %s193
      %p197 = scmp.eq.s32.totalorder %s36, 0
      %p198 = por %p196, %p197
      %p199 = scmp.ne.s32.totalorder %s191, %s193
      %p200 = scmp.eq.s32.totalorder %s41, 1
      %p201 = por %p199, %p200
      %p202 = scmp.ne.s32.totalorder %s193, %s194
      %p203 = scmp.eq.s32.totalorder %s41, 0
      %p204 = por %p202, %p203
      %p205 = scmp.ne.s32.totalorder %s193, %s194
      %p206 = scmp.eq.s32.totalorder %s42, 1
      %p207 = por %p205, %p206
      %p209 = scmp.ne.s32.totalorder %s194, %s208
      %p210 = scmp.eq.s32.totalorder %s42, 0
      %p211 = por %p209, %p210
      %s213 = sadd.s32 %s212, 1
      %p216 = scmp.eq.s32.totalorder %s36, 1
      %p217 = scmp.ne.s32.totalorder %s212, %s214
      %p218 = scmp.eq.s32.totalorder %s36, 0
      %p219 = por %p217, %p218
      %p220 = scmp.ne.s32.totalorder %s212, %s214
      %p221 = scmp.eq.s32.totalorder %s41, 1
      %p222 = por %p220, %p221
      %p223 = scmp.ne.s32.totalorder %s214, %s215
      %p224 = scmp.eq.s32.totalorder %s41, 0
      %p225 = por %p223, %p224
      %p226 = scmp.ne.s32.totalorder %s214, %s215
      %p227 = scmp.eq.s32.totalorder %s42, 1
      %p228 = por %p226, %p227
      %p230 = scmp.ne.s32.totalorder %s215, %s229
      %p231 = scmp.eq.s32.totalorder %s42, 0
      %p232 = por %p230, %p231
      %s234 = sadd.s32 %s233, 1
      %p237 = scmp.eq.s32.totalorder %s36, 1
      %p238 = scmp.ne.s32.totalorder %s233, %s235
      %p239 = scmp.eq.s32.totalorder %s36, 0
      %p240 = por %p238, %p239
      %p241 = scmp.ne.s32.totalorder %s233, %s235
      %p242 = scmp.eq.s32.totalorder %s41, 1
      %p243 = por %p241, %p242
      %p244 = scmp.ne.s32.totalorder %s235, %s236
      %p245 = scmp.eq.s32.totalorder %s41, 0
      %p246 = por %p244, %p245
      %p247 = scmp.ne.s32.totalorder %s235, %s236
      %p248 = scmp.eq.s32.totalorder %s42, 1
      %p249 = por %p247, %p248
      %p251 = scmp.ne.s32.totalorder %s236, %s250
      %p252 = scmp.eq.s32.totalorder %s42, 0
      %p253 = por %p251, %p252
      %s255 = sadd.s32 %s254, 1
      %p258 = scmp.eq.s32.totalorder %s36, 1
      %p259 = scmp.ne.s32.totalorder %s254, %s256
      %p260 = scmp.eq.s32.totalorder %s36, 0
      %p261 = por %p259, %p260
      %p262 = scmp.ne.s32.totalorder %s254, %s256
      %p263 = scmp.eq.s32.totalorder %s41, 1
      %p264 = por %p262, %p263
      %p265 = scmp.ne.s32.totalorder %s256, %s257
      %p266 = scmp.eq.s32.totalorder %s41, 0
      %p267 = por %p265, %p266
      %p268 = scmp.ne.s32.totalorder %s256, %s257
      %p269 = scmp.eq.s32.totalorder %s42, 1
      %p270 = por %p268, %p269
      %p272 = scmp.ne.s32.totalorder %s257, %s271
      %p273 = scmp.eq.s32.totalorder %s42, 0
      %p274 = por %p272, %p273
      %s276 = sadd.s32 %s275, 1
      %p279 = scmp.eq.s32.totalorder %s36, 1
      %p280 = scmp.ne.s32.totalorder %s275, %s277
      %p281 = scmp.eq.s32.totalorder %s36, 0
      %p282 = por %p280, %p281
      %p283 = scmp.ne.s32.totalorder %s275, %s277
      %p284 = scmp.eq.s32.totalorder %s41, 1
      %p285 = por %p283, %p284
      %p286 = scmp.ne.s32.totalorder %s277, %s278
      %p287 = scmp.eq.s32.totalorder %s41, 0
      %p288 = por %p286, %p287
      %p289 = scmp.ne.s32.totalorder %s277, %s278
      %p290 = scmp.eq.s32.totalorder %s42, 1
      %p291 = por %p289, %p290
      %p293 = scmp.ne.s32.totalorder %s278, %s292
      %p294 = scmp.eq.s32.totalorder %s42, 0
      %p295 = por %p293, %p294
      %s297 = sadd.s32 %s296, 1
      %p300 = scmp.eq.s32.totalorder %s36, 1
      %p301 = scmp.ne.s32.totalorder %s296, %s298
      %p302 = scmp.eq.s32.totalorder %s36, 0
      %p303 = por %p301, %p302
      %p304 = scmp.ne.s32.totalorder %s296, %s298
      %p305 = scmp.eq.s32.totalorder %s41, 1
      %p306 = por %p304, %p305
      %p307 = scmp.ne.s32.totalorder %s298, %s299
      %p308 = scmp.eq.s32.totalorder %s41, 0
      %p309 = por %p307, %p308
      %p310 = scmp.ne.s32.totalorder %s298, %s299
      %p311 = scmp.eq.s32.totalorder %s42, 1
      %p312 = por %p310, %p311
      %p314 = scmp.ne.s32.totalorder %s299, %s313
      %p315 = scmp.eq.s32.totalorder %s42, 0
      %p316 = por %p314, %p315
      %s318 = sadd.s32 %s317, 1
      %p321 = scmp.eq.s32.totalorder %s36, 1
      %p322 = scmp.ne.s32.totalorder %s317, %s319
      %p323 = scmp.eq.s32.totalorder %s36, 0
      %p324 = por %p322, %p323
      %p325 = scmp.ne.s32.totalorder %s317, %s319
      %p326 = scmp.eq.s32.totalorder %s41, 1
      %p327 = por %p325, %p326
      %p328 = scmp.ne.s32.totalorder %s319, %s320
      %p329 = scmp.eq.s32.totalorder %s41, 0
      %p330 = por %p328, %p329
      %p331 = scmp.ne.s32.totalorder %s319, %s320
      %p332 = scmp.eq.s32.totalorder %s42, 1
      %p333 = por %p331, %p332
      %p335 = scmp.ne.s32.totalorder %s320, %s334
      %p336 = scmp.eq.s32.totalorder %s42, 0
      %p337 = por %p335, %p336
      %s339 = sadd.s32 %s338, 1
      %p342 = scmp.eq.s32.totalorder %s36, 1
      %p343 = scmp.ne.s32.totalorder %s338, %s340
      %p344 = scmp.eq.s32.totalorder %s36, 0
      %p345 = por %p343, %p344
      %p346 = scmp.ne.s32.totalorder %s338, %s340
      %p347 = scmp.eq.s32.totalorder %s41, 1
      %p348 = por %p346, %p347
      %p349 = scmp.ne.s32.totalorder %s340, %s341
      %p350 = scmp.eq.s32.totalorder %s41, 0
      %p351 = por %p349, %p350
      %p352 = scmp.ne.s32.totalorder %s340, %s341
      %p353 = scmp.eq.s32.totalorder %s42, 1
      %p354 = por %p352, %p353
      %p356 = scmp.ne.s32.totalorder %s341, %s355
      %p357 = scmp.eq.s32.totalorder %s42, 0
      %p358 = por %p356, %p357
      %s360 = sadd.s32 %s359, 1
      %p363 = scmp.eq.s32.totalorder %s36, 1
      %p364 = scmp.ne.s32.totalorder %s359, %s361
      %p365 = scmp.eq.s32.totalorder %s36, 0
      %p366 = por %p364, %p365
      %p367 = scmp.ne.s32.totalorder %s359, %s361
      %p368 = scmp.eq.s32.totalorder %s41, 1
      %p369 = por %p367, %p368
      %p370 = scmp.ne.s32.totalorder %s361, %s362
      %p371 = scmp.eq.s32.totalorder %s41, 0
      %p372 = por %p370, %p371
      %p373 = scmp.ne.s32.totalorder %s361, %s362
      %p374 = scmp.eq.s32.totalorder %s42, 1
      %p375 = por %p373, %p374
      %p377 = scmp.ne.s32.totalorder %s362, %s376
      %p378 = scmp.eq.s32.totalorder %s42, 0
      %p379 = por %p377, %p378
      %s381 = sadd.s32 %s380, 1
      %p384 = scmp.eq.s32.totalorder %s36, 1
      %p385 = scmp.ne.s32.totalorder %s380, %s382
      %p386 = scmp.eq.s32.totalorder %s36, 0
      %p387 = por %p385, %p386
      %p388 = scmp.ne.s32.totalorder %s380, %s382
      %p389 = scmp.eq.s32.totalorder %s41, 1
      %p390 = por %p388, %p389
      %p391 = scmp.ne.s32.totalorder %s382, %s383
      %p392 = scmp.eq.s32.totalorder %s41, 0
      %p393 = por %p391, %p392
      %p394 = scmp.ne.s32.totalorder %s382, %s383
      %p395 = scmp.eq.s32.totalorder %s42, 1
      %p396 = por %p394, %p395
      %p398 = scmp.ne.s32.totalorder %s383, %s397
      %p399 = scmp.eq.s32.totalorder %s42, 0
      %p400 = por %p398, %p399
      %s402 = sadd.s32 %s401, 1
      %p405 = scmp.eq.s32.totalorder %s36, 1
      %p406 = scmp.ne.s32.totalorder %s401, %s403
      %p407 = scmp.eq.s32.totalorder %s36, 0
      %p408 = por %p406, %p407
      %p409 = scmp.ne.s32.totalorder %s401, %s403
      %p410 = scmp.eq.s32.totalorder %s41, 1
      %p411 = por %p409, %p410
      %p412 = scmp.ne.s32.totalorder %s403, %s404
      %p413 = scmp.eq.s32.totalorder %s41, 0
      %p414 = por %p412, %p413
      %p415 = scmp.ne.s32.totalorder %s403, %s404
      %p416 = scmp.eq.s32.totalorder %s42, 1
      %p417 = por %p415, %p416
      %p419 = scmp.ne.s32.totalorder %s404, %s418
      %p420 = scmp.eq.s32.totalorder %s42, 0
      %p421 = por %p419, %p420
      %s423 = sadd.s32 %s422, 1
      %p426 = scmp.eq.s32.totalorder %s36, 1
      %p427 = scmp.ne.s32.totalorder %s422, %s424
      %p428 = scmp.eq.s32.totalorder %s36, 0
      %p429 = por %p427, %p428
      %p430 = scmp.ne.s32.totalorder %s422, %s424
      %p431 = scmp.eq.s32.totalorder %s41, 1
      %p432 = por %p430, %p431
      %p433 = scmp.ne.s32.totalorder %s424, %s425
      %p434 = scmp.eq.s32.totalorder %s41, 0
      %p435 = por %p433, %p434
      %p436 = scmp.ne.s32.totalorder %s424, %s425
      %p437 = scmp.eq.s32.totalorder %s42, 1
      %p438 = por %p436, %p437
      %p440 = scmp.ne.s32.totalorder %s425, %s439
      %p441 = scmp.eq.s32.totalorder %s42, 0
      %p442 = por %p440, %p441
      %s443 = ssub.s32 %s36, %s43
      %p444 = scmp.eq.s32.totalorder %s443, 0
      %s446 = sadd.s32 %s445, 1
      %s447 = scalar_select %p444, %s445, %s446
      %p450 = pneg %p444
      %p451 = scmp.eq.s32.totalorder %s36, 1
      %p452 = por %p450, %p451
      %p453 = scmp.ne.s32.totalorder %s445, %s448
      %p454 = scmp.eq.s32.totalorder %s36, 0
      %p455 = por %p453, %p454
      %p456 = scmp.ne.s32.totalorder %s445, %s448
      %p457 = scmp.eq.s32.totalorder %s41, 1
      %p458 = por %p456, %p457
      %p459 = scmp.ne.s32.totalorder %s448, %s449
      %p460 = scmp.eq.s32.totalorder %s41, 0
      %p461 = por %p459, %p460
      %p462 = scmp.ne.s32.totalorder %s448, %s449
      %p463 = scmp.eq.s32.totalorder %s42, 1
      %p464 = por %p462, %p463
      %p466 = scmp.ne.s32.totalorder %s449, %s465
      %p467 = scmp.eq.s32.totalorder %s42, 0
      %p468 = por %p466, %p467
      %s469 = ssub.s32 %s36, %s43
      %p470 = scmp.eq.s32.totalorder %s469, 0
      %s472 = sadd.s32 %s471, 1
      %s473 = scalar_select %p470, %s471, %s472
      %p476 = pneg %p470
      %p477 = scmp.eq.s32.totalorder %s36, 1
      %p478 = por %p476, %p477
      %p479 = scmp.ne.s32.totalorder %s471, %s474
      %p480 = scmp.eq.s32.totalorder %s36, 0
      %p481 = por %p479, %p480
      %p482 = scmp.ne.s32.totalorder %s471, %s474
      %p483 = scmp.eq.s32.totalorder %s41, 1
      %p484 = por %p482, %p483
      %p485 = scmp.ne.s32.totalorder %s474, %s475
      %p486 = scmp.eq.s32.totalorder %s41, 0
      %p487 = por %p485, %p486
      %p488 = scmp.ne.s32.totalorder %s474, %s475
      %p489 = scmp.eq.s32.totalorder %s42, 1
      %p490 = por %p488, %p489
      %p492 = scmp.ne.s32.totalorder %s475, %s491
      %p493 = scmp.eq.s32.totalorder %s42, 0
      %p494 = por %p492, %p493
      %s495 = ssub.s32 %s36, %s43
      %p496 = scmp.eq.s32.totalorder %s495, 0
      %s498 = sadd.s32 %s497, 1
      %s499 = scalar_select %p496, %s497, %s498
      %p502 = pneg %p496
      %p503 = scmp.eq.s32.totalorder %s36, 1
      %p504 = por %p502, %p503
      %p505 = scmp.ne.s32.totalorder %s497, %s500
      %p506 = scmp.eq.s32.totalorder %s36, 0
      %p507 = por %p505, %p506
      %p508 = scmp.ne.s32.totalorder %s497, %s500
      %p509 = scmp.eq.s32.totalorder %s41, 1
      %p510 = por %p508, %p509
      %p511 = scmp.ne.s32.totalorder %s500, %s501
      %p512 = scmp.eq.s32.totalorder %s41, 0
      %p513 = por %p511, %p512
      %p514 = scmp.ne.s32.totalorder %s500, %s501
      %p515 = scmp.eq.s32.totalorder %s42, 1
      %p516 = por %p514, %p515
      %p518 = scmp.ne.s32.totalorder %s501, %s517
      %p519 = scmp.eq.s32.totalorder %s42, 0
      %p520 = por %p518, %p519
      %s521 = ssub.s32 %s36, %s43
      %p522 = scmp.eq.s32.totalorder %s521, 0
      %s524 = sadd.s32 %s523, 1
      %s525 = scalar_select %p522, %s523, %s524
      %p528 = pneg %p522
      %p529 = scmp.eq.s32.totalorder %s36, 1
      %p530 = por %p528, %p529
      %p531 = scmp.ne.s32.totalorder %s523, %s526
      %p532 = scmp.eq.s32.totalorder %s36, 0
      %p533 = por %p531, %p532
      %p534 = scmp.ne.s32.totalorder %s523, %s526
      %p535 = scmp.eq.s32.totalorder %s41, 1
      %p536 = por %p534, %p535
      %p537 = scmp.ne.s32.totalorder %s526, %s527
      %p538 = scmp.eq.s32.totalorder %s41, 0
      %p539 = por %p537, %p538
      %p540 = scmp.ne.s32.totalorder %s526, %s527
      %p541 = scmp.eq.s32.totalorder %s42, 1
      %p542 = por %p540, %p541
      %p544 = scmp.ne.s32.totalorder %s527, %s543
      %p545 = scmp.eq.s32.totalorder %s42, 0
      %p546 = por %p544, %p545
      %s547 = ssub.s32 %s36, %s43
      %p548 = scmp.eq.s32.totalorder %s547, 0
      %s550 = sadd.s32 %s549, 1
      %s551 = scalar_select %p548, %s549, %s550
      %p554 = pneg %p548
      %p555 = scmp.eq.s32.totalorder %s36, 1
      %p556 = por %p554, %p555
      %p557 = scmp.ne.s32.totalorder %s549, %s552
      %p558 = scmp.eq.s32.totalorder %s36, 0
      %p559 = por %p557, %p558
      %p560 = scmp.ne.s32.totalorder %s549, %s552
      %p561 = scmp.eq.s32.totalorder %s41, 1
      %p562 = por %p560, %p561
      %p563 = scmp.ne.s32.totalorder %s552, %s553
      %p564 = scmp.eq.s32.totalorder %s41, 0
      %p565 = por %p563, %p564
      %p566 = scmp.ne.s32.totalorder %s552, %s553
      %p567 = scmp.eq.s32.totalorder %s42, 1
      %p568 = por %p566, %p567
      %p570 = scmp.ne.s32.totalorder %s553, %s569
      %p571 = scmp.eq.s32.totalorder %s42, 0
      %p572 = por %p570, %p571
      %s573 = ssub.s32 %s36, %s43
      %p574 = scmp.eq.s32.totalorder %s573, 0
      %s576 = sadd.s32 %s575, 1
      %s577 = scalar_select %p574, %s575, %s576
      %p580 = pneg %p574
      %p581 = scmp.eq.s32.totalorder %s36, 1
      %p582 = por %p580, %p581
      %p583 = scmp.ne.s32.totalorder %s575, %s578
      %p584 = scmp.eq.s32.totalorder %s36, 0
      %p585 = por %p583, %p584
      %p586 = scmp.ne.s32.totalorder %s575, %s578
      %p587 = scmp.eq.s32.totalorder %s41, 1
      %p588 = por %p586, %p587
      %p589 = scmp.ne.s32.totalorder %s578, %s579
      %p590 = scmp.eq.s32.totalorder %s41, 0
      %p591 = por %p589, %p590
      %p592 = scmp.ne.s32.totalorder %s578, %s579
      %p593 = scmp.eq.s32.totalorder %s42, 1
      %p594 = por %p592, %p593
      %p596 = scmp.ne.s32.totalorder %s579, %s595
      %p597 = scmp.eq.s32.totalorder %s42, 0
      %p598 = por %p596, %p597
      %s599 = ssub.s32 %s36, %s43
      %p600 = scmp.eq.s32.totalorder %s599, 0
      %s602 = sadd.s32 %s601, 1
      %s603 = scalar_select %p600, %s601, %s602
      %p606 = pneg %p600
      %p607 = scmp.eq.s32.totalorder %s36, 1
      %p608 = por %p606, %p607
      %p609 = scmp.ne.s32.totalorder %s601, %s604
      %p610 = scmp.eq.s32.totalorder %s36, 0
      %p611 = por %p609, %p610
      %p612 = scmp.ne.s32.totalorder %s601, %s604
      %p613 = scmp.eq.s32.totalorder %s41, 1
      %p614 = por %p612, %p613
      %p615 = scmp.ne.s32.totalorder %s604, %s605
      %p616 = scmp.eq.s32.totalorder %s41, 0
      %p617 = por %p615, %p616
      %p618 = scmp.ne.s32.totalorder %s604, %s605
      %p619 = scmp.eq.s32.totalorder %s42, 1
      %p620 = por %p618, %p619
      %p622 = scmp.ne.s32.totalorder %s605, %s621
      %p623 = scmp.eq.s32.totalorder %s42, 0
      %p624 = por %p622, %p623
      %p625 = scmp.le.s32.totalorder 1, %s36
      %p626 = scmp.lt.s32.totalorder %s36, 3
      %p627 = pnand %p625, %p626
      %p628 = pneg %p627
      // Predicated region
      $region9: #{segment_generator_forward.1} parent=5 // pred_check
        _
      $region10: #{segment_generator_forward.1} parent=5 // pred_check_branch
        %630 = sbr.rel (%p627) target = $region12
      $region11: #{segment_generator_forward.1} parent=5 // pred_region
        %s631 = ssub.s32 %s36, 1
        // Predicated region
        $region13: #{segment_generator_forward.1} parent=11 // pred_check
          %p632 = pneg %p57
        $region14: #{segment_generator_forward.1} parent=11 // pred_check_branch
          %634 = sbr.rel (%p632) target = $region16
        $region15: #{segment_generator_forward.1} parent=11 // pred_region
          _
        $region16: #{segment_generator_forward.1} parent=11 // pred_fallthru
          _
        // Predicated region
        $region17: #{segment_generator_forward.1} parent=11 // pred_check
          %p635 = pneg %p78
        $region18: #{segment_generator_forward.1} parent=11 // pred_check_branch
          %637 = sbr.rel (%p635) target = $region20
        $region19: #{segment_generator_forward.1} parent=11 // pred_region
          _
        $region20: #{segment_generator_forward.1} parent=11 // pred_fallthru
          _
        // Predicated region
        $region21: #{segment_generator_forward.1} parent=11 // pred_check
          %p638 = pneg %p99
        $region22: #{segment_generator_forward.1} parent=11 // pred_check_branch
          %640 = sbr.rel (%p638) target = $region24
        $region23: #{segment_generator_forward.1} parent=11 // pred_region
          _
        $region24: #{segment_generator_forward.1} parent=11 // pred_fallthru
          _
        // Predicated region
        $region25: #{segment_generator_forward.1} parent=11 // pred_check
          %p641 = pneg %p120
        $region26: #{segment_generator_forward.1} parent=11 // pred_check_branch
          %643 = sbr.rel (%p641) target = $region28
        $region27: #{segment_generator_forward.1} parent=11 // pred_region
          _
        $region28: #{segment_generator_forward.1} parent=11 // pred_fallthru
          _
        // Predicated region
        $region29: #{segment_generator_forward.1} parent=11 // pred_check
          %p644 = pneg %p141
        $region30: #{segment_generator_forward.1} parent=11 // pred_check_branch
          %646 = sbr.rel (%p644) target = $region32
        $region31: #{segment_generator_forward.1} parent=11 // pred_region
          %648 = vsyncadd [#allocation4], 0
          %s649 = sshll.u32 %s4, 4
          %s650 = int_to_ptr.hbm [resolvable:$true] %s649
          %s651 = sshll.u32 [#allocation3], 4
          %s652 = int_to_ptr.vmem [resolvable:$true] %s651
          %657 = dma.hbm_to_vmem [thread:$0]  %s650, 192, %s652, [#allocation4], 64, 64, 4
        $region32: #{segment_generator_forward.1} parent=11 // pred_fallthru
          _
        // Predicated region
        $region33: #{segment_generator_forward.1} parent=11 // pred_check
          %p658 = pneg %p162
        $region34: #{segment_generator_forward.1} parent=11 // pred_check_branch
          %660 = sbr.rel (%p658) target = $region36
        $region35: #{segment_generator_forward.1} parent=11 // pred_region
          %662 = vsyncadd [#allocation6], 0
          %s663 = sshll.u32 %s5, 4
          %s664 = int_to_ptr.hbm [resolvable:$true] %s663
          %s665 = sshll.u32 [#allocation5], 4
          %s666 = int_to_ptr.vmem [resolvable:$true] %s665
          %671 = dma.hbm_to_vmem [thread:$0]  %s664, 384, %s666, [#allocation6], 128, 128, 8
        $region36: #{segment_generator_forward.1} parent=11 // pred_fallthru
          _
        // Predicated region
        $region37: #{segment_generator_forward.1} parent=11 // pred_check
          %p672 = pneg %p183
        $region38: #{segment_generator_forward.1} parent=11 // pred_check_branch
          %674 = sbr.rel (%p672) target = $region40
        $region39: #{segment_generator_forward.1} parent=11 // pred_region
          _
        $region40: #{segment_generator_forward.1} parent=11 // pred_fallthru
          _
        // Predicated region
        $region41: #{segment_generator_forward.1} parent=11 // pred_check
          %p675 = pneg %p204
        $region42: #{segment_generator_forward.1} parent=11 // pred_check_branch
          %677 = sbr.rel (%p675) target = $region44
        $region43: #{segment_generator_forward.1} parent=11 // pred_region
          _
        $region44: #{segment_generator_forward.1} parent=11 // pred_fallthru
          _
        // Predicated region
        $region45: #{segment_generator_forward.1} parent=11 // pred_check
          %p678 = pneg %p225
        $region46: #{segment_generator_forward.1} parent=11 // pred_check_branch
          %680 = sbr.rel (%p678) target = $region48
        $region47: #{segment_generator_forward.1} parent=11 // pred_region
          _
        $region48: #{segment_generator_forward.1} parent=11 // pred_fallthru
          _
        // Predicated region
        $region49: #{segment_generator_forward.1} parent=11 // pred_check
          %p681 = pneg %p246
        $region50: #{segment_generator_forward.1} parent=11 // pred_check_branch
          %683 = sbr.rel (%p681) target = $region52
        $region51: #{segment_generator_forward.1} parent=11 // pred_region
          _
        $region52: #{segment_generator_forward.1} parent=11 // pred_fallthru
          _
        // Predicated region
        $region53: #{segment_generator_forward.1} parent=11 // pred_check
          %p684 = pneg %p267
        $region54: #{segment_generator_forward.1} parent=11 // pred_check_branch
          %686 = sbr.rel (%p684) target = $region56
        $region55: #{segment_generator_forward.1} parent=11 // pred_region
          _
        $region56: #{segment_generator_forward.1} parent=11 // pred_fallthru
          _
        // Predicated region
        $region57: #{segment_generator_forward.1} parent=11 // pred_check
          %p687 = pneg %p288
        $region58: #{segment_generator_forward.1} parent=11 // pred_check_branch
          %689 = sbr.rel (%p687) target = $region60
        $region59: #{segment_generator_forward.1} parent=11 // pred_region
          _
        $region60: #{segment_generator_forward.1} parent=11 // pred_fallthru
          _
        // Predicated region
        $region61: #{segment_generator_forward.1} parent=11 // pred_check
          %p690 = pneg %p309
        $region62: #{segment_generator_forward.1} parent=11 // pred_check_branch
          %692 = sbr.rel (%p690) target = $region64
        $region63: #{segment_generator_forward.1} parent=11 // pred_region
          _
        $region64: #{segment_generator_forward.1} parent=11 // pred_fallthru
          _
        // Predicated region
        $region65: #{segment_generator_forward.1} parent=11 // pred_check
          %p693 = pneg %p330
        $region66: #{segment_generator_forward.1} parent=11 // pred_check_branch
          %695 = sbr.rel (%p693) target = $region68
        $region67: #{segment_generator_forward.1} parent=11 // pred_region
          _
        $region68: #{segment_generator_forward.1} parent=11 // pred_fallthru
          _
        // Predicated region
        $region69: #{segment_generator_forward.1} parent=11 // pred_check
          %p696 = pneg %p351
        $region70: #{segment_generator_forward.1} parent=11 // pred_check_branch
          %698 = sbr.rel (%p696) target = $region72
        $region71: #{segment_generator_forward.1} parent=11 // pred_region
          _
        $region72: #{segment_generator_forward.1} parent=11 // pred_fallthru
          _
        // Predicated region
        $region73: #{segment_generator_forward.1} parent=11 // pred_check
          %p699 = pneg %p372
        $region74: #{segment_generator_forward.1} parent=11 // pred_check_branch
          %701 = sbr.rel (%p699) target = $region76
        $region75: #{segment_generator_forward.1} parent=11 // pred_region
          _
        $region76: #{segment_generator_forward.1} parent=11 // pred_fallthru
          _
        // Predicated region
        $region77: #{segment_generator_forward.1} parent=11 // pred_check
          %p702 = pneg %p393
        $region78: #{segment_generator_forward.1} parent=11 // pred_check_branch
          %704 = sbr.rel (%p702) target = $region80
        $region79: #{segment_generator_forward.1} parent=11 // pred_region
          _
        $region80: #{segment_generator_forward.1} parent=11 // pred_fallthru
          _
        // Predicated region
        $region81: #{segment_generator_forward.1} parent=11 // pred_check
          %p705 = pneg %p414
        $region82: #{segment_generator_forward.1} parent=11 // pred_check_branch
          %707 = sbr.rel (%p705) target = $region84
        $region83: #{segment_generator_forward.1} parent=11 // pred_region
          _
        $region84: #{segment_generator_forward.1} parent=11 // pred_fallthru
          _
        // Predicated region
        $region85: #{segment_generator_forward.1} parent=11 // pred_check
          %p708 = pneg %p435
        $region86: #{segment_generator_forward.1} parent=11 // pred_check_branch
          %710 = sbr.rel (%p708) target = $region88
        $region87: #{segment_generator_forward.1} parent=11 // pred_region
          _
        $region88: #{segment_generator_forward.1} parent=11 // pred_fallthru
          _
      $region12: #{segment_generator_forward.1} parent=5 // pred_fallthru
        _
      %p711 = scmp.lt.s32.totalorder %s36, 2
      // Predicated region
      $region89: #{segment_generator_forward.1} parent=5 // pred_check
        %p712 = pneg %p711
      $region90: #{segment_generator_forward.1} parent=5 // pred_check_branch
        %714 = sbr.rel (%p712) target = $region92
      $region91: #{segment_generator_forward.1} parent=5 // pred_region
        // Predicated region
        $region93: #{segment_generator_forward.1} parent=91 // pred_check
          %p715 = pneg %p455
        $region94: #{segment_generator_forward.1} parent=91 // pred_check_branch
          %717 = sbr.rel (%p715) target = $region96
        $region95: #{segment_generator_forward.1} parent=91 // pred_region
          %s718 = sand.u32 %s36, 1
          %s719 = scalar_lea.sflag [#allocation4], %s718
          %s720 = sand.u32 %s445, 1
          %s721 = smul.addr %s720, 1024
          %s722 = scalar_lea.vmem [#allocation7], %s721
          %s723 = smul.u32 8, %s36
          %725 = vsyncadd %s719, 0
          %s726 = smul.addr %s723, 8
          %s727 = scalar_lea.hbm %s19, %s726
          %s728 = sshll.u32 %s727, 4
          %s729 = int_to_ptr.hbm [resolvable:$true] %s728
          %s730 = sshll.u32 %s722, 4
          %s731 = int_to_ptr.vmem [resolvable:$true] %s730
          %736 = dma.hbm_to_vmem [thread:$0]  %s729, 16384, %s731, %s719, 2048, 1024, 64
        $region96: #{segment_generator_forward.1} parent=91 // pred_fallthru
          _
        // Predicated region
        $region97: #{segment_generator_forward.1} parent=91 // pred_check
          %p737 = pneg %p481
        $region98: #{segment_generator_forward.1} parent=91 // pred_check_branch
          %739 = sbr.rel (%p737) target = $region100
        $region99: #{segment_generator_forward.1} parent=91 // pred_region
          %s740 = sand.u32 %s471, 1
          %s741 = sand.u32 %s471, 1
          %s742 = smul.addr %s741, 512
          %s743 = scalar_lea.vmem [#allocation8], %s742
          %s744 = smul.u32 8, %s36
          %s745 = smul.addr %s744, 8
          %s746 = scalar_lea.vmem %s20, %s745
          // Predicated region
          $region101: #{segment_generator_forward.1} parent=99 // pred_check
            _
          $region102: #{segment_generator_forward.1} parent=99 // pred_check_branch
            %748 = sbr.rel (0) target = $region104
          $region103: #{segment_generator_forward.1} parent=99 // pred_region
            // Predicated region
            $region105: #{segment_generator_forward.1} parent=103 // pred_check
              _
            $region106: #{segment_generator_forward.1} parent=103 // pred_check_branch
              %750 = sbr.rel (0) target = $region108
            $region107: #{segment_generator_forward.1} parent=103 // pred_region
              loop: start=0, step=1, limit=1
              $region109: #{segment_generator_forward.1} parent=107 // loop_pre_header
                _
              $region110: #{segment_generator_forward.1} parent=107 // loop_header
                %s752 = sphi 0, %s756
                %p753 = scmp.ge.s32.totalorder %s752, 1
                %s757 = sphi %s746, %s746
                %s758 = sphi %s743, %s743
              $region111: #{segment_generator_forward.1} parent=107 // loop_header_branch
                %755 = sbr.rel (%p753) target = $region115
              $region112: #{segment_generator_forward.1} parent=107 // loop_body
                %v759 = vld [vmem:[%s757] sm:$0xff]
                %760 = vst [vmem:[%s758] sm:$0xff] %v759
                %v761 = vld [vmem:[%s757 + $0x8] sm:$0xff]
                %762 = vst [vmem:[%s758 + $0x8] sm:$0xff] %v761
                %v763 = vld [vmem:[%s757 + $0x10] sm:$0xff]
                %764 = vst [vmem:[%s758 + $0x10] sm:$0xff] %v763
                %v765 = vld [vmem:[%s757 + $0x18] sm:$0xff]
                %766 = vst [vmem:[%s758 + $0x18] sm:$0xff] %v765
                %v767 = vld [vmem:[%s757 + $0x20] sm:$0xff]
                %768 = vst [vmem:[%s758 + $0x20] sm:$0xff] %v767
                %v769 = vld [vmem:[%s757 + $0x28] sm:$0xff]
                %770 = vst [vmem:[%s758 + $0x28] sm:$0xff] %v769
                %v771 = vld [vmem:[%s757 + $0x30] sm:$0xff]
                %772 = vst [vmem:[%s758 + $0x30] sm:$0xff] %v771
                %v773 = vld [vmem:[%s757 + $0x38] sm:$0xff]
                %774 = vst [vmem:[%s758 + $0x38] sm:$0xff] %v773
                %v775 = vld [vmem:[%s757 + $0x80] sm:$0xff]
                %776 = vst [vmem:[%s758 + $0x40] sm:$0xff] %v775
                %v777 = vld [vmem:[%s757 + $0x88] sm:$0xff]
                %778 = vst [vmem:[%s758 + $0x48] sm:$0xff] %v777
                %v779 = vld [vmem:[%s757 + $0x90] sm:$0xff]
                %780 = vst [vmem:[%s758 + $0x50] sm:$0xff] %v779
                %v781 = vld [vmem:[%s757 + $0x98] sm:$0xff]
                %782 = vst [vmem:[%s758 + $0x58] sm:$0xff] %v781
                %v783 = vld [vmem:[%s757 + $0xa0] sm:$0xff]
                %784 = vst [vmem:[%s758 + $0x60] sm:$0xff] %v783
                %v785 = vld [vmem:[%s757 + $0xa8] sm:$0xff]
                %786 = vst [vmem:[%s758 + $0x68] sm:$0xff] %v785
                %v787 = vld [vmem:[%s757 + $0xb0] sm:$0xff]
                %788 = vst [vmem:[%s758 + $0x70] sm:$0xff] %v787
                %v789 = vld [vmem:[%s757 + $0xb8] sm:$0xff]
                %790 = vst [vmem:[%s758 + $0x78] sm:$0xff] %v789
                %v791 = vld [vmem:[%s757 + $0x100] sm:$0xff]
                %792 = vst [vmem:[%s758 + $0x80] sm:$0xff] %v791
                %v793 = vld [vmem:[%s757 + $0x108] sm:$0xff]
                %794 = vst [vmem:[%s758 + $0x88] sm:$0xff] %v793
                %v795 = vld [vmem:[%s757 + $0x110] sm:$0xff]
                %796 = vst [vmem:[%s758 + $0x90] sm:$0xff] %v795
                %v797 = vld [vmem:[%s757 + $0x118] sm:$0xff]
                %798 = vst [vmem:[%s758 + $0x98] sm:$0xff] %v797
                %v799 = vld [vmem:[%s757 + $0x120] sm:$0xff]
                %800 = vst [vmem:[%s758 + $0xa0] sm:$0xff] %v799
                %v801 = vld [vmem:[%s757 + $0x128] sm:$0xff]
                %802 = vst [vmem:[%s758 + $0xa8] sm:$0xff] %v801
                %v803 = vld [vmem:[%s757 + $0x130] sm:$0xff]
                %804 = vst [vmem:[%s758 + $0xb0] sm:$0xff] %v803
                %v805 = vld [vmem:[%s757 + $0x138] sm:$0xff]
                %806 = vst [vmem:[%s758 + $0xb8] sm:$0xff] %v805
                %v807 = vld [vmem:[%s757 + $0x180] sm:$0xff]
                %808 = vst [vmem:[%s758 + $0xc0] sm:$0xff] %v807
                %v809 = vld [vmem:[%s757 + $0x188] sm:$0xff]
                %810 = vst [vmem:[%s758 + $0xc8] sm:$0xff] %v809
                %v811 = vld [vmem:[%s757 + $0x190] sm:$0xff]
                %812 = vst [vmem:[%s758 + $0xd0] sm:$0xff] %v811
                %v813 = vld [vmem:[%s757 + $0x198] sm:$0xff]
                %814 = vst [vmem:[%s758 + $0xd8] sm:$0xff] %v813
                %v815 = vld [vmem:[%s757 + $0x1a0] sm:$0xff]
                %816 = vst [vmem:[%s758 + $0xe0] sm:$0xff] %v815
                %v817 = vld [vmem:[%s757 + $0x1a8] sm:$0xff]
                %818 = vst [vmem:[%s758 + $0xe8] sm:$0xff] %v817
                %v819 = vld [vmem:[%s757 + $0x1b0] sm:$0xff]
                %820 = vst [vmem:[%s758 + $0xf0] sm:$0xff] %v819
                %v821 = vld [vmem:[%s757 + $0x1b8] sm:$0xff]
                %822 = vst [vmem:[%s758 + $0xf8] sm:$0xff] %v821
                %v823 = vld [vmem:[%s757 + $0x200] sm:$0xff]
                %824 = vst [vmem:[%s758 + $0x100] sm:$0xff] %v823
                %v825 = vld [vmem:[%s757 + $0x208] sm:$0xff]
                %826 = vst [vmem:[%s758 + $0x108] sm:$0xff] %v825
                %v827 = vld [vmem:[%s757 + $0x210] sm:$0xff]
                %828 = vst [vmem:[%s758 + $0x110] sm:$0xff] %v827
                %v829 = vld [vmem:[%s757 + $0x218] sm:$0xff]
                %830 = vst [vmem:[%s758 + $0x118] sm:$0xff] %v829
                %v831 = vld [vmem:[%s757 + $0x220] sm:$0xff]
                %832 = vst [vmem:[%s758 + $0x120] sm:$0xff] %v831
                %v833 = vld [vmem:[%s757 + $0x228] sm:$0xff]
                %834 = vst [vmem:[%s758 + $0x128] sm:$0xff] %v833
                %v835 = vld [vmem:[%s757 + $0x230] sm:$0xff]
                %836 = vst [vmem:[%s758 + $0x130] sm:$0xff] %v835
                %v837 = vld [vmem:[%s757 + $0x238] sm:$0xff]
                %838 = vst [vmem:[%s758 + $0x138] sm:$0xff] %v837
                %v839 = vld [vmem:[%s757 + $0x280] sm:$0xff]
                %840 = vst [vmem:[%s758 + $0x140] sm:$0xff] %v839
                %v841 = vld [vmem:[%s757 + $0x288] sm:$0xff]
                %842 = vst [vmem:[%s758 + $0x148] sm:$0xff] %v841
                %v843 = vld [vmem:[%s757 + $0x290] sm:$0xff]
                %844 = vst [vmem:[%s758 + $0x150] sm:$0xff] %v843
                %v845 = vld [vmem:[%s757 + $0x298] sm:$0xff]
                %846 = vst [vmem:[%s758 + $0x158] sm:$0xff] %v845
                %v847 = vld [vmem:[%s757 + $0x2a0] sm:$0xff]
                %848 = vst [vmem:[%s758 + $0x160] sm:$0xff] %v847
                %v849 = vld [vmem:[%s757 + $0x2a8] sm:$0xff]
                %850 = vst [vmem:[%s758 + $0x168] sm:$0xff] %v849
                %v851 = vld [vmem:[%s757 + $0x2b0] sm:$0xff]
                %852 = vst [vmem:[%s758 + $0x170] sm:$0xff] %v851
                %v853 = vld [vmem:[%s757 + $0x2b8] sm:$0xff]
                %854 = vst [vmem:[%s758 + $0x178] sm:$0xff] %v853
                %v855 = vld [vmem:[%s757 + $0x300] sm:$0xff]
                %856 = vst [vmem:[%s758 + $0x180] sm:$0xff] %v855
                %v857 = vld [vmem:[%s757 + $0x308] sm:$0xff]
                %858 = vst [vmem:[%s758 + $0x188] sm:$0xff] %v857
                %v859 = vld [vmem:[%s757 + $0x310] sm:$0xff]
                %860 = vst [vmem:[%s758 + $0x190] sm:$0xff] %v859
                %v861 = vld [vmem:[%s757 + $0x318] sm:$0xff]
                %862 = vst [vmem:[%s758 + $0x198] sm:$0xff] %v861
                %v863 = vld [vmem:[%s757 + $0x320] sm:$0xff]
                %864 = vst [vmem:[%s758 + $0x1a0] sm:$0xff] %v863
                %v865 = vld [vmem:[%s757 + $0x328] sm:$0xff]
                %866 = vst [vmem:[%s758 + $0x1a8] sm:$0xff] %v865
                %v867 = vld [vmem:[%s757 + $0x330] sm:$0xff]
                %868 = vst [vmem:[%s758 + $0x1b0] sm:$0xff] %v867
                %v869 = vld [vmem:[%s757 + $0x338] sm:$0xff]
                %870 = vst [vmem:[%s758 + $0x1b8] sm:$0xff] %v869
                %v871 = vld [vmem:[%s757 + $0x380] sm:$0xff]
                %872 = vst [vmem:[%s758 + $0x1c0] sm:$0xff] %v871
                %v873 = vld [vmem:[%s757 + $0x388] sm:$0xff]
                %874 = vst [vmem:[%s758 + $0x1c8] sm:$0xff] %v873
                %v875 = vld [vmem:[%s757 + $0x390] sm:$0xff]
                %876 = vst [vmem:[%s758 + $0x1d0] sm:$0xff] %v875
                %v877 = vld [vmem:[%s757 + $0x398] sm:$0xff]
                %878 = vst [vmem:[%s758 + $0x1d8] sm:$0xff] %v877
                %v879 = vld [vmem:[%s757 + $0x3a0] sm:$0xff]
                %880 = vst [vmem:[%s758 + $0x1e0] sm:$0xff] %v879
                %v881 = vld [vmem:[%s757 + $0x3a8] sm:$0xff]
                %882 = vst [vmem:[%s758 + $0x1e8] sm:$0xff] %v881
                %v883 = vld [vmem:[%s757 + $0x3b0] sm:$0xff]
                %884 = vst [vmem:[%s758 + $0x1f0] sm:$0xff] %v883
                %v885 = vld [vmem:[%s757 + $0x3b8] sm:$0xff]
                %886 = vst [vmem:[%s758 + $0x1f8] sm:$0xff] %v885
              $region113: #{segment_generator_forward.1} parent=107 // loop_footer
                %s756 = sadd.s32 1, %s752
              $region114: #{segment_generator_forward.1} parent=107 // loop_footer_branch
                %751 = sbr.rel target = $region110
              $region115: #{segment_generator_forward.1} parent=107 // loop_exit
                _
            $region108: #{segment_generator_forward.1} parent=103 // pred_fallthru
              _
            // Predicated region
            $region116: #{segment_generator_forward.1} parent=103 // pred_check
              _
            $region117: #{segment_generator_forward.1} parent=103 // pred_check_branch
              %888 = sbr.rel target = $region119
            $region118: #{segment_generator_forward.1} parent=103 // pred_region
              _
            $region119: #{segment_generator_forward.1} parent=103 // pred_fallthru
              _
          $region104: #{segment_generator_forward.1} parent=99 // pred_fallthru
            _
          %889 = vnop
        $region100: #{segment_generator_forward.1} parent=91 // pred_fallthru
          _
        // Predicated region
        $region120: #{segment_generator_forward.1} parent=91 // pred_check
          %p890 = pneg %p507
        $region121: #{segment_generator_forward.1} parent=91 // pred_check_branch
          %892 = sbr.rel (%p890) target = $region123
        $region122: #{segment_generator_forward.1} parent=91 // pred_region
          %s893 = sand.u32 %s497, 1
          %s894 = sand.u32 %s497, 1
          %s895 = smul.addr %s894, 256
          %s896 = scalar_lea.vmem [#allocation9], %s895
          %s897 = smul.u32 8, %s36
          %s898 = smul.addr %s897, 8
          %s899 = scalar_lea.vmem %s21, %s898
          // Predicated region
          $region124: #{segment_generator_forward.1} parent=122 // pred_check
            _
          $region125: #{segment_generator_forward.1} parent=122 // pred_check_branch
            %901 = sbr.rel (0) target = $region127
          $region126: #{segment_generator_forward.1} parent=122 // pred_region
            // Predicated region
            $region128: #{segment_generator_forward.1} parent=126 // pred_check
              _
            $region129: #{segment_generator_forward.1} parent=126 // pred_check_branch
              %903 = sbr.rel (0) target = $region131
            $region130: #{segment_generator_forward.1} parent=126 // pred_region
              loop: start=0, step=1, limit=1
              $region132: #{segment_generator_forward.1} parent=130 // loop_pre_header
                _
              $region133: #{segment_generator_forward.1} parent=130 // loop_header
                %s905 = sphi 0, %s909
                %p906 = scmp.ge.s32.totalorder %s905, 1
                %s910 = sphi %s899, %s899
                %s911 = sphi %s896, %s896
              $region134: #{segment_generator_forward.1} parent=130 // loop_header_branch
                %908 = sbr.rel (%p906) target = $region138
              $region135: #{segment_generator_forward.1} parent=130 // loop_body
                %v912 = vld [vmem:[%s910] sm:$0xff]
                %913 = vst [vmem:[%s911] sm:$0xff] %v912
                %v914 = vld [vmem:[%s910 + $0x8] sm:$0xff]
                %915 = vst [vmem:[%s911 + $0x8] sm:$0xff] %v914
                %v916 = vld [vmem:[%s910 + $0x10] sm:$0xff]
                %917 = vst [vmem:[%s911 + $0x10] sm:$0xff] %v916
                %v918 = vld [vmem:[%s910 + $0x18] sm:$0xff]
                %919 = vst [vmem:[%s911 + $0x18] sm:$0xff] %v918
                %v920 = vld [vmem:[%s910 + $0x20] sm:$0xff]
                %921 = vst [vmem:[%s911 + $0x20] sm:$0xff] %v920
                %v922 = vld [vmem:[%s910 + $0x28] sm:$0xff]
                %923 = vst [vmem:[%s911 + $0x28] sm:$0xff] %v922
                %v924 = vld [vmem:[%s910 + $0x30] sm:$0xff]
                %925 = vst [vmem:[%s911 + $0x30] sm:$0xff] %v924
                %v926 = vld [vmem:[%s910 + $0x38] sm:$0xff]
                %927 = vst [vmem:[%s911 + $0x38] sm:$0xff] %v926
                %v928 = vld [vmem:[%s910 + $0x80] sm:$0xff]
                %929 = vst [vmem:[%s911 + $0x40] sm:$0xff] %v928
                %v930 = vld [vmem:[%s910 + $0x88] sm:$0xff]
                %931 = vst [vmem:[%s911 + $0x48] sm:$0xff] %v930
                %v932 = vld [vmem:[%s910 + $0x90] sm:$0xff]
                %933 = vst [vmem:[%s911 + $0x50] sm:$0xff] %v932
                %v934 = vld [vmem:[%s910 + $0x98] sm:$0xff]
                %935 = vst [vmem:[%s911 + $0x58] sm:$0xff] %v934
                %v936 = vld [vmem:[%s910 + $0xa0] sm:$0xff]
                %937 = vst [vmem:[%s911 + $0x60] sm:$0xff] %v936
                %v938 = vld [vmem:[%s910 + $0xa8] sm:$0xff]
                %939 = vst [vmem:[%s911 + $0x68] sm:$0xff] %v938
                %v940 = vld [vmem:[%s910 + $0xb0] sm:$0xff]
                %941 = vst [vmem:[%s911 + $0x70] sm:$0xff] %v940
                %v942 = vld [vmem:[%s910 + $0xb8] sm:$0xff]
                %943 = vst [vmem:[%s911 + $0x78] sm:$0xff] %v942
                %v944 = vld [vmem:[%s910 + $0x100] sm:$0xff]
                %945 = vst [vmem:[%s911 + $0x80] sm:$0xff] %v944
                %v946 = vld [vmem:[%s910 + $0x108] sm:$0xff]
                %947 = vst [vmem:[%s911 + $0x88] sm:$0xff] %v946
                %v948 = vld [vmem:[%s910 + $0x110] sm:$0xff]
                %949 = vst [vmem:[%s911 + $0x90] sm:$0xff] %v948
                %v950 = vld [vmem:[%s910 + $0x118] sm:$0xff]
                %951 = vst [vmem:[%s911 + $0x98] sm:$0xff] %v950
                %v952 = vld [vmem:[%s910 + $0x120] sm:$0xff]
                %953 = vst [vmem:[%s911 + $0xa0] sm:$0xff] %v952
                %v954 = vld [vmem:[%s910 + $0x128] sm:$0xff]
                %955 = vst [vmem:[%s911 + $0xa8] sm:$0xff] %v954
                %v956 = vld [vmem:[%s910 + $0x130] sm:$0xff]
                %957 = vst [vmem:[%s911 + $0xb0] sm:$0xff] %v956
                %v958 = vld [vmem:[%s910 + $0x138] sm:$0xff]
                %959 = vst [vmem:[%s911 + $0xb8] sm:$0xff] %v958
                %v960 = vld [vmem:[%s910 + $0x180] sm:$0xff]
                %961 = vst [vmem:[%s911 + $0xc0] sm:$0xff] %v960
                %v962 = vld [vmem:[%s910 + $0x188] sm:$0xff]
                %963 = vst [vmem:[%s911 + $0xc8] sm:$0xff] %v962
                %v964 = vld [vmem:[%s910 + $0x190] sm:$0xff]
                %965 = vst [vmem:[%s911 + $0xd0] sm:$0xff] %v964
                %v966 = vld [vmem:[%s910 + $0x198] sm:$0xff]
                %967 = vst [vmem:[%s911 + $0xd8] sm:$0xff] %v966
                %v968 = vld [vmem:[%s910 + $0x1a0] sm:$0xff]
                %969 = vst [vmem:[%s911 + $0xe0] sm:$0xff] %v968
                %v970 = vld [vmem:[%s910 + $0x1a8] sm:$0xff]
                %971 = vst [vmem:[%s911 + $0xe8] sm:$0xff] %v970
                %v972 = vld [vmem:[%s910 + $0x1b0] sm:$0xff]
                %973 = vst [vmem:[%s911 + $0xf0] sm:$0xff] %v972
                %v974 = vld [vmem:[%s910 + $0x1b8] sm:$0xff]
                %975 = vst [vmem:[%s911 + $0xf8] sm:$0xff] %v974
              $region136: #{segment_generator_forward.1} parent=130 // loop_footer
                %s909 = sadd.s32 1, %s905
              $region137: #{segment_generator_forward.1} parent=130 // loop_footer_branch
                %904 = sbr.rel target = $region133
              $region138: #{segment_generator_forward.1} parent=130 // loop_exit
                _
            $region131: #{segment_generator_forward.1} parent=126 // pred_fallthru
              _
            // Predicated region
            $region139: #{segment_generator_forward.1} parent=126 // pred_check
              _
            $region140: #{segment_generator_forward.1} parent=126 // pred_check_branch
              %977 = sbr.rel target = $region142
            $region141: #{segment_generator_forward.1} parent=126 // pred_region
              _
            $region142: #{segment_generator_forward.1} parent=126 // pred_fallthru
              _
          $region127: #{segment_generator_forward.1} parent=122 // pred_fallthru
            _
          %978 = vnop
        $region123: #{segment_generator_forward.1} parent=91 // pred_fallthru
          _
        // Predicated region
        $region143: #{segment_generator_forward.1} parent=91 // pred_check
          %p979 = pneg %p533
        $region144: #{segment_generator_forward.1} parent=91 // pred_check_branch
          %981 = sbr.rel (%p979) target = $region146
        $region145: #{segment_generator_forward.1} parent=91 // pred_region
          %s982 = smul.u32 8, %s36
          %p983 = scmp.lt.s32.totalorder %s982, 15
          %s984 = scalar_select %p983, %s982, 15
          %s985 = scalar_lea.vmem %s22, %s984
          %s986 = smul.u32 8, %s36
        $region146: #{segment_generator_forward.1} parent=91 // pred_fallthru
          _
      $region92: #{segment_generator_forward.1} parent=5 // pred_fallthru
        _
      %p987 = scmp.le.s32.totalorder 1, %s36
      %p988 = scmp.lt.s32.totalorder %s36, 3
      %p989 = pnand %p987, %p988
      %p990 = pneg %p989
      // Predicated region
      $region147: #{segment_generator_forward.1} parent=5 // pred_check
        _
      $region148: #{segment_generator_forward.1} parent=5 // pred_check_branch
        %992 = sbr.rel (%p989) target = $region150
      $region149: #{segment_generator_forward.1} parent=5 // pred_region
        %s993 = ssub.s32 %s36, 1
        // Predicated region
        $region151: #{segment_generator_forward.1} parent=149 // pred_check
          %p994 = pneg %p141
        $region152: #{segment_generator_forward.1} parent=149 // pred_check_branch
          %996 = sbr.rel (%p994) target = $region154
        $region153: #{segment_generator_forward.1} parent=149 // pred_region
          %998 = dma.done [#allocation4], 192
        $region154: #{segment_generator_forward.1} parent=149 // pred_fallthru
          _
        // Predicated region
        $region155: #{segment_generator_forward.1} parent=149 // pred_check
          %p999 = pneg %p162
        $region156: #{segment_generator_forward.1} parent=149 // pred_check_branch
          %1001 = sbr.rel (%p999) target = $region158
        $region157: #{segment_generator_forward.1} parent=149 // pred_region
          %1003 = dma.done [#allocation6], 384
        $region158: #{segment_generator_forward.1} parent=149 // pred_fallthru
          _
        %s1004 = sand.u32 %s41, 1
        %s1005 = scalar_lea.sflag [#allocation4], %s1004
        %s1006 = sand.u32 %s448, 1
        %s1007 = smul.addr %s1006, 1024
        %s1008 = scalar_lea.vmem [#allocation7], %s1007
        // Predicated region
        $region159: #{segment_generator_forward.1} parent=149 // pred_check
          %p1009 = pneg %p461
        $region160: #{segment_generator_forward.1} parent=149 // pred_check_branch
          %1011 = sbr.rel (%p1009) target = $region162
        $region161: #{segment_generator_forward.1} parent=149 // pred_region
          %1013 = dma.done %s1005, 16384
        $region162: #{segment_generator_forward.1} parent=149 // pred_fallthru
          _
        %s1014 = sand.u32 %s474, 1
        %s1015 = sand.u32 %s474, 1
        %s1016 = smul.addr %s1015, 512
        %s1017 = scalar_lea.vmem [#allocation8], %s1016
        // Predicated region
        $region163: #{segment_generator_forward.1} parent=149 // pred_check
          %p1018 = pneg %p487
        $region164: #{segment_generator_forward.1} parent=149 // pred_check_branch
          %1020 = sbr.rel (%p1018) target = $region166
        $region165: #{segment_generator_forward.1} parent=149 // pred_region
          _
        $region166: #{segment_generator_forward.1} parent=149 // pred_fallthru
          _
        %s1021 = sand.u32 %s500, 1
        %s1022 = sand.u32 %s500, 1
        %s1023 = smul.addr %s1022, 256
        %s1024 = scalar_lea.vmem [#allocation9], %s1023
        // Predicated region
        $region167: #{segment_generator_forward.1} parent=149 // pred_check
          %p1025 = pneg %p513
        $region168: #{segment_generator_forward.1} parent=149 // pred_check_branch
          %1027 = sbr.rel (%p1025) target = $region170
        $region169: #{segment_generator_forward.1} parent=149 // pred_region
          _
        $region170: #{segment_generator_forward.1} parent=149 // pred_fallthru
          _
        %p1028 = pneg %p57
        %p1029 = pneg %p54
        %p1030 = pneg %p78
        %p1031 = pneg %p75
        %p1032 = pneg %p99
        %p1033 = pneg %p96
        %p1034 = pneg %p120
        %p1035 = pneg %p117
        %p1036 = pneg %p141
        %p1037 = pneg %p138
        %p1038 = pneg %p162
        %p1039 = pneg %p159
        %p1040 = pneg %p183
        %p1041 = pneg %p180
        %p1042 = pneg %p204
        %p1043 = pneg %p201
        %p1044 = pneg %p225
        %p1045 = pneg %p222
        %p1046 = pneg %p246
        %p1047 = pneg %p243
        %p1048 = pneg %p267
        %p1049 = pneg %p264
        %p1050 = pneg %p288
        %p1051 = pneg %p285
        %p1052 = pneg %p309
        %p1053 = pneg %p306
        %p1054 = pneg %p330
        %p1055 = pneg %p327
        %p1056 = pneg %p351
        %p1057 = pneg %p348
        %p1058 = pneg %p372
        %p1059 = pneg %p369
        %p1060 = pneg %p393
        %p1061 = pneg %p390
        %p1062 = pneg %p414
        %p1063 = pneg %p411
        %p1064 = pneg %p435
        %p1065 = pneg %p432
        %s1066 = sand.u32 %s41, 1
        %s1067 = scalar_lea.sflag [#allocation4], %s1066
        %s1068 = sand.u32 %s448, 1
        %s1069 = smul.addr %s1068, 1024
        %s1070 = scalar_lea.vmem [#allocation7], %s1069
        %p1071 = pneg %p461
        %p1072 = pneg %p458
        %s1073 = sand.u32 %s474, 1
        %s1074 = sand.u32 %s474, 1
        %s1075 = smul.addr %s1074, 512
        %s1076 = scalar_lea.vmem [#allocation8], %s1075
        %p1077 = pneg %p487
        %p1078 = pneg %p484
        %s1079 = sand.u32 %s500, 1
        %s1080 = sand.u32 %s500, 1
        %s1081 = smul.addr %s1080, 256
        %s1082 = scalar_lea.vmem [#allocation9], %s1081
        %p1083 = pneg %p513
        %p1084 = pneg %p510
        %s1085 = smul.u32 8, %s41
        %p1086 = scmp.lt.s32.totalorder %s1085, 15
        %s1087 = scalar_select %p1086, %s1085, 15
        %s1088 = scalar_lea.vmem %s22, %s1087
        %p1089 = pneg %p539
        %p1090 = pneg %p536
        %p1091 = pneg %p565
        %p1092 = pneg %p562
        %p1093 = scmp.lt.s32.totalorder %s41, 1
        %s1094 = scalar_select %p1093, %s41, 1
        %s1095 = smul.addr %s1094, 2
        %s1096 = scalar_lea.vmem %s23, %s1095
        %p1097 = pneg %p591
        %p1098 = pneg %p588
        %s1099 = smul.u32 8, %s41
        %p1100 = scmp.lt.s32.totalorder %s1099, 15
        %s1101 = scalar_select %p1100, %s1099, 15
        %s1102 = smul.addr %s1101, 2
        %s1103 = scalar_lea.vmem %s24, %s1102
        %p1104 = pneg %p617
        %p1105 = pneg %p614
        %s1106 = smul.u32 8, %s41
        %p1107 = scmp.lt.s32.totalorder %s1106, 15
        %s1108 = scalar_select %p1107, %s1106, 15
        %s1109 = smul.addr %s1108, 2
        %s1110 = scalar_lea.vmem %s25, %s1109
        %s1111 = smul.u32 8, %s41
        %s1112 = smul.u32 8, %s41
        %s1113 = smul.u32 8, %s41
        %s1114 = smul.u32 8, %s41
        %p1115 = scmp.lt.s32.totalorder %s1114, 15
        %s1116 = scalar_select %p1115, %s1114, 15
        %s1117 = scalar_lea.vmem %s22, %s1116
        %s1118 = smul.u32 8, %s41
        %p1119 = scmp.lt.s32.totalorder %s41, 1
        %s1120 = scalar_select %p1119, %s41, 1
        %s1121 = smul.addr %s1120, 2
        %s1122 = scalar_lea.vmem %s23, %s1121
        %s1123 = smul.u32 8, %s41
        %p1124 = scmp.lt.s32.totalorder %s1123, 15
        %s1125 = scalar_select %p1124, %s1123, 15
        %s1126 = smul.addr %s1125, 2
        %s1127 = scalar_lea.vmem %s24, %s1126
        %s1128 = smul.u32 8, %s41
        %s1129 = smul.u32 8, %s41
        %p1130 = scmp.lt.s32.totalorder %s1129, 15
        %s1131 = scalar_select %p1130, %s1129, 15
        %s1132 = smul.addr %s1131, 2
        %s1133 = scalar_lea.vmem %s25, %s1132
        %s1134 = smul.u32 8, %s41
        %v1135 = vld [vmem:[%s0] sm:$0xff]
        %v1136 = vld [vmem:[%s0 + $0x8] sm:$0xff]
        %v1137 = vld [vmem:[%s0 + $0x10] sm:$0xff]
        %v1138 = vld [vmem:[%s0 + $0x18] sm:$0xff]
        %v1139 = vld [vmem:[%s0 + $0x20] sm:$0xff]
        %v1140 = vld [vmem:[%s0 + $0x28] sm:$0xff]
        %v1141 = vld [vmem:[%s0 + $0x30] sm:$0xff]
        %v1142 = vld [vmem:[%s0 + $0x38] sm:$0xff]
        %v1143 = vld [vmem:[%s2] sm:$0xff]
        %v1144 = vld [vmem:[%s2 + $0x8] sm:$0xff]
        %v1145 = vld [vmem:[%s2 + $0x10] sm:$0xff]
        %v1146 = vld [vmem:[%s2 + $0x18] sm:$0xff]
        %v1147 = vld [vmem:[%s2 + $0x20] sm:$0xff]
        %v1148 = vld [vmem:[%s2 + $0x28] sm:$0xff]
        %v1149 = vld [vmem:[%s2 + $0x30] sm:$0xff]
        %v1150 = vld [vmem:[%s2 + $0x38] sm:$0xff]
        %v1151 = vld [vmem:[%s2 + $0x40] sm:$0xff]
        %v1152 = vld [vmem:[%s2 + $0x48] sm:$0xff]
        %v1153 = vld [vmem:[%s2 + $0x50] sm:$0xff]
        %v1154 = vld [vmem:[%s2 + $0x58] sm:$0xff]
        %v1155 = vld [vmem:[%s2 + $0x60] sm:$0xff]
        %v1156 = vld [vmem:[%s2 + $0x68] sm:$0xff]
        %v1157 = vld [vmem:[%s2 + $0x70] sm:$0xff]
        %v1158 = vld [vmem:[%s2 + $0x78] sm:$0xff]
        %v1159 = vld [vmem:[%s2 + $0x80] sm:$0xff]
        %v1160 = vld [vmem:[%s2 + $0x88] sm:$0xff]
        %v1161 = vld [vmem:[%s2 + $0x90] sm:$0xff]
        %v1162 = vld [vmem:[%s2 + $0x98] sm:$0xff]
        %v1163 = vld [vmem:[%s2 + $0xa0] sm:$0xff]
        %v1164 = vld [vmem:[%s2 + $0xa8] sm:$0xff]
        %v1165 = vld [vmem:[%s2 + $0xb0] sm:$0xff]
        %v1166 = vld [vmem:[%s2 + $0xb8] sm:$0xff]
        %vm1167 = vcmask 523264
        %v1169 = vsel %vm1167, %v1143, 0
        %v1172 = vsel %vm1167, %v1144, 0
        %v1175 = vsel %vm1167, %v1145, 0
        %v1178 = vsel %vm1167, %v1146, 0
        %v1181 = vsel %vm1167, %v1147, 0
        %v1184 = vsel %vm1167, %v1148, 0
        %v1187 = vsel %vm1167, %v1149, 0
        %v1190 = vsel %vm1167, %v1150, 0
        %v1193 = vsel %vm1167, %v1151, 0
        %v1196 = vsel %vm1167, %v1152, 0
        %v1199 = vsel %vm1167, %v1153, 0
        %v1202 = vsel %vm1167, %v1154, 0
        %v1205 = vsel %vm1167, %v1155, 0
        %v1208 = vsel %vm1167, %v1156, 0
        %v1211 = vsel %vm1167, %v1157, 0
        %v1214 = vsel %vm1167, %v1158, 0
        %v1217 = vsel %vm1167, %v1159, 0
        %v1220 = vsel %vm1167, %v1160, 0
        %v1223 = vsel %vm1167, %v1161, 0
        %v1226 = vsel %vm1167, %v1162, 0
        %v1229 = vsel %vm1167, %v1163, 0
        %v1232 = vsel %vm1167, %v1164, 0
        %v1235 = vsel %vm1167, %v1165, 0
        %v1238 = vsel %vm1167, %v1166, 0
        %1240 = vmatpush.msra.mxu0 0.0
        %1241 = vmatpush.msra.mxu0 0.0
        %1242 = vmatpush.msra.mxu0 0.0
        %1243 = vmatpush.msra.mxu0 0.0
        %1244 = vmatpush.msra.mxu0 0.0
        %1245 = vmatpush.msra.mxu0 0.0
        %1246 = vmatpush.msra.mxu0 0.0
        %1247 = vmatpush.msra.mxu0 0.0
        %1248 = vmatpush.msra.mxu0 %v1142
        %1249 = vmatpush.msra.mxu0 %v1141
        %1250 = vmatpush.msra.mxu0 %v1140
        %1251 = vmatpush.msra.mxu0 %v1139
        %1252 = vmatpush.msra.mxu0 %v1138
        %1253 = vmatpush.msra.mxu0 %v1137
        %1254 = vmatpush.msra.mxu0 %v1136
        %1255 = vmatpush.msra.mxu0 %v1135
        %1256 = vmatmul.f32.gmra.mxu0 %v1169
        %v1257 = vpop.f32.mrf.mxu0
        %v1258 = vadd.f32 0.0, %v1257
        %1259 = vmatmul.f32.gmra.mxu0 %v1172
        %v1260 = vpop.f32.mrf.mxu0
        %v1261 = vadd.f32 0.0, %v1260
        %1262 = vmatmul.f32.gmra.mxu0 %v1175
        %v1263 = vpop.f32.mrf.mxu0
        %v1264 = vadd.f32 0.0, %v1263
        %1265 = vmatmul.f32.gmra.mxu0 %v1178
        %v1266 = vpop.f32.mrf.mxu0
        %v1267 = vadd.f32 0.0, %v1266
        %1268 = vmatmul.f32.gmra.mxu0 %v1181
        %v1269 = vpop.f32.mrf.mxu0
        %v1270 = vadd.f32 0.0, %v1269
        %1271 = vmatmul.f32.gmra.mxu0 %v1184
        %v1272 = vpop.f32.mrf.mxu0
        %v1273 = vadd.f32 0.0, %v1272
        %1274 = vmatmul.f32.gmra.mxu0 %v1187
        %v1275 = vpop.f32.mrf.mxu0
        %v1276 = vadd.f32 0.0, %v1275
        %1277 = vmatmul.f32.gmra.mxu0 %v1190
        %v1278 = vpop.f32.mrf.mxu0
        %v1279 = vadd.f32 0.0, %v1278
        %1280 = vmatmul.f32.gmra.mxu0 %v1193
        %v1281 = vpop.f32.mrf.mxu0
        %v1282 = vadd.f32 0.0, %v1281
        %1283 = vmatmul.f32.gmra.mxu0 %v1196
        %v1284 = vpop.f32.mrf.mxu0
        %v1285 = vadd.f32 0.0, %v1284
        %1286 = vmatmul.f32.gmra.mxu0 %v1199
        %v1287 = vpop.f32.mrf.mxu0
        %v1288 = vadd.f32 0.0, %v1287
        %1289 = vmatmul.f32.gmra.mxu0 %v1202
        %v1290 = vpop.f32.mrf.mxu0
        %v1291 = vadd.f32 0.0, %v1290
        %1292 = vmatmul.f32.gmra.mxu0 %v1205
        %v1293 = vpop.f32.mrf.mxu0
        %v1294 = vadd.f32 0.0, %v1293
        %1295 = vmatmul.f32.gmra.mxu0 %v1208
        %v1296 = vpop.f32.mrf.mxu0
        %v1297 = vadd.f32 0.0, %v1296
        %1298 = vmatmul.f32.gmra.mxu0 %v1211
        %v1299 = vpop.f32.mrf.mxu0
        %v1300 = vadd.f32 0.0, %v1299
        %1301 = vmatmul.f32.gmra.mxu0 %v1214
        %v1302 = vpop.f32.mrf.mxu0
        %v1303 = vadd.f32 0.0, %v1302
        %1304 = vmatmul.f32.gmra.mxu0 %v1217
        %v1305 = vpop.f32.mrf.mxu0
        %v1306 = vadd.f32 0.0, %v1305
        %1307 = vmatmul.f32.gmra.mxu0 %v1220
        %v1308 = vpop.f32.mrf.mxu0
        %v1309 = vadd.f32 0.0, %v1308
        %1310 = vmatmul.f32.gmra.mxu0 %v1223
        %v1311 = vpop.f32.mrf.mxu0
        %v1312 = vadd.f32 0.0, %v1311
        %1313 = vmatmul.f32.gmra.mxu0 %v1226
        %v1314 = vpop.f32.mrf.mxu0
        %v1315 = vadd.f32 0.0, %v1314
        %1316 = vmatmul.f32.gmra.mxu0 %v1229
        %v1317 = vpop.f32.mrf.mxu0
        %v1318 = vadd.f32 0.0, %v1317
        %1319 = vmatmul.f32.gmra.mxu0 %v1232
        %v1320 = vpop.f32.mrf.mxu0
        %v1321 = vadd.f32 0.0, %v1320
        %1322 = vmatmul.f32.gmra.mxu0 %v1235
        %v1323 = vpop.f32.mrf.mxu0
        %v1324 = vadd.f32 0.0, %v1323
        %1325 = vmatmul.f32.gmra.mxu0 %v1238
        %v1326 = vpop.f32.mrf.mxu0
        %v1327 = vadd.f32 0.0, %v1326
        %1328 = vdwg.mxu0
        %v1329 = vld [vmem:[%s3] sm:$0xff]
        %v1330 = vld [vmem:[%s3 + $0x8] sm:$0xff]
        %v1331 = vld [vmem:[%s3 + $0x10] sm:$0xff]
        %v1332 = vld [vmem:[%s3 + $0x18] sm:$0xff]
        %v1333 = vld [vmem:[%s3 + $0x20] sm:$0xff]
        %v1334 = vld [vmem:[%s3 + $0x28] sm:$0xff]
        %v1335 = vld [vmem:[%s3 + $0x30] sm:$0xff]
        %v1336 = vld [vmem:[%s3 + $0x38] sm:$0xff]
        %v1337 = vld [vmem:[#allocation3] sm:$0xf]
        %vm1338 = vcmask 31744
        %v1340 = vsel %vm1338, %v1258, 0
        %v1343 = vsel %vm1338, %v1261, 0
        %v1346 = vsel %vm1338, %v1264, 0
        %v1349 = vsel %vm1338, %v1267, 0
        %v1352 = vsel %vm1338, %v1270, 0
        %v1355 = vsel %vm1338, %v1273, 0
        %v1358 = vsel %vm1338, %v1276, 0
        %v1361 = vsel %vm1338, %v1279, 0
        %vm1363 = vcmask 1043456
        %v1365 = vsel %vm1363, %v1337, 0
        %1367 = vmatpush.msra.mxu0 0.0
        %1368 = vmatpush.msra.mxu0 0.0
        %1369 = vmatpush.msra.mxu0 0.0
        %1370 = vmatpush.msra.mxu0 0.0
        %1371 = vmatpush.msra.mxu0 0.0
        %1372 = vmatpush.msra.mxu0 0.0
        %1373 = vmatpush.msra.mxu0 0.0
        %1374 = vmatpush.msra.mxu0 0.0
        %1375 = vmatpush.msra.mxu0 0.0
        %1376 = vmatpush.msra.mxu0 0.0
        %1377 = vmatpush.msra.mxu0 0.0
        %1378 = vmatpush.msra.mxu0 0.0
        %1379 = vmatpush.msra.mxu0 0.0
        %1380 = vmatpush.msra.mxu0 0.0
        %1381 = vmatpush.msra.mxu0 0.0
        %1382 = vmatpush.msra.mxu0 %v1365
        %1383 = vmatmul.f32.gmra.mxu0 %v1340
        %v1384 = vpop.f32.mrf.mxu0
        %v1385 = vadd.f32 0.0, %v1384
        %1386 = vmatmul.f32.gmra.mxu0 %v1343
        %v1387 = vpop.f32.mrf.mxu0
        %v1388 = vadd.f32 0.0, %v1387
        %1389 = vmatmul.f32.gmra.mxu0 %v1346
        %v1390 = vpop.f32.mrf.mxu0
        %v1391 = vadd.f32 0.0, %v1390
        %1392 = vmatmul.f32.gmra.mxu0 %v1349
        %v1393 = vpop.f32.mrf.mxu0
        %v1394 = vadd.f32 0.0, %v1393
        %1395 = vmatmul.f32.gmra.mxu0 %v1352
        %v1396 = vpop.f32.mrf.mxu0
        %v1397 = vadd.f32 0.0, %v1396
        %1398 = vmatmul.f32.gmra.mxu0 %v1355
        %v1399 = vpop.f32.mrf.mxu0
        %v1400 = vadd.f32 0.0, %v1399
        %1401 = vmatmul.f32.gmra.mxu0 %v1358
        %v1402 = vpop.f32.mrf.mxu0
        %v1403 = vadd.f32 0.0, %v1402
        %1404 = vmatmul.f32.gmra.mxu0 %v1361
        %v1405 = vpop.f32.mrf.mxu0
        %v1406 = vadd.f32 0.0, %v1405
        %1407 = vdwg.mxu0
        %1409 = vset.pattern.permute.xlu0 0
        %1410 = vperm.xlu0 %1409, %v1329
        %v1411 = vpop.permute.xlu0 %1410
        %1414 = vset.pattern.permute.xlu0 0
        %1415 = vperm.xlu0 %1414, %v1330
        %v1416 = vpop.permute.xlu0 %1415
        %1419 = vset.pattern.permute.xlu0 0
        %1420 = vperm.xlu0 %1419, %v1331
        %v1421 = vpop.permute.xlu0 %1420
        %1424 = vset.pattern.permute.xlu0 0
        %1425 = vperm.xlu0 %1424, %v1332
        %v1426 = vpop.permute.xlu0 %1425
        %1429 = vset.pattern.permute.xlu0 0
        %1430 = vperm.xlu0 %1429, %v1333
        %v1431 = vpop.permute.xlu0 %1430
        %1434 = vset.pattern.permute.xlu0 0
        %1435 = vperm.xlu0 %1434, %v1334
        %v1436 = vpop.permute.xlu0 %1435
        %1439 = vset.pattern.permute.xlu0 0
        %1440 = vperm.xlu0 %1439, %v1335
        %v1441 = vpop.permute.xlu0 %1440
        %1444 = vset.pattern.permute.xlu0 0
        %1445 = vperm.xlu0 %1444, %v1336
        %v1446 = vpop.permute.xlu0 %1445
        %v1448 = vadd.f32 %v1411, %v1385
        %v1449 = vadd.f32 %v1416, %v1388
        %v1450 = vadd.f32 %v1421, %v1391
        %v1451 = vadd.f32 %v1426, %v1394
        %v1452 = vadd.f32 %v1431, %v1397
        %v1453 = vadd.f32 %v1436, %v1400
        %v1454 = vadd.f32 %v1441, %v1403
        %v1455 = vadd.f32 %v1446, %v1406
        %s1456 = scalar_lea.vmem [#allocation3], 4
        %v1457 = vld [vmem:[%s1456] sm:$0xf]
        %v1459 = vsel %vm1338, %v1282, 0
        %v1462 = vsel %vm1338, %v1285, 0
        %v1465 = vsel %vm1338, %v1288, 0
        %v1468 = vsel %vm1338, %v1291, 0
        %v1471 = vsel %vm1338, %v1294, 0
        %v1474 = vsel %vm1338, %v1297, 0
        %v1477 = vsel %vm1338, %v1300, 0
        %v1480 = vsel %vm1338, %v1303, 0
        %v1483 = vsel %vm1363, %v1457, 0
        %1485 = vmatpush.msra.mxu0 0.0
        %1486 = vmatpush.msra.mxu0 0.0
        %1487 = vmatpush.msra.mxu0 0.0
        %1488 = vmatpush.msra.mxu0 0.0
        %1489 = vmatpush.msra.mxu0 0.0
        %1490 = vmatpush.msra.mxu0 0.0
        %1491 = vmatpush.msra.mxu0 0.0
        %1492 = vmatpush.msra.mxu0 0.0
        %1493 = vmatpush.msra.mxu0 0.0
        %1494 = vmatpush.msra.mxu0 0.0
        %1495 = vmatpush.msra.mxu0 0.0
        %1496 = vmatpush.msra.mxu0 0.0
        %1497 = vmatpush.msra.mxu0 0.0
        %1498 = vmatpush.msra.mxu0 0.0
        %1499 = vmatpush.msra.mxu0 0.0
        %1500 = vmatpush.msra.mxu0 %v1483
        %1501 = vmatmul.f32.gmra.mxu0 %v1459
        %v1502 = vpop.f32.mrf.mxu0
        %v1503 = vadd.f32 0.0, %v1502
        %1504 = vmatmul.f32.gmra.mxu0 %v1462
        %v1505 = vpop.f32.mrf.mxu0
        %v1506 = vadd.f32 0.0, %v1505
        %1507 = vmatmul.f32.gmra.mxu0 %v1465
        %v1508 = vpop.f32.mrf.mxu0
        %v1509 = vadd.f32 0.0, %v1508
        %1510 = vmatmul.f32.gmra.mxu0 %v1468
        %v1511 = vpop.f32.mrf.mxu0
        %v1512 = vadd.f32 0.0, %v1511
        %1513 = vmatmul.f32.gmra.mxu0 %v1471
        %v1514 = vpop.f32.mrf.mxu0
        %v1515 = vadd.f32 0.0, %v1514
        %1516 = vmatmul.f32.gmra.mxu0 %v1474
        %v1517 = vpop.f32.mrf.mxu0
        %v1518 = vadd.f32 0.0, %v1517
        %1519 = vmatmul.f32.gmra.mxu0 %v1477
        %v1520 = vpop.f32.mrf.mxu0
        %v1521 = vadd.f32 0.0, %v1520
        %1522 = vmatmul.f32.gmra.mxu0 %v1480
        %v1523 = vpop.f32.mrf.mxu0
        %v1524 = vadd.f32 0.0, %v1523
        %1525 = vdwg.mxu0
        %v1526 = vadd.f32 %v1448, %v1503
        %v1527 = vadd.f32 %v1449, %v1506
        %v1528 = vadd.f32 %v1450, %v1509
        %v1529 = vadd.f32 %v1451, %v1512
        %v1530 = vadd.f32 %v1452, %v1515
        %v1531 = vadd.f32 %v1453, %v1518
        %v1532 = vadd.f32 %v1454, %v1521
        %v1533 = vadd.f32 %v1455, %v1524
        %s1534 = scalar_lea.vmem [#allocation3], 8
        %v1535 = vld [vmem:[%s1534] sm:$0xf]
        %v1537 = vsel %vm1338, %v1306, 0
        %v1540 = vsel %vm1338, %v1309, 0
        %v1543 = vsel %vm1338, %v1312, 0
        %v1546 = vsel %vm1338, %v1315, 0
        %v1549 = vsel %vm1338, %v1318, 0
        %v1552 = vsel %vm1338, %v1321, 0
        %v1555 = vsel %vm1338, %v1324, 0
        %v1558 = vsel %vm1338, %v1327, 0
        %v1561 = vsel %vm1363, %v1535, 0
        %1563 = vmatpush.msra.mxu0 0.0
        %1564 = vmatpush.msra.mxu0 0.0
        %1565 = vmatpush.msra.mxu0 0.0
        %1566 = vmatpush.msra.mxu0 0.0
        %1567 = vmatpush.msra.mxu0 0.0
        %1568 = vmatpush.msra.mxu0 0.0
        %1569 = vmatpush.msra.mxu0 0.0
        %1570 = vmatpush.msra.mxu0 0.0
        %1571 = vmatpush.msra.mxu0 0.0
        %1572 = vmatpush.msra.mxu0 0.0
        %1573 = vmatpush.msra.mxu0 0.0
        %1574 = vmatpush.msra.mxu0 0.0
        %1575 = vmatpush.msra.mxu0 0.0
        %1576 = vmatpush.msra.mxu0 0.0
        %1577 = vmatpush.msra.mxu0 0.0
        %1578 = vmatpush.msra.mxu0 %v1561
        %1579 = vmatmul.f32.gmra.mxu0 %v1537
        %v1580 = vpop.f32.mrf.mxu0
        %v1581 = vadd.f32 0.0, %v1580
        %1582 = vmatmul.f32.gmra.mxu0 %v1540
        %v1583 = vpop.f32.mrf.mxu0
        %v1584 = vadd.f32 0.0, %v1583
        %1585 = vmatmul.f32.gmra.mxu0 %v1543
        %v1586 = vpop.f32.mrf.mxu0
        %v1587 = vadd.f32 0.0, %v1586
        %1588 = vmatmul.f32.gmra.mxu0 %v1546
        %v1589 = vpop.f32.mrf.mxu0
        %v1590 = vadd.f32 0.0, %v1589
        %1591 = vmatmul.f32.gmra.mxu0 %v1549
        %v1592 = vpop.f32.mrf.mxu0
        %v1593 = vadd.f32 0.0, %v1592
        %1594 = vmatmul.f32.gmra.mxu0 %v1552
        %v1595 = vpop.f32.mrf.mxu0
        %v1596 = vadd.f32 0.0, %v1595
        %1597 = vmatmul.f32.gmra.mxu0 %v1555
        %v1598 = vpop.f32.mrf.mxu0
        %v1599 = vadd.f32 0.0, %v1598
        %1600 = vmatmul.f32.gmra.mxu0 %v1558
        %v1601 = vpop.f32.mrf.mxu0
        %v1602 = vadd.f32 0.0, %v1601
        %1603 = vdwg.mxu0
        %v1604 = vadd.f32 %v1526, %v1581
        %v1605 = vadd.f32 %v1527, %v1584
        %v1606 = vadd.f32 %v1528, %v1587
        %v1607 = vadd.f32 %v1529, %v1590
        %v1608 = vadd.f32 %v1530, %v1593
        %v1609 = vadd.f32 %v1531, %v1596
        %v1610 = vadd.f32 %v1532, %v1599
        %v1611 = vadd.f32 %v1533, %v1602
        %vm1612 = vcmp.gt.f32.partialorder %v1604, 0.0
        %vm1613 = vcmp.gt.f32.partialorder %v1605, 0.0
        %vm1614 = vcmp.gt.f32.partialorder %v1606, 0.0
        %vm1615 = vcmp.gt.f32.partialorder %v1607, 0.0
        %vm1616 = vcmp.gt.f32.partialorder %v1608, 0.0
        %vm1617 = vcmp.gt.f32.partialorder %v1609, 0.0
        %vm1618 = vcmp.gt.f32.partialorder %v1610, 0.0
        %vm1619 = vcmp.gt.f32.partialorder %v1611, 0.0
        %v1620 = vmul.f32 %v1604, 0.2
        %v1621 = vmul.f32 %v1605, 0.2
        %v1622 = vmul.f32 %v1606, 0.2
        %v1623 = vmul.f32 %v1607, 0.2
        %v1624 = vmul.f32 %v1608, 0.2
        %v1625 = vmul.f32 %v1609, 0.2
        %v1626 = vmul.f32 %v1610, 0.2
        %v1627 = vmul.f32 %v1611, 0.2
        %v1628 = vsel %vm1612, %v1604, %v1620
        %v1629 = vsel %vm1613, %v1605, %v1621
        %v1630 = vsel %vm1614, %v1606, %v1622
        %v1631 = vsel %vm1615, %v1607, %v1623
        %v1632 = vsel %vm1616, %v1608, %v1624
        %v1633 = vsel %vm1617, %v1609, %v1625
        %v1634 = vsel %vm1618, %v1610, %v1626
        %v1635 = vsel %vm1619, %v1611, %v1627
        %s1636 = scalar_lea.vmem %s2, 192
        %v1637 = vld [vmem:[%s1636] sm:$0xff]
        %v1638 = vld [vmem:[%s1636 + $0x8] sm:$0xff]
        %v1639 = vld [vmem:[%s1636 + $0x10] sm:$0xff]
        %v1640 = vld [vmem:[%s1636 + $0x18] sm:$0xff]
        %v1641 = vld [vmem:[%s1636 + $0x20] sm:$0xff]
        %v1642 = vld [vmem:[%s1636 + $0x28] sm:$0xff]
        %v1643 = vld [vmem:[%s1636 + $0x30] sm:$0xff]
        %v1644 = vld [vmem:[%s1636 + $0x38] sm:$0xff]
        %v1645 = vld [vmem:[%s1636 + $0x40] sm:$0xff]
        %v1646 = vld [vmem:[%s1636 + $0x48] sm:$0xff]
        %v1647 = vld [vmem:[%s1636 + $0x50] sm:$0xff]
        %v1648 = vld [vmem:[%s1636 + $0x58] sm:$0xff]
        %v1649 = vld [vmem:[%s1636 + $0x60] sm:$0xff]
        %v1650 = vld [vmem:[%s1636 + $0x68] sm:$0xff]
        %v1651 = vld [vmem:[%s1636 + $0x70] sm:$0xff]
        %v1652 = vld [vmem:[%s1636 + $0x78] sm:$0xff]
        %v1653 = vld [vmem:[%s1636 + $0x80] sm:$0xff]
        %v1654 = vld [vmem:[%s1636 + $0x88] sm:$0xff]
        %v1655 = vld [vmem:[%s1636 + $0x90] sm:$0xff]
        %v1656 = vld [vmem:[%s1636 + $0x98] sm:$0xff]
        %v1657 = vld [vmem:[%s1636 + $0xa0] sm:$0xff]
        %v1658 = vld [vmem:[%s1636 + $0xa8] sm:$0xff]
        %v1659 = vld [vmem:[%s1636 + $0xb0] sm:$0xff]
        %v1660 = vld [vmem:[%s1636 + $0xb8] sm:$0xff]
        %v1662 = vsel %vm1167, %v1637, 0
        %v1665 = vsel %vm1167, %v1638, 0
        %v1668 = vsel %vm1167, %v1639, 0
        %v1671 = vsel %vm1167, %v1640, 0
        %v1674 = vsel %vm1167, %v1641, 0
        %v1677 = vsel %vm1167, %v1642, 0
        %v1680 = vsel %vm1167, %v1643, 0
        %v1683 = vsel %vm1167, %v1644, 0
        %v1686 = vsel %vm1167, %v1645, 0
        %v1689 = vsel %vm1167, %v1646, 0
        %v1692 = vsel %vm1167, %v1647, 0
        %v1695 = vsel %vm1167, %v1648, 0
        %v1698 = vsel %vm1167, %v1649, 0
        %v1701 = vsel %vm1167, %v1650, 0
        %v1704 = vsel %vm1167, %v1651, 0
        %v1707 = vsel %vm1167, %v1652, 0
        %v1710 = vsel %vm1167, %v1653, 0
        %v1713 = vsel %vm1167, %v1654, 0
        %v1716 = vsel %vm1167, %v1655, 0
        %v1719 = vsel %vm1167, %v1656, 0
        %v1722 = vsel %vm1167, %v1657, 0
        %v1725 = vsel %vm1167, %v1658, 0
        %v1728 = vsel %vm1167, %v1659, 0
        %v1731 = vsel %vm1167, %v1660, 0
        %1733 = vmatpush.msra.mxu0 0.0
        %1734 = vmatpush.msra.mxu0 0.0
        %1735 = vmatpush.msra.mxu0 0.0
        %1736 = vmatpush.msra.mxu0 0.0
        %1737 = vmatpush.msra.mxu0 0.0
        %1738 = vmatpush.msra.mxu0 0.0
        %1739 = vmatpush.msra.mxu0 0.0
        %1740 = vmatpush.msra.mxu0 0.0
        %1741 = vmatpush.msra.mxu0 %v1635
        %1742 = vmatpush.msra.mxu0 %v1634
        %1743 = vmatpush.msra.mxu0 %v1633
        %1744 = vmatpush.msra.mxu0 %v1632
        %1745 = vmatpush.msra.mxu0 %v1631
        %1746 = vmatpush.msra.mxu0 %v1630
        %1747 = vmatpush.msra.mxu0 %v1629
        %1748 = vmatpush.msra.mxu0 %v1628
        %1749 = vmatmul.f32.gmra.mxu0 %v1662
        %v1750 = vpop.f32.mrf.mxu0
        %v1751 = vadd.f32 0.0, %v1750
        %1752 = vmatmul.f32.gmra.mxu0 %v1665
        %v1753 = vpop.f32.mrf.mxu0
        %v1754 = vadd.f32 0.0, %v1753
        %1755 = vmatmul.f32.gmra.mxu0 %v1668
        %v1756 = vpop.f32.mrf.mxu0
        %v1757 = vadd.f32 0.0, %v1756
        %1758 = vmatmul.f32.gmra.mxu0 %v1671
        %v1759 = vpop.f32.mrf.mxu0
        %v1760 = vadd.f32 0.0, %v1759
        %1761 = vmatmul.f32.gmra.mxu0 %v1674
        %v1762 = vpop.f32.mrf.mxu0
        %v1763 = vadd.f32 0.0, %v1762
        %1764 = vmatmul.f32.gmra.mxu0 %v1677
        %v1765 = vpop.f32.mrf.mxu0
        %v1766 = vadd.f32 0.0, %v1765
        %1767 = vmatmul.f32.gmra.mxu0 %v1680
        %v1768 = vpop.f32.mrf.mxu0
        %v1769 = vadd.f32 0.0, %v1768
        %1770 = vmatmul.f32.gmra.mxu0 %v1683
        %v1771 = vpop.f32.mrf.mxu0
        %v1772 = vadd.f32 0.0, %v1771
        %1773 = vmatmul.f32.gmra.mxu0 %v1686
        %v1774 = vpop.f32.mrf.mxu0
        %v1775 = vadd.f32 0.0, %v1774
        %1776 = vmatmul.f32.gmra.mxu0 %v1689
        %v1777 = vpop.f32.mrf.mxu0
        %v1778 = vadd.f32 0.0, %v1777
        %1779 = vmatmul.f32.gmra.mxu0 %v1692
        %v1780 = vpop.f32.mrf.mxu0
        %v1781 = vadd.f32 0.0, %v1780
        %1782 = vmatmul.f32.gmra.mxu0 %v1695
        %v1783 = vpop.f32.mrf.mxu0
        %v1784 = vadd.f32 0.0, %v1783
        %1785 = vmatmul.f32.gmra.mxu0 %v1698
        %v1786 = vpop.f32.mrf.mxu0
        %v1787 = vadd.f32 0.0, %v1786
        %1788 = vmatmul.f32.gmra.mxu0 %v1701
        %v1789 = vpop.f32.mrf.mxu0
        %v1790 = vadd.f32 0.0, %v1789
        %1791 = vmatmul.f32.gmra.mxu0 %v1704
        %v1792 = vpop.f32.mrf.mxu0
        %v1793 = vadd.f32 0.0, %v1792
        %1794 = vmatmul.f32.gmra.mxu0 %v1707
        %v1795 = vpop.f32.mrf.mxu0
        %v1796 = vadd.f32 0.0, %v1795
        %1797 = vmatmul.f32.gmra.mxu0 %v1710
        %v1798 = vpop.f32.mrf.mxu0
        %v1799 = vadd.f32 0.0, %v1798
        %1800 = vmatmul.f32.gmra.mxu0 %v1713
        %v1801 = vpop.f32.mrf.mxu0
        %v1802 = vadd.f32 0.0, %v1801
        %1803 = vmatmul.f32.gmra.mxu0 %v1716
        %v1804 = vpop.f32.mrf.mxu0
        %v1805 = vadd.f32 0.0, %v1804
        %1806 = vmatmul.f32.gmra.mxu0 %v1719
        %v1807 = vpop.f32.mrf.mxu0
        %v1808 = vadd.f32 0.0, %v1807
        %1809 = vmatmul.f32.gmra.mxu0 %v1722
        %v1810 = vpop.f32.mrf.mxu0
        %v1811 = vadd.f32 0.0, %v1810
        %1812 = vmatmul.f32.gmra.mxu0 %v1725
        %v1813 = vpop.f32.mrf.mxu0
        %v1814 = vadd.f32 0.0, %v1813
        %1815 = vmatmul.f32.gmra.mxu0 %v1728
        %v1816 = vpop.f32.mrf.mxu0
        %v1817 = vadd.f32 0.0, %v1816
        %1818 = vmatmul.f32.gmra.mxu0 %v1731
        %v1819 = vpop.f32.mrf.mxu0
        %v1820 = vadd.f32 0.0, %v1819
        %1821 = vdwg.mxu0
        %s1822 = scalar_lea.vmem %s3, 64
        %v1823 = vld [vmem:[%s1822] sm:$0xff]
        %v1824 = vld [vmem:[%s1822 + $0x8] sm:$0xff]
        %v1825 = vld [vmem:[%s1822 + $0x10] sm:$0xff]
        %v1826 = vld [vmem:[%s1822 + $0x18] sm:$0xff]
        %v1827 = vld [vmem:[%s1822 + $0x20] sm:$0xff]
        %v1828 = vld [vmem:[%s1822 + $0x28] sm:$0xff]
        %v1829 = vld [vmem:[%s1822 + $0x30] sm:$0xff]
        %v1830 = vld [vmem:[%s1822 + $0x38] sm:$0xff]
        %v1831 = vld [vmem:[#allocation5] sm:$0xff]
        %vm1832 = vcmask 64512
        %v1834 = vsel %vm1832, %v1751, 0
        %v1837 = vsel %vm1832, %v1754, 0
        %v1840 = vsel %vm1832, %v1757, 0
        %v1843 = vsel %vm1832, %v1760, 0
        %v1846 = vsel %vm1832, %v1763, 0
        %v1849 = vsel %vm1832, %v1766, 0
        %v1852 = vsel %vm1832, %v1769, 0
        %v1855 = vsel %vm1832, %v1772, 0
        %1857 = vmatpush.msra.mxu0 0.0
        %1858 = vmatpush.msra.mxu0 0.0
        %1859 = vmatpush.msra.mxu0 0.0
        %1860 = vmatpush.msra.mxu0 0.0
        %1861 = vmatpush.msra.mxu0 0.0
        %1862 = vmatpush.msra.mxu0 0.0
        %1863 = vmatpush.msra.mxu0 0.0
        %1864 = vmatpush.msra.mxu0 0.0
        %1865 = vmatpush.msra.mxu0 0.0
        %1866 = vmatpush.msra.mxu0 0.0
        %1867 = vmatpush.msra.mxu0 0.0
        %1868 = vmatpush.msra.mxu0 0.0
        %1869 = vmatpush.msra.mxu0 0.0
        %1870 = vmatpush.msra.mxu0 0.0
        %1871 = vmatpush.msra.mxu0 0.0
        %1872 = vmatpush.msra.mxu0 %v1831
        %1873 = vmatmul.f32.gmra.mxu0 %v1834
        %v1874 = vpop.f32.mrf.mxu0
        %v1875 = vadd.f32 0.0, %v1874
        %1876 = vmatmul.f32.gmra.mxu0 %v1837
        %v1877 = vpop.f32.mrf.mxu0
        %v1878 = vadd.f32 0.0, %v1877
        %1879 = vmatmul.f32.gmra.mxu0 %v1840
        %v1880 = vpop.f32.mrf.mxu0
        %v1881 = vadd.f32 0.0, %v1880
        %1882 = vmatmul.f32.gmra.mxu0 %v1843
        %v1883 = vpop.f32.mrf.mxu0
        %v1884 = vadd.f32 0.0, %v1883
        %1885 = vmatmul.f32.gmra.mxu0 %v1846
        %v1886 = vpop.f32.mrf.mxu0
        %v1887 = vadd.f32 0.0, %v1886
        %1888 = vmatmul.f32.gmra.mxu0 %v1849
        %v1889 = vpop.f32.mrf.mxu0
        %v1890 = vadd.f32 0.0, %v1889
        %1891 = vmatmul.f32.gmra.mxu0 %v1852
        %v1892 = vpop.f32.mrf.mxu0
        %v1893 = vadd.f32 0.0, %v1892
        %1894 = vmatmul.f32.gmra.mxu0 %v1855
        %v1895 = vpop.f32.mrf.mxu0
        %v1896 = vadd.f32 0.0, %v1895
        %1897 = vdwg.mxu0
        %1899 = vset.pattern.permute.xlu0 0
        %1900 = vperm.xlu0 %1899, %v1823
        %v1901 = vpop.permute.xlu0 %1900
        %1904 = vset.pattern.permute.xlu0 0
        %1905 = vperm.xlu0 %1904, %v1824
        %v1906 = vpop.permute.xlu0 %1905
        %1909 = vset.pattern.permute.xlu0 0
        %1910 = vperm.xlu0 %1909, %v1825
        %v1911 = vpop.permute.xlu0 %1910
        %1914 = vset.pattern.permute.xlu0 0
        %1915 = vperm.xlu0 %1914, %v1826
        %v1916 = vpop.permute.xlu0 %1915
        %1919 = vset.pattern.permute.xlu0 0
        %1920 = vperm.xlu0 %1919, %v1827
        %v1921 = vpop.permute.xlu0 %1920
        %1924 = vset.pattern.permute.xlu0 0
        %1925 = vperm.xlu0 %1924, %v1828
        %v1926 = vpop.permute.xlu0 %1925
        %1929 = vset.pattern.permute.xlu0 0
        %1930 = vperm.xlu0 %1929, %v1829
        %v1931 = vpop.permute.xlu0 %1930
        %1934 = vset.pattern.permute.xlu0 0
        %1935 = vperm.xlu0 %1934, %v1830
        %v1936 = vpop.permute.xlu0 %1935
        %v1938 = vadd.f32 %v1901, %v1875
        %v1939 = vadd.f32 %v1906, %v1878
        %v1940 = vadd.f32 %v1911, %v1881
        %v1941 = vadd.f32 %v1916, %v1884
        %v1942 = vadd.f32 %v1921, %v1887
        %v1943 = vadd.f32 %v1926, %v1890
        %v1944 = vadd.f32 %v1931, %v1893
        %v1945 = vadd.f32 %v1936, %v1896
        %s1946 = scalar_lea.vmem [#allocation5], 8
        %v1947 = vld [vmem:[%s1946] sm:$0xff]
        %v1949 = vsel %vm1832, %v1775, 0
        %v1952 = vsel %vm1832, %v1778, 0
        %v1955 = vsel %vm1832, %v1781, 0
        %v1958 = vsel %vm1832, %v1784, 0
        %v1961 = vsel %vm1832, %v1787, 0
        %v1964 = vsel %vm1832, %v1790, 0
        %v1967 = vsel %vm1832, %v1793, 0
        %v1970 = vsel %vm1832, %v1796, 0
        %1972 = vmatpush.msra.mxu0 0.0
        %1973 = vmatpush.msra.mxu0 0.0
        %1974 = vmatpush.msra.mxu0 0.0
        %1975 = vmatpush.msra.mxu0 0.0
        %1976 = vmatpush.msra.mxu0 0.0
        %1977 = vmatpush.msra.mxu0 0.0
        %1978 = vmatpush.msra.mxu0 0.0
        %1979 = vmatpush.msra.mxu0 0.0
        %1980 = vmatpush.msra.mxu0 0.0
        %1981 = vmatpush.msra.mxu0 0.0
        %1982 = vmatpush.msra.mxu0 0.0
        %1983 = vmatpush.msra.mxu0 0.0
        %1984 = vmatpush.msra.mxu0 0.0
        %1985 = vmatpush.msra.mxu0 0.0
        %1986 = vmatpush.msra.mxu0 0.0
        %1987 = vmatpush.msra.mxu0 %v1947
        %1988 = vmatmul.f32.gmra.mxu0 %v1949
        %v1989 = vpop.f32.mrf.mxu0
        %v1990 = vadd.f32 0.0, %v1989
        %1991 = vmatmul.f32.gmra.mxu0 %v1952
        %v1992 = vpop.f32.mrf.mxu0
        %v1993 = vadd.f32 0.0, %v1992
        %1994 = vmatmul.f32.gmra.mxu0 %v1955
        %v1995 = vpop.f32.mrf.mxu0
        %v1996 = vadd.f32 0.0, %v1995
        %1997 = vmatmul.f32.gmra.mxu0 %v1958
        %v1998 = vpop.f32.mrf.mxu0
        %v1999 = vadd.f32 0.0, %v1998
        %2000 = vmatmul.f32.gmra.mxu0 %v1961
        %v2001 = vpop.f32.mrf.mxu0
        %v2002 = vadd.f32 0.0, %v2001
        %2003 = vmatmul.f32.gmra.mxu0 %v1964
        %v2004 = vpop.f32.mrf.mxu0
        %v2005 = vadd.f32 0.0, %v2004
        %2006 = vmatmul.f32.gmra.mxu0 %v1967
        %v2007 = vpop.f32.mrf.mxu0
        %v2008 = vadd.f32 0.0, %v2007
        %2009 = vmatmul.f32.gmra.mxu0 %v1970
        %v2010 = vpop.f32.mrf.mxu0
        %v2011 = vadd.f32 0.0, %v2010
        %2012 = vdwg.mxu0
        %v2013 = vadd.f32 %v1938, %v1990
        %v2014 = vadd.f32 %v1939, %v1993
        %v2015 = vadd.f32 %v1940, %v1996
        %v2016 = vadd.f32 %v1941, %v1999
        %v2017 = vadd.f32 %v1942, %v2002
        %v2018 = vadd.f32 %v1943, %v2005
        %v2019 = vadd.f32 %v1944, %v2008
        %v2020 = vadd.f32 %v1945, %v2011
        %s2021 = scalar_lea.vmem [#allocation5], 16
        %v2022 = vld [vmem:[%s2021] sm:$0xff]
        %v2024 = vsel %vm1832, %v1799, 0
        %v2027 = vsel %vm1832, %v1802, 0
        %v2030 = vsel %vm1832, %v1805, 0
        %v2033 = vsel %vm1832, %v1808, 0
        %v2036 = vsel %vm1832, %v1811, 0
        %v2039 = vsel %vm1832, %v1814, 0
        %v2042 = vsel %vm1832, %v1817, 0
        %v2045 = vsel %vm1832, %v1820, 0
        %2047 = vmatpush.msra.mxu0 0.0
        %2048 = vmatpush.msra.mxu0 0.0
        %2049 = vmatpush.msra.mxu0 0.0
        %2050 = vmatpush.msra.mxu0 0.0
        %2051 = vmatpush.msra.mxu0 0.0
        %2052 = vmatpush.msra.mxu0 0.0
        %2053 = vmatpush.msra.mxu0 0.0
        %2054 = vmatpush.msra.mxu0 0.0
        %2055 = vmatpush.msra.mxu0 0.0
        %2056 = vmatpush.msra.mxu0 0.0
        %2057 = vmatpush.msra.mxu0 0.0
        %2058 = vmatpush.msra.mxu0 0.0
        %2059 = vmatpush.msra.mxu0 0.0
        %2060 = vmatpush.msra.mxu0 0.0
        %2061 = vmatpush.msra.mxu0 0.0
        %2062 = vmatpush.msra.mxu0 %v2022
        %2063 = vmatmul.f32.gmra.mxu0 %v2024
        %v2064 = vpop.f32.mrf.mxu0
        %v2065 = vadd.f32 0.0, %v2064
        %2066 = vmatmul.f32.gmra.mxu0 %v2027
        %v2067 = vpop.f32.mrf.mxu0
        %v2068 = vadd.f32 0.0, %v2067
        %2069 = vmatmul.f32.gmra.mxu0 %v2030
        %v2070 = vpop.f32.mrf.mxu0
        %v2071 = vadd.f32 0.0, %v2070
        %2072 = vmatmul.f32.gmra.mxu0 %v2033
        %v2073 = vpop.f32.mrf.mxu0
        %v2074 = vadd.f32 0.0, %v2073
        %2075 = vmatmul.f32.gmra.mxu0 %v2036
        %v2076 = vpop.f32.mrf.mxu0
        %v2077 = vadd.f32 0.0, %v2076
        %2078 = vmatmul.f32.gmra.mxu0 %v2039
        %v2079 = vpop.f32.mrf.mxu0
        %v2080 = vadd.f32 0.0, %v2079
        %2081 = vmatmul.f32.gmra.mxu0 %v2042
        %v2082 = vpop.f32.mrf.mxu0
        %v2083 = vadd.f32 0.0, %v2082
        %2084 = vmatmul.f32.gmra.mxu0 %v2045
        %v2085 = vpop.f32.mrf.mxu0
        %v2086 = vadd.f32 0.0, %v2085
        %2087 = vdwg.mxu0
        %v2088 = vadd.f32 %v2013, %v2065
        %v2089 = vadd.f32 %v2014, %v2068
        %v2090 = vadd.f32 %v2015, %v2071
        %v2091 = vadd.f32 %v2016, %v2074
        %v2092 = vadd.f32 %v2017, %v2077
        %v2093 = vadd.f32 %v2018, %v2080
        %v2094 = vadd.f32 %v2019, %v2083
        %v2095 = vadd.f32 %v2020, %v2086
        %vm2096 = vcmp.gt.f32.partialorder %v2088, 0.0
        %vm2097 = vcmp.gt.f32.partialorder %v2089, 0.0
        %vm2098 = vcmp.gt.f32.partialorder %v2090, 0.0
        %vm2099 = vcmp.gt.f32.partialorder %v2091, 0.0
        %vm2100 = vcmp.gt.f32.partialorder %v2092, 0.0
        %vm2101 = vcmp.gt.f32.partialorder %v2093, 0.0
        %vm2102 = vcmp.gt.f32.partialorder %v2094, 0.0
        %vm2103 = vcmp.gt.f32.partialorder %v2095, 0.0
        %v2104 = vmul.f32 %v2088, 0.2
        %v2105 = vmul.f32 %v2089, 0.2
        %v2106 = vmul.f32 %v2090, 0.2
        %v2107 = vmul.f32 %v2091, 0.2
        %v2108 = vmul.f32 %v2092, 0.2
        %v2109 = vmul.f32 %v2093, 0.2
        %v2110 = vmul.f32 %v2094, 0.2
        %v2111 = vmul.f32 %v2095, 0.2
        %v2112 = vsel %vm2096, %v2088, %v2104
        %v2113 = vsel %vm2097, %v2089, %v2105
        %v2114 = vsel %vm2098, %v2090, %v2106
        %v2115 = vsel %vm2099, %v2091, %v2107
        %v2116 = vsel %vm2100, %v2092, %v2108
        %v2117 = vsel %vm2101, %v2093, %v2109
        %v2118 = vsel %vm2102, %v2094, %v2110
        %v2119 = vsel %vm2103, %v2095, %v2111
        %s2120 = scalar_lea.vmem %s2, 384
        %v2121 = vld [vmem:[%s2120] sm:$0xff]
        %v2122 = vld [vmem:[%s2120 + $0x8] sm:$0xff]
        %v2123 = vld [vmem:[%s2120 + $0x10] sm:$0xff]
        %v2124 = vld [vmem:[%s2120 + $0x18] sm:$0xff]
        %v2125 = vld [vmem:[%s2120 + $0x20] sm:$0xff]
        %v2126 = vld [vmem:[%s2120 + $0x28] sm:$0xff]
        %v2127 = vld [vmem:[%s2120 + $0x30] sm:$0xff]
        %v2128 = vld [vmem:[%s2120 + $0x38] sm:$0xff]
        %v2129 = vld [vmem:[%s2120 + $0x40] sm:$0xff]
        %v2130 = vld [vmem:[%s2120 + $0x48] sm:$0xff]
        %v2131 = vld [vmem:[%s2120 + $0x50] sm:$0xff]
        %v2132 = vld [vmem:[%s2120 + $0x58] sm:$0xff]
        %v2133 = vld [vmem:[%s2120 + $0x60] sm:$0xff]
        %v2134 = vld [vmem:[%s2120 + $0x68] sm:$0xff]
        %v2135 = vld [vmem:[%s2120 + $0x70] sm:$0xff]
        %v2136 = vld [vmem:[%s2120 + $0x78] sm:$0xff]
        %v2137 = vld [vmem:[%s2120 + $0x80] sm:$0xff]
        %v2138 = vld [vmem:[%s2120 + $0x88] sm:$0xff]
        %v2139 = vld [vmem:[%s2120 + $0x90] sm:$0xff]
        %v2140 = vld [vmem:[%s2120 + $0x98] sm:$0xff]
        %v2141 = vld [vmem:[%s2120 + $0xa0] sm:$0xff]
        %v2142 = vld [vmem:[%s2120 + $0xa8] sm:$0xff]
        %v2143 = vld [vmem:[%s2120 + $0xb0] sm:$0xff]
        %v2144 = vld [vmem:[%s2120 + $0xb8] sm:$0xff]
        %v2146 = vsel %vm1167, %v2121, 0
        %v2149 = vsel %vm1167, %v2122, 0
        %v2152 = vsel %vm1167, %v2123, 0
        %v2155 = vsel %vm1167, %v2124, 0
        %v2158 = vsel %vm1167, %v2125, 0
        %v2161 = vsel %vm1167, %v2126, 0
        %v2164 = vsel %vm1167, %v2127, 0
        %v2167 = vsel %vm1167, %v2128, 0
        %v2170 = vsel %vm1167, %v2129, 0
        %v2173 = vsel %vm1167, %v2130, 0
        %v2176 = vsel %vm1167, %v2131, 0
        %v2179 = vsel %vm1167, %v2132, 0
        %v2182 = vsel %vm1167, %v2133, 0
        %v2185 = vsel %vm1167, %v2134, 0
        %v2188 = vsel %vm1167, %v2135, 0
        %v2191 = vsel %vm1167, %v2136, 0
        %v2194 = vsel %vm1167, %v2137, 0
        %v2197 = vsel %vm1167, %v2138, 0
        %v2200 = vsel %vm1167, %v2139, 0
        %v2203 = vsel %vm1167, %v2140, 0
        %v2206 = vsel %vm1167, %v2141, 0
        %v2209 = vsel %vm1167, %v2142, 0
        %v2212 = vsel %vm1167, %v2143, 0
        %v2215 = vsel %vm1167, %v2144, 0
        %2217 = vmatpush.msra.mxu0 0.0
        %2218 = vmatpush.msra.mxu0 0.0
        %2219 = vmatpush.msra.mxu0 0.0
        %2220 = vmatpush.msra.mxu0 0.0
        %2221 = vmatpush.msra.mxu0 0.0
        %2222 = vmatpush.msra.mxu0 0.0
        %2223 = vmatpush.msra.mxu0 0.0
        %2224 = vmatpush.msra.mxu0 0.0
        %2225 = vmatpush.msra.mxu0 %v2119
        %2226 = vmatpush.msra.mxu0 %v2118
        %2227 = vmatpush.msra.mxu0 %v2117
        %2228 = vmatpush.msra.mxu0 %v2116
        %2229 = vmatpush.msra.mxu0 %v2115
        %2230 = vmatpush.msra.mxu0 %v2114
        %2231 = vmatpush.msra.mxu0 %v2113
        %2232 = vmatpush.msra.mxu0 %v2112
        %2233 = vmatmul.f32.gmra.mxu0 %v2146
        %v2234 = vpop.f32.mrf.mxu0
        %v2235 = vadd.f32 0.0, %v2234
        %2236 = vmatmul.f32.gmra.mxu0 %v2149
        %v2237 = vpop.f32.mrf.mxu0
        %v2238 = vadd.f32 0.0, %v2237
        %2239 = vmatmul.f32.gmra.mxu0 %v2152
        %v2240 = vpop.f32.mrf.mxu0
        %v2241 = vadd.f32 0.0, %v2240
        %2242 = vmatmul.f32.gmra.mxu0 %v2155
        %v2243 = vpop.f32.mrf.mxu0
        %v2244 = vadd.f32 0.0, %v2243
        %2245 = vmatmul.f32.gmra.mxu0 %v2158
        %v2246 = vpop.f32.mrf.mxu0
        %v2247 = vadd.f32 0.0, %v2246
        %2248 = vmatmul.f32.gmra.mxu0 %v2161
        %v2249 = vpop.f32.mrf.mxu0
        %v2250 = vadd.f32 0.0, %v2249
        %2251 = vmatmul.f32.gmra.mxu0 %v2164
        %v2252 = vpop.f32.mrf.mxu0
        %v2253 = vadd.f32 0.0, %v2252
        %2254 = vmatmul.f32.gmra.mxu0 %v2167
        %v2255 = vpop.f32.mrf.mxu0
        %v2256 = vadd.f32 0.0, %v2255
        %2257 = vmatmul.f32.gmra.mxu0 %v2170
        %v2258 = vpop.f32.mrf.mxu0
        %v2259 = vadd.f32 0.0, %v2258
        %2260 = vmatmul.f32.gmra.mxu0 %v2173
        %v2261 = vpop.f32.mrf.mxu0
        %v2262 = vadd.f32 0.0, %v2261
        %2263 = vmatmul.f32.gmra.mxu0 %v2176
        %v2264 = vpop.f32.mrf.mxu0
        %v2265 = vadd.f32 0.0, %v2264
        %2266 = vmatmul.f32.gmra.mxu0 %v2179
        %v2267 = vpop.f32.mrf.mxu0
        %v2268 = vadd.f32 0.0, %v2267
        %2269 = vmatmul.f32.gmra.mxu0 %v2182
        %v2270 = vpop.f32.mrf.mxu0
        %v2271 = vadd.f32 0.0, %v2270
        %2272 = vmatmul.f32.gmra.mxu0 %v2185
        %v2273 = vpop.f32.mrf.mxu0
        %v2274 = vadd.f32 0.0, %v2273
        %2275 = vmatmul.f32.gmra.mxu0 %v2188
        %v2276 = vpop.f32.mrf.mxu0
        %v2277 = vadd.f32 0.0, %v2276
        %2278 = vmatmul.f32.gmra.mxu0 %v2191
        %v2279 = vpop.f32.mrf.mxu0
        %v2280 = vadd.f32 0.0, %v2279
        %2281 = vmatmul.f32.gmra.mxu0 %v2194
        %v2282 = vpop.f32.mrf.mxu0
        %v2283 = vadd.f32 0.0, %v2282
        %2284 = vmatmul.f32.gmra.mxu0 %v2197
        %v2285 = vpop.f32.mrf.mxu0
        %v2286 = vadd.f32 0.0, %v2285
        %2287 = vmatmul.f32.gmra.mxu0 %v2200
        %v2288 = vpop.f32.mrf.mxu0
        %v2289 = vadd.f32 0.0, %v2288
        %2290 = vmatmul.f32.gmra.mxu0 %v2203
        %v2291 = vpop.f32.mrf.mxu0
        %v2292 = vadd.f32 0.0, %v2291
        %2293 = vmatmul.f32.gmra.mxu0 %v2206
        %v2294 = vpop.f32.mrf.mxu0
        %v2295 = vadd.f32 0.0, %v2294
        %2296 = vmatmul.f32.gmra.mxu0 %v2209
        %v2297 = vpop.f32.mrf.mxu0
        %v2298 = vadd.f32 0.0, %v2297
        %2299 = vmatmul.f32.gmra.mxu0 %v2212
        %v2300 = vpop.f32.mrf.mxu0
        %v2301 = vadd.f32 0.0, %v2300
        %2302 = vmatmul.f32.gmra.mxu0 %v2215
        %v2303 = vpop.f32.mrf.mxu0
        %v2304 = vadd.f32 0.0, %v2303
        %2305 = vdwg.mxu0
        %s2306 = scalar_lea.vmem %s3, 128
        %v2307 = vld [vmem:[%s2306] sm:$0xff]
        %v2308 = vld [vmem:[%s2306 + $0x8] sm:$0xff]
        %v2309 = vld [vmem:[%s2306 + $0x10] sm:$0xff]
        %v2310 = vld [vmem:[%s2306 + $0x18] sm:$0xff]
        %v2311 = vld [vmem:[%s2306 + $0x20] sm:$0xff]
        %v2312 = vld [vmem:[%s2306 + $0x28] sm:$0xff]
        %v2313 = vld [vmem:[%s2306 + $0x30] sm:$0xff]
        %v2314 = vld [vmem:[%s2306 + $0x38] sm:$0xff]
        %v2315 = vld [vmem:[%s6] sm:$0xff]
        %v2316 = vld [vmem:[%s6 + $0x8] sm:$0xff]
        %vm2317 = vcmask 130048
        %v2319 = vsel %vm2317, %v2235, 0
        %v2322 = vsel %vm2317, %v2238, 0
        %v2325 = vsel %vm2317, %v2241, 0
        %v2328 = vsel %vm2317, %v2244, 0
        %v2331 = vsel %vm2317, %v2247, 0
        %v2334 = vsel %vm2317, %v2250, 0
        %v2337 = vsel %vm2317, %v2253, 0
        %v2340 = vsel %vm2317, %v2256, 0
        %2342 = vmatpush.msra.mxu0 0.0
        %2343 = vmatpush.msra.mxu0 0.0
        %2344 = vmatpush.msra.mxu0 0.0
        %2345 = vmatpush.msra.mxu0 0.0
        %2346 = vmatpush.msra.mxu0 0.0
        %2347 = vmatpush.msra.mxu0 0.0
        %2348 = vmatpush.msra.mxu0 0.0
        %2349 = vmatpush.msra.mxu0 0.0
        %2350 = vmatpush.msra.mxu0 0.0
        %2351 = vmatpush.msra.mxu0 0.0
        %2352 = vmatpush.msra.mxu0 0.0
        %2353 = vmatpush.msra.mxu0 0.0
        %2354 = vmatpush.msra.mxu0 0.0
        %2355 = vmatpush.msra.mxu0 0.0
        %2356 = vmatpush.msra.mxu0 %v2316
        %2357 = vmatpush.msra.mxu0 %v2315
        %2358 = vmatmul.f32.gmra.mxu0 %v2319
        %v2359 = vpop.f32.mrf.mxu0
        %v2360 = vadd.f32 0.0, %v2359
        %2361 = vmatmul.f32.gmra.mxu0 %v2322
        %v2362 = vpop.f32.mrf.mxu0
        %v2363 = vadd.f32 0.0, %v2362
        %2364 = vmatmul.f32.gmra.mxu0 %v2325
        %v2365 = vpop.f32.mrf.mxu0
        %v2366 = vadd.f32 0.0, %v2365
        %2367 = vmatmul.f32.gmra.mxu0 %v2328
        %v2368 = vpop.f32.mrf.mxu0
        %v2369 = vadd.f32 0.0, %v2368
        %2370 = vmatmul.f32.gmra.mxu0 %v2331
        %v2371 = vpop.f32.mrf.mxu0
        %v2372 = vadd.f32 0.0, %v2371
        %2373 = vmatmul.f32.gmra.mxu0 %v2334
        %v2374 = vpop.f32.mrf.mxu0
        %v2375 = vadd.f32 0.0, %v2374
        %2376 = vmatmul.f32.gmra.mxu0 %v2337
        %v2377 = vpop.f32.mrf.mxu0
        %v2378 = vadd.f32 0.0, %v2377
        %2379 = vmatmul.f32.gmra.mxu0 %v2340
        %v2380 = vpop.f32.mrf.mxu0
        %v2381 = vadd.f32 0.0, %v2380
        %2382 = vdwg.mxu0
        %2384 = vset.pattern.permute.xlu0 0
        %2385 = vperm.xlu0 %2384, %v2307
        %v2386 = vpop.permute.xlu0 %2385
        %2389 = vset.pattern.permute.xlu0 0
        %2390 = vperm.xlu0 %2389, %v2308
        %v2391 = vpop.permute.xlu0 %2390
        %2394 = vset.pattern.permute.xlu0 0
        %2395 = vperm.xlu0 %2394, %v2309
        %v2396 = vpop.permute.xlu0 %2395
        %2399 = vset.pattern.permute.xlu0 0
        %2400 = vperm.xlu0 %2399, %v2310
        %v2401 = vpop.permute.xlu0 %2400
        %2404 = vset.pattern.permute.xlu0 0
        %2405 = vperm.xlu0 %2404, %v2311
        %v2406 = vpop.permute.xlu0 %2405
        %2409 = vset.pattern.permute.xlu0 0
        %2410 = vperm.xlu0 %2409, %v2312
        %v2411 = vpop.permute.xlu0 %2410
        %2414 = vset.pattern.permute.xlu0 0
        %2415 = vperm.xlu0 %2414, %v2313
        %v2416 = vpop.permute.xlu0 %2415
        %2419 = vset.pattern.permute.xlu0 0
        %2420 = vperm.xlu0 %2419, %v2314
        %v2421 = vpop.permute.xlu0 %2420
        %v2423 = vadd.f32 %v2386, %v2360
        %v2424 = vadd.f32 %v2391, %v2363
        %v2425 = vadd.f32 %v2396, %v2366
        %v2426 = vadd.f32 %v2401, %v2369
        %v2427 = vadd.f32 %v2406, %v2372
        %v2428 = vadd.f32 %v2411, %v2375
        %v2429 = vadd.f32 %v2416, %v2378
        %v2430 = vadd.f32 %v2421, %v2381
        %s2431 = scalar_lea.vmem %s6, 16
        %v2432 = vld [vmem:[%s2431] sm:$0xff]
        %v2433 = vld [vmem:[%s2431 + $0x8] sm:$0xff]
        %v2435 = vsel %vm2317, %v2259, 0
        %v2438 = vsel %vm2317, %v2262, 0
        %v2441 = vsel %vm2317, %v2265, 0
        %v2444 = vsel %vm2317, %v2268, 0
        %v2447 = vsel %vm2317, %v2271, 0
        %v2450 = vsel %vm2317, %v2274, 0
        %v2453 = vsel %vm2317, %v2277, 0
        %v2456 = vsel %vm2317, %v2280, 0
        %2458 = vmatpush.msra.mxu0 0.0
        %2459 = vmatpush.msra.mxu0 0.0
        %2460 = vmatpush.msra.mxu0 0.0
        %2461 = vmatpush.msra.mxu0 0.0
        %2462 = vmatpush.msra.mxu0 0.0
        %2463 = vmatpush.msra.mxu0 0.0
        %2464 = vmatpush.msra.mxu0 0.0
        %2465 = vmatpush.msra.mxu0 0.0
        %2466 = vmatpush.msra.mxu0 0.0
        %2467 = vmatpush.msra.mxu0 0.0
        %2468 = vmatpush.msra.mxu0 0.0
        %2469 = vmatpush.msra.mxu0 0.0
        %2470 = vmatpush.msra.mxu0 0.0
        %2471 = vmatpush.msra.mxu0 0.0
        %2472 = vmatpush.msra.mxu0 %v2433
        %2473 = vmatpush.msra.mxu0 %v2432
        %2474 = vmatmul.f32.gmra.mxu0 %v2435
        %v2475 = vpop.f32.mrf.mxu0
        %v2476 = vadd.f32 0.0, %v2475
        %2477 = vmatmul.f32.gmra.mxu0 %v2438
        %v2478 = vpop.f32.mrf.mxu0
        %v2479 = vadd.f32 0.0, %v2478
        %2480 = vmatmul.f32.gmra.mxu0 %v2441
        %v2481 = vpop.f32.mrf.mxu0
        %v2482 = vadd.f32 0.0, %v2481
        %2483 = vmatmul.f32.gmra.mxu0 %v2444
        %v2484 = vpop.f32.mrf.mxu0
        %v2485 = vadd.f32 0.0, %v2484
        %2486 = vmatmul.f32.gmra.mxu0 %v2447
        %v2487 = vpop.f32.mrf.mxu0
        %v2488 = vadd.f32 0.0, %v2487
        %2489 = vmatmul.f32.gmra.mxu0 %v2450
        %v2490 = vpop.f32.mrf.mxu0
        %v2491 = vadd.f32 0.0, %v2490
        %2492 = vmatmul.f32.gmra.mxu0 %v2453
        %v2493 = vpop.f32.mrf.mxu0
        %v2494 = vadd.f32 0.0, %v2493
        %2495 = vmatmul.f32.gmra.mxu0 %v2456
        %v2496 = vpop.f32.mrf.mxu0
        %v2497 = vadd.f32 0.0, %v2496
        %2498 = vdwg.mxu0
        %v2499 = vadd.f32 %v2423, %v2476
        %v2500 = vadd.f32 %v2424, %v2479
        %v2501 = vadd.f32 %v2425, %v2482
        %v2502 = vadd.f32 %v2426, %v2485
        %v2503 = vadd.f32 %v2427, %v2488
        %v2504 = vadd.f32 %v2428, %v2491
        %v2505 = vadd.f32 %v2429, %v2494
        %v2506 = vadd.f32 %v2430, %v2497
        %s2507 = scalar_lea.vmem %s6, 32
        %v2508 = vld [vmem:[%s2507] sm:$0xff]
        %v2509 = vld [vmem:[%s2507 + $0x8] sm:$0xff]
        %v2511 = vsel %vm2317, %v2283, 0
        %v2514 = vsel %vm2317, %v2286, 0
        %v2517 = vsel %vm2317, %v2289, 0
        %v2520 = vsel %vm2317, %v2292, 0
        %v2523 = vsel %vm2317, %v2295, 0
        %v2526 = vsel %vm2317, %v2298, 0
        %v2529 = vsel %vm2317, %v2301, 0
        %v2532 = vsel %vm2317, %v2304, 0
        %2534 = vmatpush.msra.mxu0 0.0
        %2535 = vmatpush.msra.mxu0 0.0
        %2536 = vmatpush.msra.mxu0 0.0
        %2537 = vmatpush.msra.mxu0 0.0
        %2538 = vmatpush.msra.mxu0 0.0
        %2539 = vmatpush.msra.mxu0 0.0
        %2540 = vmatpush.msra.mxu0 0.0
        %2541 = vmatpush.msra.mxu0 0.0
        %2542 = vmatpush.msra.mxu0 0.0
        %2543 = vmatpush.msra.mxu0 0.0
        %2544 = vmatpush.msra.mxu0 0.0
        %2545 = vmatpush.msra.mxu0 0.0
        %2546 = vmatpush.msra.mxu0 0.0
        %2547 = vmatpush.msra.mxu0 0.0
        %2548 = vmatpush.msra.mxu0 %v2509
        %2549 = vmatpush.msra.mxu0 %v2508
        %2550 = vmatmul.f32.gmra.mxu0 %v2511
        %v2551 = vpop.f32.mrf.mxu0
        %v2552 = vadd.f32 0.0, %v2551
        %2553 = vmatmul.f32.gmra.mxu0 %v2514
        %v2554 = vpop.f32.mrf.mxu0
        %v2555 = vadd.f32 0.0, %v2554
        %2556 = vmatmul.f32.gmra.mxu0 %v2517
        %v2557 = vpop.f32.mrf.mxu0
        %v2558 = vadd.f32 0.0, %v2557
        %2559 = vmatmul.f32.gmra.mxu0 %v2520
        %v2560 = vpop.f32.mrf.mxu0
        %v2561 = vadd.f32 0.0, %v2560
        %2562 = vmatmul.f32.gmra.mxu0 %v2523
        %v2563 = vpop.f32.mrf.mxu0
        %v2564 = vadd.f32 0.0, %v2563
        %2565 = vmatmul.f32.gmra.mxu0 %v2526
        %v2566 = vpop.f32.mrf.mxu0
        %v2567 = vadd.f32 0.0, %v2566
        %2568 = vmatmul.f32.gmra.mxu0 %v2529
        %v2569 = vpop.f32.mrf.mxu0
        %v2570 = vadd.f32 0.0, %v2569
        %2571 = vmatmul.f32.gmra.mxu0 %v2532
        %v2572 = vpop.f32.mrf.mxu0
        %v2573 = vadd.f32 0.0, %v2572
        %2574 = vdwg.mxu0
        %v2575 = vadd.f32 %v2499, %v2552
        %v2576 = vadd.f32 %v2500, %v2555
        %v2577 = vadd.f32 %v2501, %v2558
        %v2578 = vadd.f32 %v2502, %v2561
        %v2579 = vadd.f32 %v2503, %v2564
        %v2580 = vadd.f32 %v2504, %v2567
        %v2581 = vadd.f32 %v2505, %v2570
        %v2582 = vadd.f32 %v2506, %v2573
        %vm2583 = vcmp.gt.f32.partialorder %v2575, 0.0
        %vm2584 = vcmp.gt.f32.partialorder %v2576, 0.0
        %vm2585 = vcmp.gt.f32.partialorder %v2577, 0.0
        %vm2586 = vcmp.gt.f32.partialorder %v2578, 0.0
        %vm2587 = vcmp.gt.f32.partialorder %v2579, 0.0
        %vm2588 = vcmp.gt.f32.partialorder %v2580, 0.0
        %vm2589 = vcmp.gt.f32.partialorder %v2581, 0.0
        %vm2590 = vcmp.gt.f32.partialorder %v2582, 0.0
        %v2591 = vmul.f32 %v2575, 0.2
        %v2592 = vmul.f32 %v2576, 0.2
        %v2593 = vmul.f32 %v2577, 0.2
        %v2594 = vmul.f32 %v2578, 0.2
        %v2595 = vmul.f32 %v2579, 0.2
        %v2596 = vmul.f32 %v2580, 0.2
        %v2597 = vmul.f32 %v2581, 0.2
        %v2598 = vmul.f32 %v2582, 0.2
        %v2599 = vsel %vm2583, %v2575, %v2591
        %v2600 = vsel %vm2584, %v2576, %v2592
        %v2601 = vsel %vm2585, %v2577, %v2593
        %v2602 = vsel %vm2586, %v2578, %v2594
        %v2603 = vsel %vm2587, %v2579, %v2595
        %v2604 = vsel %vm2588, %v2580, %v2596
        %v2605 = vsel %vm2589, %v2581, %v2597
        %v2606 = vsel %vm2590, %v2582, %v2598
        %s2607 = scalar_lea.vmem %s2, 576
        %v2608 = vld [vmem:[%s2607] sm:$0xff]
        %v2609 = vld [vmem:[%s2607 + $0x8] sm:$0xff]
        %v2610 = vld [vmem:[%s2607 + $0x10] sm:$0xff]
        %v2611 = vld [vmem:[%s2607 + $0x18] sm:$0xff]
        %v2612 = vld [vmem:[%s2607 + $0x20] sm:$0xff]
        %v2613 = vld [vmem:[%s2607 + $0x28] sm:$0xff]
        %v2614 = vld [vmem:[%s2607 + $0x30] sm:$0xff]
        %v2615 = vld [vmem:[%s2607 + $0x38] sm:$0xff]
        %v2616 = vld [vmem:[%s2607 + $0x40] sm:$0xff]
        %v2617 = vld [vmem:[%s2607 + $0x48] sm:$0xff]
        %v2618 = vld [vmem:[%s2607 + $0x50] sm:$0xff]
        %v2619 = vld [vmem:[%s2607 + $0x58] sm:$0xff]
        %v2620 = vld [vmem:[%s2607 + $0x60] sm:$0xff]
        %v2621 = vld [vmem:[%s2607 + $0x68] sm:$0xff]
        %v2622 = vld [vmem:[%s2607 + $0x70] sm:$0xff]
        %v2623 = vld [vmem:[%s2607 + $0x78] sm:$0xff]
        %v2624 = vld [vmem:[%s2607 + $0x80] sm:$0xff]
        %v2625 = vld [vmem:[%s2607 + $0x88] sm:$0xff]
        %v2626 = vld [vmem:[%s2607 + $0x90] sm:$0xff]
        %v2627 = vld [vmem:[%s2607 + $0x98] sm:$0xff]
        %v2628 = vld [vmem:[%s2607 + $0xa0] sm:$0xff]
        %v2629 = vld [vmem:[%s2607 + $0xa8] sm:$0xff]
        %v2630 = vld [vmem:[%s2607 + $0xb0] sm:$0xff]
        %v2631 = vld [vmem:[%s2607 + $0xb8] sm:$0xff]
        %v2633 = vsel %vm1167, %v2608, 0
        %v2636 = vsel %vm1167, %v2609, 0
        %v2639 = vsel %vm1167, %v2610, 0
        %v2642 = vsel %vm1167, %v2611, 0
        %v2645 = vsel %vm1167, %v2612, 0
        %v2648 = vsel %vm1167, %v2613, 0
        %v2651 = vsel %vm1167, %v2614, 0
        %v2654 = vsel %vm1167, %v2615, 0
        %v2657 = vsel %vm1167, %v2616, 0
        %v2660 = vsel %vm1167, %v2617, 0
        %v2663 = vsel %vm1167, %v2618, 0
        %v2666 = vsel %vm1167, %v2619, 0
        %v2669 = vsel %vm1167, %v2620, 0
        %v2672 = vsel %vm1167, %v2621, 0
        %v2675 = vsel %vm1167, %v2622, 0
        %v2678 = vsel %vm1167, %v2623, 0
        %v2681 = vsel %vm1167, %v2624, 0
        %v2684 = vsel %vm1167, %v2625, 0
        %v2687 = vsel %vm1167, %v2626, 0
        %v2690 = vsel %vm1167, %v2627, 0
        %v2693 = vsel %vm1167, %v2628, 0
        %v2696 = vsel %vm1167, %v2629, 0
        %v2699 = vsel %vm1167, %v2630, 0
        %v2702 = vsel %vm1167, %v2631, 0
        %2704 = vmatpush.msra.mxu0 0.0
        %2705 = vmatpush.msra.mxu0 0.0
        %2706 = vmatpush.msra.mxu0 0.0
        %2707 = vmatpush.msra.mxu0 0.0
        %2708 = vmatpush.msra.mxu0 0.0
        %2709 = vmatpush.msra.mxu0 0.0
        %2710 = vmatpush.msra.mxu0 0.0
        %2711 = vmatpush.msra.mxu0 0.0
        %2712 = vmatpush.msra.mxu0 %v2606
        %2713 = vmatpush.msra.mxu0 %v2605
        %2714 = vmatpush.msra.mxu0 %v2604
        %2715 = vmatpush.msra.mxu0 %v2603
        %2716 = vmatpush.msra.mxu0 %v2602
        %2717 = vmatpush.msra.mxu0 %v2601
        %2718 = vmatpush.msra.mxu0 %v2600
        %2719 = vmatpush.msra.mxu0 %v2599
        %2720 = vmatmul.f32.gmra.mxu0 %v2633
        %v2721 = vpop.f32.mrf.mxu0
        %v2722 = vadd.f32 0.0, %v2721
        %2723 = vmatmul.f32.gmra.mxu0 %v2636
        %v2724 = vpop.f32.mrf.mxu0
        %v2725 = vadd.f32 0.0, %v2724
        %2726 = vmatmul.f32.gmra.mxu0 %v2639
        %v2727 = vpop.f32.mrf.mxu0
        %v2728 = vadd.f32 0.0, %v2727
        %2729 = vmatmul.f32.gmra.mxu0 %v2642
        %v2730 = vpop.f32.mrf.mxu0
        %v2731 = vadd.f32 0.0, %v2730
        %2732 = vmatmul.f32.gmra.mxu0 %v2645
        %v2733 = vpop.f32.mrf.mxu0
        %v2734 = vadd.f32 0.0, %v2733
        %2735 = vmatmul.f32.gmra.mxu0 %v2648
        %v2736 = vpop.f32.mrf.mxu0
        %v2737 = vadd.f32 0.0, %v2736
        %2738 = vmatmul.f32.gmra.mxu0 %v2651
        %v2739 = vpop.f32.mrf.mxu0
        %v2740 = vadd.f32 0.0, %v2739
        %2741 = vmatmul.f32.gmra.mxu0 %v2654
        %v2742 = vpop.f32.mrf.mxu0
        %v2743 = vadd.f32 0.0, %v2742
        %2744 = vmatmul.f32.gmra.mxu0 %v2657
        %v2745 = vpop.f32.mrf.mxu0
        %v2746 = vadd.f32 0.0, %v2745
        %2747 = vmatmul.f32.gmra.mxu0 %v2660
        %v2748 = vpop.f32.mrf.mxu0
        %v2749 = vadd.f32 0.0, %v2748
        %2750 = vmatmul.f32.gmra.mxu0 %v2663
        %v2751 = vpop.f32.mrf.mxu0
        %v2752 = vadd.f32 0.0, %v2751
        %2753 = vmatmul.f32.gmra.mxu0 %v2666
        %v2754 = vpop.f32.mrf.mxu0
        %v2755 = vadd.f32 0.0, %v2754
        %2756 = vmatmul.f32.gmra.mxu0 %v2669
        %v2757 = vpop.f32.mrf.mxu0
        %v2758 = vadd.f32 0.0, %v2757
        %2759 = vmatmul.f32.gmra.mxu0 %v2672
        %v2760 = vpop.f32.mrf.mxu0
        %v2761 = vadd.f32 0.0, %v2760
        %2762 = vmatmul.f32.gmra.mxu0 %v2675
        %v2763 = vpop.f32.mrf.mxu0
        %v2764 = vadd.f32 0.0, %v2763
        %2765 = vmatmul.f32.gmra.mxu0 %v2678
        %v2766 = vpop.f32.mrf.mxu0
        %v2767 = vadd.f32 0.0, %v2766
        %2768 = vmatmul.f32.gmra.mxu0 %v2681
        %v2769 = vpop.f32.mrf.mxu0
        %v2770 = vadd.f32 0.0, %v2769
        %2771 = vmatmul.f32.gmra.mxu0 %v2684
        %v2772 = vpop.f32.mrf.mxu0
        %v2773 = vadd.f32 0.0, %v2772
        %2774 = vmatmul.f32.gmra.mxu0 %v2687
        %v2775 = vpop.f32.mrf.mxu0
        %v2776 = vadd.f32 0.0, %v2775
        %2777 = vmatmul.f32.gmra.mxu0 %v2690
        %v2778 = vpop.f32.mrf.mxu0
        %v2779 = vadd.f32 0.0, %v2778
        %2780 = vmatmul.f32.gmra.mxu0 %v2693
        %v2781 = vpop.f32.mrf.mxu0
        %v2782 = vadd.f32 0.0, %v2781
        %2783 = vmatmul.f32.gmra.mxu0 %v2696
        %v2784 = vpop.f32.mrf.mxu0
        %v2785 = vadd.f32 0.0, %v2784
        %2786 = vmatmul.f32.gmra.mxu0 %v2699
        %v2787 = vpop.f32.mrf.mxu0
        %v2788 = vadd.f32 0.0, %v2787
        %2789 = vmatmul.f32.gmra.mxu0 %v2702
        %v2790 = vpop.f32.mrf.mxu0
        %v2791 = vadd.f32 0.0, %v2790
        %2792 = vdwg.mxu0
        %s2793 = scalar_lea.vmem %s3, 192
        %v2794 = vld [vmem:[%s2793] sm:$0xff]
        %v2795 = vld [vmem:[%s2793 + $0x8] sm:$0xff]
        %v2796 = vld [vmem:[%s2793 + $0x10] sm:$0xff]
        %v2797 = vld [vmem:[%s2793 + $0x18] sm:$0xff]
        %v2798 = vld [vmem:[%s2793 + $0x20] sm:$0xff]
        %v2799 = vld [vmem:[%s2793 + $0x28] sm:$0xff]
        %v2800 = vld [vmem:[%s2793 + $0x30] sm:$0xff]
        %v2801 = vld [vmem:[%s2793 + $0x38] sm:$0xff]
        %v2802 = vld [vmem:[%s7] sm:$0xff]
        %v2803 = vld [vmem:[%s7 + $0x8] sm:$0xff]
        %v2804 = vld [vmem:[%s7 + $0x10] sm:$0xff]
        %v2805 = vld [vmem:[%s7 + $0x18] sm:$0xff]
        %vm2806 = vcmask 261120
        %v2808 = vsel %vm2806, %v2722, 0
        %v2811 = vsel %vm2806, %v2725, 0
        %v2814 = vsel %vm2806, %v2728, 0
        %v2817 = vsel %vm2806, %v2731, 0
        %v2820 = vsel %vm2806, %v2734, 0
        %v2823 = vsel %vm2806, %v2737, 0
        %v2826 = vsel %vm2806, %v2740, 0
        %v2829 = vsel %vm2806, %v2743, 0
        %2831 = vmatpush.msra.mxu0 0.0
        %2832 = vmatpush.msra.mxu0 0.0
        %2833 = vmatpush.msra.mxu0 0.0
        %2834 = vmatpush.msra.mxu0 0.0
        %2835 = vmatpush.msra.mxu0 0.0
        %2836 = vmatpush.msra.mxu0 0.0
        %2837 = vmatpush.msra.mxu0 0.0
        %2838 = vmatpush.msra.mxu0 0.0
        %2839 = vmatpush.msra.mxu0 0.0
        %2840 = vmatpush.msra.mxu0 0.0
        %2841 = vmatpush.msra.mxu0 0.0
        %2842 = vmatpush.msra.mxu0 0.0
        %2843 = vmatpush.msra.mxu0 %v2805
        %2844 = vmatpush.msra.mxu0 %v2804
        %2845 = vmatpush.msra.mxu0 %v2803
        %2846 = vmatpush.msra.mxu0 %v2802
        %2847 = vmatmul.f32.gmra.mxu0 %v2808
        %v2848 = vpop.f32.mrf.mxu0
        %v2849 = vadd.f32 0.0, %v2848
        %2850 = vmatmul.f32.gmra.mxu0 %v2811
        %v2851 = vpop.f32.mrf.mxu0
        %v2852 = vadd.f32 0.0, %v2851
        %2853 = vmatmul.f32.gmra.mxu0 %v2814
        %v2854 = vpop.f32.mrf.mxu0
        %v2855 = vadd.f32 0.0, %v2854
        %2856 = vmatmul.f32.gmra.mxu0 %v2817
        %v2857 = vpop.f32.mrf.mxu0
        %v2858 = vadd.f32 0.0, %v2857
        %2859 = vmatmul.f32.gmra.mxu0 %v2820
        %v2860 = vpop.f32.mrf.mxu0
        %v2861 = vadd.f32 0.0, %v2860
        %2862 = vmatmul.f32.gmra.mxu0 %v2823
        %v2863 = vpop.f32.mrf.mxu0
        %v2864 = vadd.f32 0.0, %v2863
        %2865 = vmatmul.f32.gmra.mxu0 %v2826
        %v2866 = vpop.f32.mrf.mxu0
        %v2867 = vadd.f32 0.0, %v2866
        %2868 = vmatmul.f32.gmra.mxu0 %v2829
        %v2869 = vpop.f32.mrf.mxu0
        %v2870 = vadd.f32 0.0, %v2869
        %2871 = vdwg.mxu0
        %2873 = vset.pattern.permute.xlu0 0
        %2874 = vperm.xlu0 %2873, %v2794
        %v2875 = vpop.permute.xlu0 %2874
        %2878 = vset.pattern.permute.xlu0 0
        %2879 = vperm.xlu0 %2878, %v2795
        %v2880 = vpop.permute.xlu0 %2879
        %2883 = vset.pattern.permute.xlu0 0
        %2884 = vperm.xlu0 %2883, %v2796
        %v2885 = vpop.permute.xlu0 %2884
        %2888 = vset.pattern.permute.xlu0 0
        %2889 = vperm.xlu0 %2888, %v2797
        %v2890 = vpop.permute.xlu0 %2889
        %2893 = vset.pattern.permute.xlu0 0
        %2894 = vperm.xlu0 %2893, %v2798
        %v2895 = vpop.permute.xlu0 %2894
        %2898 = vset.pattern.permute.xlu0 0
        %2899 = vperm.xlu0 %2898, %v2799
        %v2900 = vpop.permute.xlu0 %2899
        %2903 = vset.pattern.permute.xlu0 0
        %2904 = vperm.xlu0 %2903, %v2800
        %v2905 = vpop.permute.xlu0 %2904
        %2908 = vset.pattern.permute.xlu0 0
        %2909 = vperm.xlu0 %2908, %v2801
        %v2910 = vpop.permute.xlu0 %2909
        %v2912 = vadd.f32 %v2875, %v2849
        %v2913 = vadd.f32 %v2880, %v2852
        %v2914 = vadd.f32 %v2885, %v2855
        %v2915 = vadd.f32 %v2890, %v2858
        %v2916 = vadd.f32 %v2895, %v2861
        %v2917 = vadd.f32 %v2900, %v2864
        %v2918 = vadd.f32 %v2905, %v2867
        %v2919 = vadd.f32 %v2910, %v2870
        %s2920 = scalar_lea.vmem %s7, 32
        %v2921 = vld [vmem:[%s2920] sm:$0xff]
        %v2922 = vld [vmem:[%s2920 + $0x8] sm:$0xff]
        %v2923 = vld [vmem:[%s2920 + $0x10] sm:$0xff]
        %v2924 = vld [vmem:[%s2920 + $0x18] sm:$0xff]
        %v2926 = vsel %vm2806, %v2746, 0
        %v2929 = vsel %vm2806, %v2749, 0
        %v2932 = vsel %vm2806, %v2752, 0
        %v2935 = vsel %vm2806, %v2755, 0
        %v2938 = vsel %vm2806, %v2758, 0
        %v2941 = vsel %vm2806, %v2761, 0
        %v2944 = vsel %vm2806, %v2764, 0
        %v2947 = vsel %vm2806, %v2767, 0
        %2949 = vmatpush.msra.mxu0 0.0
        %2950 = vmatpush.msra.mxu0 0.0
        %2951 = vmatpush.msra.mxu0 0.0
        %2952 = vmatpush.msra.mxu0 0.0
        %2953 = vmatpush.msra.mxu0 0.0
        %2954 = vmatpush.msra.mxu0 0.0
        %2955 = vmatpush.msra.mxu0 0.0
        %2956 = vmatpush.msra.mxu0 0.0
        %2957 = vmatpush.msra.mxu0 0.0
        %2958 = vmatpush.msra.mxu0 0.0
        %2959 = vmatpush.msra.mxu0 0.0
        %2960 = vmatpush.msra.mxu0 0.0
        %2961 = vmatpush.msra.mxu0 %v2924
        %2962 = vmatpush.msra.mxu0 %v2923
        %2963 = vmatpush.msra.mxu0 %v2922
        %2964 = vmatpush.msra.mxu0 %v2921
        %2965 = vmatmul.f32.gmra.mxu0 %v2926
        %v2966 = vpop.f32.mrf.mxu0
        %v2967 = vadd.f32 0.0, %v2966
        %2968 = vmatmul.f32.gmra.mxu0 %v2929
        %v2969 = vpop.f32.mrf.mxu0
        %v2970 = vadd.f32 0.0, %v2969
        %2971 = vmatmul.f32.gmra.mxu0 %v2932
        %v2972 = vpop.f32.mrf.mxu0
        %v2973 = vadd.f32 0.0, %v2972
        %2974 = vmatmul.f32.gmra.mxu0 %v2935
        %v2975 = vpop.f32.mrf.mxu0
        %v2976 = vadd.f32 0.0, %v2975
        %2977 = vmatmul.f32.gmra.mxu0 %v2938
        %v2978 = vpop.f32.mrf.mxu0
        %v2979 = vadd.f32 0.0, %v2978
        %2980 = vmatmul.f32.gmra.mxu0 %v2941
        %v2981 = vpop.f32.mrf.mxu0
        %v2982 = vadd.f32 0.0, %v2981
        %2983 = vmatmul.f32.gmra.mxu0 %v2944
        %v2984 = vpop.f32.mrf.mxu0
        %v2985 = vadd.f32 0.0, %v2984
        %2986 = vmatmul.f32.gmra.mxu0 %v2947
        %v2987 = vpop.f32.mrf.mxu0
        %v2988 = vadd.f32 0.0, %v2987
        %2989 = vdwg.mxu0
        %v2990 = vadd.f32 %v2912, %v2967
        %v2991 = vadd.f32 %v2913, %v2970
        %v2992 = vadd.f32 %v2914, %v2973
        %v2993 = vadd.f32 %v2915, %v2976
        %v2994 = vadd.f32 %v2916, %v2979
        %v2995 = vadd.f32 %v2917, %v2982
        %v2996 = vadd.f32 %v2918, %v2985
        %v2997 = vadd.f32 %v2919, %v2988
        %s2998 = scalar_lea.vmem %s7, 64
        %v2999 = vld [vmem:[%s2998] sm:$0xff]
        %v3000 = vld [vmem:[%s2998 + $0x8] sm:$0xff]
        %v3001 = vld [vmem:[%s2998 + $0x10] sm:$0xff]
        %v3002 = vld [vmem:[%s2998 + $0x18] sm:$0xff]
        %v3004 = vsel %vm2806, %v2770, 0
        %v3007 = vsel %vm2806, %v2773, 0
        %v3010 = vsel %vm2806, %v2776, 0
        %v3013 = vsel %vm2806, %v2779, 0
        %v3016 = vsel %vm2806, %v2782, 0
        %v3019 = vsel %vm2806, %v2785, 0
        %v3022 = vsel %vm2806, %v2788, 0
        %v3025 = vsel %vm2806, %v2791, 0
        %3027 = vmatpush.msra.mxu0 0.0
        %3028 = vmatpush.msra.mxu0 0.0
        %3029 = vmatpush.msra.mxu0 0.0
        %3030 = vmatpush.msra.mxu0 0.0
        %3031 = vmatpush.msra.mxu0 0.0
        %3032 = vmatpush.msra.mxu0 0.0
        %3033 = vmatpush.msra.mxu0 0.0
        %3034 = vmatpush.msra.mxu0 0.0
        %3035 = vmatpush.msra.mxu0 0.0
        %3036 = vmatpush.msra.mxu0 0.0
        %3037 = vmatpush.msra.mxu0 0.0
        %3038 = vmatpush.msra.mxu0 0.0
        %3039 = vmatpush.msra.mxu0 %v3002
        %3040 = vmatpush.msra.mxu0 %v3001
        %3041 = vmatpush.msra.mxu0 %v3000
        %3042 = vmatpush.msra.mxu0 %v2999
        %3043 = vmatmul.f32.gmra.mxu0 %v3004
        %v3044 = vpop.f32.mrf.mxu0
        %v3045 = vadd.f32 0.0, %v3044
        %3046 = vmatmul.f32.gmra.mxu0 %v3007
        %v3047 = vpop.f32.mrf.mxu0
        %v3048 = vadd.f32 0.0, %v3047
        %3049 = vmatmul.f32.gmra.mxu0 %v3010
        %v3050 = vpop.f32.mrf.mxu0
        %v3051 = vadd.f32 0.0, %v3050
        %3052 = vmatmul.f32.gmra.mxu0 %v3013
        %v3053 = vpop.f32.mrf.mxu0
        %v3054 = vadd.f32 0.0, %v3053
        %3055 = vmatmul.f32.gmra.mxu0 %v3016
        %v3056 = vpop.f32.mrf.mxu0
        %v3057 = vadd.f32 0.0, %v3056
        %3058 = vmatmul.f32.gmra.mxu0 %v3019
        %v3059 = vpop.f32.mrf.mxu0
        %v3060 = vadd.f32 0.0, %v3059
        %3061 = vmatmul.f32.gmra.mxu0 %v3022
        %v3062 = vpop.f32.mrf.mxu0
        %v3063 = vadd.f32 0.0, %v3062
        %3064 = vmatmul.f32.gmra.mxu0 %v3025
        %v3065 = vpop.f32.mrf.mxu0
        %v3066 = vadd.f32 0.0, %v3065
        %3067 = vdwg.mxu0
        %v3068 = vadd.f32 %v2990, %v3045
        %v3069 = vadd.f32 %v2991, %v3048
        %v3070 = vadd.f32 %v2992, %v3051
        %v3071 = vadd.f32 %v2993, %v3054
        %v3072 = vadd.f32 %v2994, %v3057
        %v3073 = vadd.f32 %v2995, %v3060
        %v3074 = vadd.f32 %v2996, %v3063
        %v3075 = vadd.f32 %v2997, %v3066
        %vm3076 = vcmp.gt.f32.partialorder %v3068, 0.0
        %vm3077 = vcmp.gt.f32.partialorder %v3069, 0.0
        %vm3078 = vcmp.gt.f32.partialorder %v3070, 0.0
        %vm3079 = vcmp.gt.f32.partialorder %v3071, 0.0
        %vm3080 = vcmp.gt.f32.partialorder %v3072, 0.0
        %vm3081 = vcmp.gt.f32.partialorder %v3073, 0.0
        %vm3082 = vcmp.gt.f32.partialorder %v3074, 0.0
        %vm3083 = vcmp.gt.f32.partialorder %v3075, 0.0
        %v3084 = vmul.f32 %v3068, 0.2
        %v3085 = vmul.f32 %v3069, 0.2
        %v3086 = vmul.f32 %v3070, 0.2
        %v3087 = vmul.f32 %v3071, 0.2
        %v3088 = vmul.f32 %v3072, 0.2
        %v3089 = vmul.f32 %v3073, 0.2
        %v3090 = vmul.f32 %v3074, 0.2
        %v3091 = vmul.f32 %v3075, 0.2
        %v3092 = vsel %vm3076, %v3068, %v3084
        %v3093 = vsel %vm3077, %v3069, %v3085
        %v3094 = vsel %vm3078, %v3070, %v3086
        %v3095 = vsel %vm3079, %v3071, %v3087
        %v3096 = vsel %vm3080, %v3072, %v3088
        %v3097 = vsel %vm3081, %v3073, %v3089
        %v3098 = vsel %vm3082, %v3074, %v3090
        %v3099 = vsel %vm3083, %v3075, %v3091
        %s3100 = scalar_lea.vmem %s2, 768
        %v3101 = vld [vmem:[%s3100] sm:$0xff]
        %v3102 = vld [vmem:[%s3100 + $0x8] sm:$0xff]
        %v3103 = vld [vmem:[%s3100 + $0x10] sm:$0xff]
        %v3104 = vld [vmem:[%s3100 + $0x18] sm:$0xff]
        %v3105 = vld [vmem:[%s3100 + $0x20] sm:$0xff]
        %v3106 = vld [vmem:[%s3100 + $0x28] sm:$0xff]
        %v3107 = vld [vmem:[%s3100 + $0x30] sm:$0xff]
        %v3108 = vld [vmem:[%s3100 + $0x38] sm:$0xff]
        %v3109 = vld [vmem:[%s3100 + $0x40] sm:$0xff]
        %v3110 = vld [vmem:[%s3100 + $0x48] sm:$0xff]
        %v3111 = vld [vmem:[%s3100 + $0x50] sm:$0xff]
        %v3112 = vld [vmem:[%s3100 + $0x58] sm:$0xff]
        %v3113 = vld [vmem:[%s3100 + $0x60] sm:$0xff]
        %v3114 = vld [vmem:[%s3100 + $0x68] sm:$0xff]
        %v3115 = vld [vmem:[%s3100 + $0x70] sm:$0xff]
        %v3116 = vld [vmem:[%s3100 + $0x78] sm:$0xff]
        %v3117 = vld [vmem:[%s3100 + $0x80] sm:$0xff]
        %v3118 = vld [vmem:[%s3100 + $0x88] sm:$0xff]
        %v3119 = vld [vmem:[%s3100 + $0x90] sm:$0xff]
        %v3120 = vld [vmem:[%s3100 + $0x98] sm:$0xff]
        %v3121 = vld [vmem:[%s3100 + $0xa0] sm:$0xff]
        %v3122 = vld [vmem:[%s3100 + $0xa8] sm:$0xff]
        %v3123 = vld [vmem:[%s3100 + $0xb0] sm:$0xff]
        %v3124 = vld [vmem:[%s3100 + $0xb8] sm:$0xff]
        %v3126 = vsel %vm1167, %v3101, 0
        %v3129 = vsel %vm1167, %v3102, 0
        %v3132 = vsel %vm1167, %v3103, 0
        %v3135 = vsel %vm1167, %v3104, 0
        %v3138 = vsel %vm1167, %v3105, 0
        %v3141 = vsel %vm1167, %v3106, 0
        %v3144 = vsel %vm1167, %v3107, 0
        %v3147 = vsel %vm1167, %v3108, 0
        %v3150 = vsel %vm1167, %v3109, 0
        %v3153 = vsel %vm1167, %v3110, 0
        %v3156 = vsel %vm1167, %v3111, 0
        %v3159 = vsel %vm1167, %v3112, 0
        %v3162 = vsel %vm1167, %v3113, 0
        %v3165 = vsel %vm1167, %v3114, 0
        %v3168 = vsel %vm1167, %v3115, 0
        %v3171 = vsel %vm1167, %v3116, 0
        %v3174 = vsel %vm1167, %v3117, 0
        %v3177 = vsel %vm1167, %v3118, 0
        %v3180 = vsel %vm1167, %v3119, 0
        %v3183 = vsel %vm1167, %v3120, 0
        %v3186 = vsel %vm1167, %v3121, 0
        %v3189 = vsel %vm1167, %v3122, 0
        %v3192 = vsel %vm1167, %v3123, 0
        %v3195 = vsel %vm1167, %v3124, 0
        %3197 = vmatpush.msra.mxu0 0.0
        %3198 = vmatpush.msra.mxu0 0.0
        %3199 = vmatpush.msra.mxu0 0.0
        %3200 = vmatpush.msra.mxu0 0.0
        %3201 = vmatpush.msra.mxu0 0.0
        %3202 = vmatpush.msra.mxu0 0.0
        %3203 = vmatpush.msra.mxu0 0.0
        %3204 = vmatpush.msra.mxu0 0.0
        %3205 = vmatpush.msra.mxu0 %v3099
        %3206 = vmatpush.msra.mxu0 %v3098
        %3207 = vmatpush.msra.mxu0 %v3097
        %3208 = vmatpush.msra.mxu0 %v3096
        %3209 = vmatpush.msra.mxu0 %v3095
        %3210 = vmatpush.msra.mxu0 %v3094
        %3211 = vmatpush.msra.mxu0 %v3093
        %3212 = vmatpush.msra.mxu0 %v3092
        %3213 = vmatmul.f32.gmra.mxu0 %v3126
        %v3214 = vpop.f32.mrf.mxu0
        %v3215 = vadd.f32 0.0, %v3214
        %3216 = vmatmul.f32.gmra.mxu0 %v3129
        %v3217 = vpop.f32.mrf.mxu0
        %v3218 = vadd.f32 0.0, %v3217
        %3219 = vmatmul.f32.gmra.mxu0 %v3132
        %v3220 = vpop.f32.mrf.mxu0
        %v3221 = vadd.f32 0.0, %v3220
        %3222 = vmatmul.f32.gmra.mxu0 %v3135
        %v3223 = vpop.f32.mrf.mxu0
        %v3224 = vadd.f32 0.0, %v3223
        %3225 = vmatmul.f32.gmra.mxu0 %v3138
        %v3226 = vpop.f32.mrf.mxu0
        %v3227 = vadd.f32 0.0, %v3226
        %3228 = vmatmul.f32.gmra.mxu0 %v3141
        %v3229 = vpop.f32.mrf.mxu0
        %v3230 = vadd.f32 0.0, %v3229
        %3231 = vmatmul.f32.gmra.mxu0 %v3144
        %v3232 = vpop.f32.mrf.mxu0
        %v3233 = vadd.f32 0.0, %v3232
        %3234 = vmatmul.f32.gmra.mxu0 %v3147
        %v3235 = vpop.f32.mrf.mxu0
        %v3236 = vadd.f32 0.0, %v3235
        %3237 = vmatmul.f32.gmra.mxu0 %v3150
        %v3238 = vpop.f32.mrf.mxu0
        %v3239 = vadd.f32 0.0, %v3238
        %3240 = vmatmul.f32.gmra.mxu0 %v3153
        %v3241 = vpop.f32.mrf.mxu0
        %v3242 = vadd.f32 0.0, %v3241
        %3243 = vmatmul.f32.gmra.mxu0 %v3156
        %v3244 = vpop.f32.mrf.mxu0
        %v3245 = vadd.f32 0.0, %v3244
        %3246 = vmatmul.f32.gmra.mxu0 %v3159
        %v3247 = vpop.f32.mrf.mxu0
        %v3248 = vadd.f32 0.0, %v3247
        %3249 = vmatmul.f32.gmra.mxu0 %v3162
        %v3250 = vpop.f32.mrf.mxu0
        %v3251 = vadd.f32 0.0, %v3250
        %3252 = vmatmul.f32.gmra.mxu0 %v3165
        %v3253 = vpop.f32.mrf.mxu0
        %v3254 = vadd.f32 0.0, %v3253
        %3255 = vmatmul.f32.gmra.mxu0 %v3168
        %v3256 = vpop.f32.mrf.mxu0
        %v3257 = vadd.f32 0.0, %v3256
        %3258 = vmatmul.f32.gmra.mxu0 %v3171
        %v3259 = vpop.f32.mrf.mxu0
        %v3260 = vadd.f32 0.0, %v3259
        %3261 = vmatmul.f32.gmra.mxu0 %v3174
        %v3262 = vpop.f32.mrf.mxu0
        %v3263 = vadd.f32 0.0, %v3262
        %3264 = vmatmul.f32.gmra.mxu0 %v3177
        %v3265 = vpop.f32.mrf.mxu0
        %v3266 = vadd.f32 0.0, %v3265
        %3267 = vmatmul.f32.gmra.mxu0 %v3180
        %v3268 = vpop.f32.mrf.mxu0
        %v3269 = vadd.f32 0.0, %v3268
        %3270 = vmatmul.f32.gmra.mxu0 %v3183
        %v3271 = vpop.f32.mrf.mxu0
        %v3272 = vadd.f32 0.0, %v3271
        %3273 = vmatmul.f32.gmra.mxu0 %v3186
        %v3274 = vpop.f32.mrf.mxu0
        %v3275 = vadd.f32 0.0, %v3274
        %3276 = vmatmul.f32.gmra.mxu0 %v3189
        %v3277 = vpop.f32.mrf.mxu0
        %v3278 = vadd.f32 0.0, %v3277
        %3279 = vmatmul.f32.gmra.mxu0 %v3192
        %v3280 = vpop.f32.mrf.mxu0
        %v3281 = vadd.f32 0.0, %v3280
        %3282 = vmatmul.f32.gmra.mxu0 %v3195
        %v3283 = vpop.f32.mrf.mxu0
        %v3284 = vadd.f32 0.0, %v3283
        %3285 = vdwg.mxu0
        %s3286 = scalar_lea.vmem %s3, 256
        %v3287 = vld [vmem:[%s3286] sm:$0xff]
        %v3288 = vld [vmem:[%s3286 + $0x8] sm:$0xff]
        %v3289 = vld [vmem:[%s3286 + $0x10] sm:$0xff]
        %v3290 = vld [vmem:[%s3286 + $0x18] sm:$0xff]
        %v3291 = vld [vmem:[%s3286 + $0x20] sm:$0xff]
        %v3292 = vld [vmem:[%s3286 + $0x28] sm:$0xff]
        %v3293 = vld [vmem:[%s3286 + $0x30] sm:$0xff]
        %v3294 = vld [vmem:[%s3286 + $0x38] sm:$0xff]
        %v3295 = vld [vmem:[%s8] sm:$0xff]
        %v3296 = vld [vmem:[%s8 + $0x8] sm:$0xff]
        %v3297 = vld [vmem:[%s8 + $0x10] sm:$0xff]
        %v3298 = vld [vmem:[%s8 + $0x18] sm:$0xff]
        %v3299 = vld [vmem:[%s8 + $0x20] sm:$0xff]
        %v3300 = vld [vmem:[%s8 + $0x28] sm:$0xff]
        %v3301 = vld [vmem:[%s8 + $0x30] sm:$0xff]
        %v3302 = vld [vmem:[%s8 + $0x38] sm:$0xff]
        %v3304 = vsel %vm1167, %v3215, 0
        %v3307 = vsel %vm1167, %v3218, 0
        %v3310 = vsel %vm1167, %v3221, 0
        %v3313 = vsel %vm1167, %v3224, 0
        %v3316 = vsel %vm1167, %v3227, 0
        %v3319 = vsel %vm1167, %v3230, 0
        %v3322 = vsel %vm1167, %v3233, 0
        %v3325 = vsel %vm1167, %v3236, 0
        %3327 = vmatpush.msra.mxu0 0.0
        %3328 = vmatpush.msra.mxu0 0.0
        %3329 = vmatpush.msra.mxu0 0.0
        %3330 = vmatpush.msra.mxu0 0.0
        %3331 = vmatpush.msra.mxu0 0.0
        %3332 = vmatpush.msra.mxu0 0.0
        %3333 = vmatpush.msra.mxu0 0.0
        %3334 = vmatpush.msra.mxu0 0.0
        %3335 = vmatpush.msra.mxu0 %v3302
        %3336 = vmatpush.msra.mxu0 %v3301
        %3337 = vmatpush.msra.mxu0 %v3300
        %3338 = vmatpush.msra.mxu0 %v3299
        %3339 = vmatpush.msra.mxu0 %v3298
        %3340 = vmatpush.msra.mxu0 %v3297
        %3341 = vmatpush.msra.mxu0 %v3296
        %3342 = vmatpush.msra.mxu0 %v3295
        %3343 = vmatmul.f32.gmra.mxu0 %v3304
        %v3344 = vpop.f32.mrf.mxu0
        %v3345 = vadd.f32 0.0, %v3344
        %3346 = vmatmul.f32.gmra.mxu0 %v3307
        %v3347 = vpop.f32.mrf.mxu0
        %v3348 = vadd.f32 0.0, %v3347
        %3349 = vmatmul.f32.gmra.mxu0 %v3310
        %v3350 = vpop.f32.mrf.mxu0
        %v3351 = vadd.f32 0.0, %v3350
        %3352 = vmatmul.f32.gmra.mxu0 %v3313
        %v3353 = vpop.f32.mrf.mxu0
        %v3354 = vadd.f32 0.0, %v3353
        %3355 = vmatmul.f32.gmra.mxu0 %v3316
        %v3356 = vpop.f32.mrf.mxu0
        %v3357 = vadd.f32 0.0, %v3356
        %3358 = vmatmul.f32.gmra.mxu0 %v3319
        %v3359 = vpop.f32.mrf.mxu0
        %v3360 = vadd.f32 0.0, %v3359
        %3361 = vmatmul.f32.gmra.mxu0 %v3322
        %v3362 = vpop.f32.mrf.mxu0
        %v3363 = vadd.f32 0.0, %v3362
        %3364 = vmatmul.f32.gmra.mxu0 %v3325
        %v3365 = vpop.f32.mrf.mxu0
        %v3366 = vadd.f32 0.0, %v3365
        %3367 = vdwg.mxu0
        %3369 = vset.pattern.permute.xlu0 0
        %3370 = vperm.xlu0 %3369, %v3287
        %v3371 = vpop.permute.xlu0 %3370
        %3374 = vset.pattern.permute.xlu0 0
        %3375 = vperm.xlu0 %3374, %v3288
        %v3376 = vpop.permute.xlu0 %3375
        %3379 = vset.pattern.permute.xlu0 0
        %3380 = vperm.xlu0 %3379, %v3289
        %v3381 = vpop.permute.xlu0 %3380
        %3384 = vset.pattern.permute.xlu0 0
        %3385 = vperm.xlu0 %3384, %v3290
        %v3386 = vpop.permute.xlu0 %3385
        %3389 = vset.pattern.permute.xlu0 0
        %3390 = vperm.xlu0 %3389, %v3291
        %v3391 = vpop.permute.xlu0 %3390
        %3394 = vset.pattern.permute.xlu0 0
        %3395 = vperm.xlu0 %3394, %v3292
        %v3396 = vpop.permute.xlu0 %3395
        %3399 = vset.pattern.permute.xlu0 0
        %3400 = vperm.xlu0 %3399, %v3293
        %v3401 = vpop.permute.xlu0 %3400
        %3404 = vset.pattern.permute.xlu0 0
        %3405 = vperm.xlu0 %3404, %v3294
        %v3406 = vpop.permute.xlu0 %3405
        %v3408 = vadd.f32 %v3371, %v3345
        %v3409 = vadd.f32 %v3376, %v3348
        %v3410 = vadd.f32 %v3381, %v3351
        %v3411 = vadd.f32 %v3386, %v3354
        %v3412 = vadd.f32 %v3391, %v3357
        %v3413 = vadd.f32 %v3396, %v3360
        %v3414 = vadd.f32 %v3401, %v3363
        %v3415 = vadd.f32 %v3406, %v3366
        %s3416 = scalar_lea.vmem %s8, 64
        %v3417 = vld [vmem:[%s3416] sm:$0xff]
        %v3418 = vld [vmem:[%s3416 + $0x8] sm:$0xff]
        %v3419 = vld [vmem:[%s3416 + $0x10] sm:$0xff]
        %v3420 = vld [vmem:[%s3416 + $0x18] sm:$0xff]
        %v3421 = vld [vmem:[%s3416 + $0x20] sm:$0xff]
        %v3422 = vld [vmem:[%s3416 + $0x28] sm:$0xff]
        %v3423 = vld [vmem:[%s3416 + $0x30] sm:$0xff]
        %v3424 = vld [vmem:[%s3416 + $0x38] sm:$0xff]
        %v3426 = vsel %vm1167, %v3239, 0
        %v3429 = vsel %vm1167, %v3242, 0
        %v3432 = vsel %vm1167, %v3245, 0
        %v3435 = vsel %vm1167, %v3248, 0
        %v3438 = vsel %vm1167, %v3251, 0
        %v3441 = vsel %vm1167, %v3254, 0
        %v3444 = vsel %vm1167, %v3257, 0
        %v3447 = vsel %vm1167, %v3260, 0
        %3449 = vmatpush.msra.mxu0 0.0
        %3450 = vmatpush.msra.mxu0 0.0
        %3451 = vmatpush.msra.mxu0 0.0
        %3452 = vmatpush.msra.mxu0 0.0
        %3453 = vmatpush.msra.mxu0 0.0
        %3454 = vmatpush.msra.mxu0 0.0
        %3455 = vmatpush.msra.mxu0 0.0
        %3456 = vmatpush.msra.mxu0 0.0
        %3457 = vmatpush.msra.mxu0 %v3424
        %3458 = vmatpush.msra.mxu0 %v3423
        %3459 = vmatpush.msra.mxu0 %v3422
        %3460 = vmatpush.msra.mxu0 %v3421
        %3461 = vmatpush.msra.mxu0 %v3420
        %3462 = vmatpush.msra.mxu0 %v3419
        %3463 = vmatpush.msra.mxu0 %v3418
        %3464 = vmatpush.msra.mxu0 %v3417
        %3465 = vmatmul.f32.gmra.mxu0 %v3426
        %v3466 = vpop.f32.mrf.mxu0
        %v3467 = vadd.f32 0.0, %v3466
        %3468 = vmatmul.f32.gmra.mxu0 %v3429
        %v3469 = vpop.f32.mrf.mxu0
        %v3470 = vadd.f32 0.0, %v3469
        %3471 = vmatmul.f32.gmra.mxu0 %v3432
        %v3472 = vpop.f32.mrf.mxu0
        %v3473 = vadd.f32 0.0, %v3472
        %3474 = vmatmul.f32.gmra.mxu0 %v3435
        %v3475 = vpop.f32.mrf.mxu0
        %v3476 = vadd.f32 0.0, %v3475
        %3477 = vmatmul.f32.gmra.mxu0 %v3438
        %v3478 = vpop.f32.mrf.mxu0
        %v3479 = vadd.f32 0.0, %v3478
        %3480 = vmatmul.f32.gmra.mxu0 %v3441
        %v3481 = vpop.f32.mrf.mxu0
        %v3482 = vadd.f32 0.0, %v3481
        %3483 = vmatmul.f32.gmra.mxu0 %v3444
        %v3484 = vpop.f32.mrf.mxu0
        %v3485 = vadd.f32 0.0, %v3484
        %3486 = vmatmul.f32.gmra.mxu0 %v3447
        %v3487 = vpop.f32.mrf.mxu0
        %v3488 = vadd.f32 0.0, %v3487
        %3489 = vdwg.mxu0
        %v3490 = vadd.f32 %v3408, %v3467
        %v3491 = vadd.f32 %v3409, %v3470
        %v3492 = vadd.f32 %v3410, %v3473
        %v3493 = vadd.f32 %v3411, %v3476
        %v3494 = vadd.f32 %v3412, %v3479
        %v3495 = vadd.f32 %v3413, %v3482
        %v3496 = vadd.f32 %v3414, %v3485
        %v3497 = vadd.f32 %v3415, %v3488
        %s3498 = scalar_lea.vmem %s8, 128
        %v3499 = vld [vmem:[%s3498] sm:$0xff]
        %v3500 = vld [vmem:[%s3498 + $0x8] sm:$0xff]
        %v3501 = vld [vmem:[%s3498 + $0x10] sm:$0xff]
        %v3502 = vld [vmem:[%s3498 + $0x18] sm:$0xff]
        %v3503 = vld [vmem:[%s3498 + $0x20] sm:$0xff]
        %v3504 = vld [vmem:[%s3498 + $0x28] sm:$0xff]
        %v3505 = vld [vmem:[%s3498 + $0x30] sm:$0xff]
        %v3506 = vld [vmem:[%s3498 + $0x38] sm:$0xff]
        %v3508 = vsel %vm1167, %v3263, 0
        %v3511 = vsel %vm1167, %v3266, 0
        %v3514 = vsel %vm1167, %v3269, 0
        %v3517 = vsel %vm1167, %v3272, 0
        %v3520 = vsel %vm1167, %v3275, 0
        %v3523 = vsel %vm1167, %v3278, 0
        %v3526 = vsel %vm1167, %v3281, 0
        %v3529 = vsel %vm1167, %v3284, 0
        %3531 = vmatpush.msra.mxu0 0.0
        %3532 = vmatpush.msra.mxu0 0.0
        %3533 = vmatpush.msra.mxu0 0.0
        %3534 = vmatpush.msra.mxu0 0.0
        %3535 = vmatpush.msra.mxu0 0.0
        %3536 = vmatpush.msra.mxu0 0.0
        %3537 = vmatpush.msra.mxu0 0.0
        %3538 = vmatpush.msra.mxu0 0.0
        %3539 = vmatpush.msra.mxu0 %v3506
        %3540 = vmatpush.msra.mxu0 %v3505
        %3541 = vmatpush.msra.mxu0 %v3504
        %3542 = vmatpush.msra.mxu0 %v3503
        %3543 = vmatpush.msra.mxu0 %v3502
        %3544 = vmatpush.msra.mxu0 %v3501
        %3545 = vmatpush.msra.mxu0 %v3500
        %3546 = vmatpush.msra.mxu0 %v3499
        %3547 = vmatmul.f32.gmra.mxu0 %v3508
        %v3548 = vpop.f32.mrf.mxu0
        %v3549 = vadd.f32 0.0, %v3548
        %3550 = vmatmul.f32.gmra.mxu0 %v3511
        %v3551 = vpop.f32.mrf.mxu0
        %v3552 = vadd.f32 0.0, %v3551
        %3553 = vmatmul.f32.gmra.mxu0 %v3514
        %v3554 = vpop.f32.mrf.mxu0
        %v3555 = vadd.f32 0.0, %v3554
        %3556 = vmatmul.f32.gmra.mxu0 %v3517
        %v3557 = vpop.f32.mrf.mxu0
        %v3558 = vadd.f32 0.0, %v3557
        %3559 = vmatmul.f32.gmra.mxu0 %v3520
        %v3560 = vpop.f32.mrf.mxu0
        %v3561 = vadd.f32 0.0, %v3560
        %3562 = vmatmul.f32.gmra.mxu0 %v3523
        %v3563 = vpop.f32.mrf.mxu0
        %v3564 = vadd.f32 0.0, %v3563
        %3565 = vmatmul.f32.gmra.mxu0 %v3526
        %v3566 = vpop.f32.mrf.mxu0
        %v3567 = vadd.f32 0.0, %v3566
        %3568 = vmatmul.f32.gmra.mxu0 %v3529
        %v3569 = vpop.f32.mrf.mxu0
        %v3570 = vadd.f32 0.0, %v3569
        %3571 = vdwg.mxu0
        %v3572 = vadd.f32 %v3490, %v3549
        %v3573 = vadd.f32 %v3491, %v3552
        %v3574 = vadd.f32 %v3492, %v3555
        %v3575 = vadd.f32 %v3493, %v3558
        %v3576 = vadd.f32 %v3494, %v3561
        %v3577 = vadd.f32 %v3495, %v3564
        %v3578 = vadd.f32 %v3496, %v3567
        %v3579 = vadd.f32 %v3497, %v3570
        %vm3580 = vcmp.gt.f32.partialorder %v3572, 0.0
        %vm3581 = vcmp.gt.f32.partialorder %v3573, 0.0
        %vm3582 = vcmp.gt.f32.partialorder %v3574, 0.0
        %vm3583 = vcmp.gt.f32.partialorder %v3575, 0.0
        %vm3584 = vcmp.gt.f32.partialorder %v3576, 0.0
        %vm3585 = vcmp.gt.f32.partialorder %v3577, 0.0
        %vm3586 = vcmp.gt.f32.partialorder %v3578, 0.0
        %vm3587 = vcmp.gt.f32.partialorder %v3579, 0.0
        %v3588 = vmul.f32 %v3572, 0.2
        %v3589 = vmul.f32 %v3573, 0.2
        %v3590 = vmul.f32 %v3574, 0.2
        %v3591 = vmul.f32 %v3575, 0.2
        %v3592 = vmul.f32 %v3576, 0.2
        %v3593 = vmul.f32 %v3577, 0.2
        %v3594 = vmul.f32 %v3578, 0.2
        %v3595 = vmul.f32 %v3579, 0.2
        %v3596 = vsel %vm3580, %v3572, %v3588
        %v3597 = vsel %vm3581, %v3573, %v3589
        %v3598 = vsel %vm3582, %v3574, %v3590
        %v3599 = vsel %vm3583, %v3575, %v3591
        %v3600 = vsel %vm3584, %v3576, %v3592
        %v3601 = vsel %vm3585, %v3577, %v3593
        %v3602 = vsel %vm3586, %v3578, %v3594
        %v3603 = vsel %vm3587, %v3579, %v3595
        %v3604 = vld [vmem:[%s9] sm:$0x3]
        %v3606 = vsel %vm1167, %v3604, 0
        %3608 = vmatpush.msra.mxu0 0.0
        %3609 = vmatpush.msra.mxu0 0.0
        %3610 = vmatpush.msra.mxu0 0.0
        %3611 = vmatpush.msra.mxu0 0.0
        %3612 = vmatpush.msra.mxu0 0.0
        %3613 = vmatpush.msra.mxu0 0.0
        %3614 = vmatpush.msra.mxu0 0.0
        %3615 = vmatpush.msra.mxu0 0.0
        %3616 = vmatpush.msra.mxu0 %v3603
        %3617 = vmatpush.msra.mxu0 %v3602
        %3618 = vmatpush.msra.mxu0 %v3601
        %3619 = vmatpush.msra.mxu0 %v3600
        %3620 = vmatpush.msra.mxu0 %v3599
        %3621 = vmatpush.msra.mxu0 %v3598
        %3622 = vmatpush.msra.mxu0 %v3597
        %3623 = vmatpush.msra.mxu0 %v3596
        %3624 = vmatmul.f32.gmra.mxu0 %v3606
        %v3625 = vpop.f32.mrf.mxu0
        %v3626 = vadd.f32 0.0, %v3625
        %3627 = vdwg.mxu0
        %s3628 = scalar_lea.vmem %s9, 2
        %v3629 = vld [vmem:[%s3628] sm:$0x3]
        %v3631 = vsel %vm1167, %v3629, 0
        %3633 = vmatpush.msra.mxu0 0.0
        %3634 = vmatpush.msra.mxu0 0.0
        %3635 = vmatpush.msra.mxu0 0.0
        %3636 = vmatpush.msra.mxu0 0.0
        %3637 = vmatpush.msra.mxu0 0.0
        %3638 = vmatpush.msra.mxu0 0.0
        %3639 = vmatpush.msra.mxu0 0.0
        %3640 = vmatpush.msra.mxu0 0.0
        %3641 = vmatpush.msra.mxu0 %v3603
        %3642 = vmatpush.msra.mxu0 %v3602
        %3643 = vmatpush.msra.mxu0 %v3601
        %3644 = vmatpush.msra.mxu0 %v3600
        %3645 = vmatpush.msra.mxu0 %v3599
        %3646 = vmatpush.msra.mxu0 %v3598
        %3647 = vmatpush.msra.mxu0 %v3597
        %3648 = vmatpush.msra.mxu0 %v3596
        %3649 = vmatmul.f32.gmra.mxu0 %v3631
        %v3650 = vpop.f32.mrf.mxu0
        %v3651 = vadd.f32 0.0, %v3650
        %3652 = vdwg.mxu0
        %s3653 = scalar_lea.vmem %s9, 4
        %v3654 = vld [vmem:[%s3653] sm:$0x3]
        %v3656 = vsel %vm1167, %v3654, 0
        %3658 = vmatpush.msra.mxu0 0.0
        %3659 = vmatpush.msra.mxu0 0.0
        %3660 = vmatpush.msra.mxu0 0.0
        %3661 = vmatpush.msra.mxu0 0.0
        %3662 = vmatpush.msra.mxu0 0.0
        %3663 = vmatpush.msra.mxu0 0.0
        %3664 = vmatpush.msra.mxu0 0.0
        %3665 = vmatpush.msra.mxu0 0.0
        %3666 = vmatpush.msra.mxu0 %v3603
        %3667 = vmatpush.msra.mxu0 %v3602
        %3668 = vmatpush.msra.mxu0 %v3601
        %3669 = vmatpush.msra.mxu0 %v3600
        %3670 = vmatpush.msra.mxu0 %v3599
        %3671 = vmatpush.msra.mxu0 %v3598
        %3672 = vmatpush.msra.mxu0 %v3597
        %3673 = vmatpush.msra.mxu0 %v3596
        %3674 = vmatmul.f32.gmra.mxu0 %v3656
        %v3675 = vpop.f32.mrf.mxu0
        %v3676 = vadd.f32 0.0, %v3675
        %3677 = vdwg.mxu0
        %v3678 = vlaneseq
        %v3679 = vand.u32 %v3678, 127
        %vm3680 = vcmp.eq.s32.totalorder %v3679, 0
        %3681 = vrot.lane.b32.xlu0 %v3626, 1
        %v3682 = vpop.permute.xlu0 %3681
        %v3683 = vsel %vm3680, 0.0, %v3682
        %vm3684 = vcmp.eq.s32.totalorder %v3679, 127
        %3685 = vrot.lane.b32.xlu0 %v3676, 127
        %v3686 = vpop.permute.xlu0 %3685
        %v3687 = vsel %vm3684, 0.0, %v3686
        %v3688 = vld [vmem:[#allocation2] sm:$0x1]
        %v3690 = vperm.slane %v3688, 0
        %3691 = vset.pattern.permute.xlu0 0
        %3692 = vperm.xlu0 %3691, %v3690
        %v3693 = vpop.permute.xlu0 %3692
        %v3695 = vadd.f32 %v3693, %v3683
        %v3696 = vadd.f32 %v3695, %v3651
        %v3697 = vadd.f32 %v3696, %v3687
        %v3698 = vxor.u32 %v3697, 2147483648
        %v3699 = vmul.f32 %v3698, 1.442695
        %v3700 = vpow.pop %v3699
        %v3701 = vadd.f32 %v3700, 1.0
        %v3702 = vrcp.pop %v3701
        %v3703 = vmul.f32 %v3701, %v3702
        %v3704 = vsub.f32 1.0, %v3703
        %v3705 = vmul.f32 %v3702, %v3704
        %v3706 = vadd.f32 %v3702, %v3705
        %vm3707 = vweird.f32 %v3701
        %vm3708 = vweird.f32 %v3702
        %vm3709 = vmor %vm3707, %vm3708
        %v3710 = vsel %vm3709, %v3702, %v3706
        %v3711 = vand.u32 2147483647, %v3701
        %vm3712 = vcmp.eq.f32.partialorder %v3711, 8.507059e+37
        %v3713 = vand.u32 %v3701, 2147483648
        %v3714 = vor.u32 1.1754944e-38, %v3713
        %v3715 = vsel %vm3712, %v3714, %v3710
        %v3716 = vmul.f32 1.0, %v3715
        %3717 = vst [vmem:[%s1122] sm:$0x3] %v3716
        %v3718 = vld [vmem:[%s1008] sm:$0xff]
        %v3719 = vld [vmem:[%s1008 + $0x8] sm:$0xff]
        %v3720 = vld [vmem:[%s1008 + $0x10] sm:$0xff]
        %v3721 = vld [vmem:[%s1008 + $0x18] sm:$0xff]
        %v3722 = vld [vmem:[%s1008 + $0x20] sm:$0xff]
        %v3723 = vld [vmem:[%s1008 + $0x28] sm:$0xff]
        %v3724 = vld [vmem:[%s1008 + $0x30] sm:$0xff]
        %v3725 = vld [vmem:[%s1008 + $0x38] sm:$0xff]
        %v3726 = vld [vmem:[%s1008 + $0x40] sm:$0xff]
        %v3727 = vld [vmem:[%s1008 + $0x48] sm:$0xff]
        %v3728 = vld [vmem:[%s1008 + $0x50] sm:$0xff]
        %v3729 = vld [vmem:[%s1008 + $0x58] sm:$0xff]
        %v3730 = vld [vmem:[%s1008 + $0x60] sm:$0xff]
        %v3731 = vld [vmem:[%s1008 + $0x68] sm:$0xff]
        %v3732 = vld [vmem:[%s1008 + $0x70] sm:$0xff]
        %v3733 = vld [vmem:[%s1008 + $0x78] sm:$0xff]
        %v3734 = vld [vmem:[%s1008 + $0x80] sm:$0xff]
        %v3735 = vld [vmem:[%s1008 + $0x88] sm:$0xff]
        %v3736 = vld [vmem:[%s1008 + $0x90] sm:$0xff]
        %v3737 = vld [vmem:[%s1008 + $0x98] sm:$0xff]
        %v3738 = vld [vmem:[%s1008 + $0xa0] sm:$0xff]
        %v3739 = vld [vmem:[%s1008 + $0xa8] sm:$0xff]
        %v3740 = vld [vmem:[%s1008 + $0xb0] sm:$0xff]
        %v3741 = vld [vmem:[%s1008 + $0xb8] sm:$0xff]
        %v3742 = vld [vmem:[%s1008 + $0xc0] sm:$0xff]
        %v3743 = vld [vmem:[%s1008 + $0xc8] sm:$0xff]
        %v3744 = vld [vmem:[%s1008 + $0xd0] sm:$0xff]
        %v3745 = vld [vmem:[%s1008 + $0xd8] sm:$0xff]
        %v3746 = vld [vmem:[%s1008 + $0xe0] sm:$0xff]
        %v3747 = vld [vmem:[%s1008 + $0xe8] sm:$0xff]
        %v3748 = vld [vmem:[%s1008 + $0xf0] sm:$0xff]
        %v3749 = vld [vmem:[%s1008 + $0xf8] sm:$0xff]
        %v3750 = vld [vmem:[%s1008 + $0x100] sm:$0xff]
        %v3751 = vld [vmem:[%s1008 + $0x108] sm:$0xff]
        %v3752 = vld [vmem:[%s1008 + $0x110] sm:$0xff]
        %v3753 = vld [vmem:[%s1008 + $0x118] sm:$0xff]
        %v3754 = vld [vmem:[%s1008 + $0x120] sm:$0xff]
        %v3755 = vld [vmem:[%s1008 + $0x128] sm:$0xff]
        %v3756 = vld [vmem:[%s1008 + $0x130] sm:$0xff]
        %v3757 = vld [vmem:[%s1008 + $0x138] sm:$0xff]
        %v3758 = vld [vmem:[%s1008 + $0x140] sm:$0xff]
        %v3759 = vld [vmem:[%s1008 + $0x148] sm:$0xff]
        %v3760 = vld [vmem:[%s1008 + $0x150] sm:$0xff]
        %v3761 = vld [vmem:[%s1008 + $0x158] sm:$0xff]
        %v3762 = vld [vmem:[%s1008 + $0x160] sm:$0xff]
        %v3763 = vld [vmem:[%s1008 + $0x168] sm:$0xff]
        %v3764 = vld [vmem:[%s1008 + $0x170] sm:$0xff]
        %v3765 = vld [vmem:[%s1008 + $0x178] sm:$0xff]
        %v3766 = vld [vmem:[%s1008 + $0x180] sm:$0xff]
        %v3767 = vld [vmem:[%s1008 + $0x188] sm:$0xff]
        %v3768 = vld [vmem:[%s1008 + $0x190] sm:$0xff]
        %v3769 = vld [vmem:[%s1008 + $0x198] sm:$0xff]
        %v3770 = vld [vmem:[%s1008 + $0x1a0] sm:$0xff]
        %v3771 = vld [vmem:[%s1008 + $0x1a8] sm:$0xff]
        %v3772 = vld [vmem:[%s1008 + $0x1b0] sm:$0xff]
        %v3773 = vld [vmem:[%s1008 + $0x1b8] sm:$0xff]
        %v3774 = vld [vmem:[%s1008 + $0x1c0] sm:$0xff]
        %v3775 = vld [vmem:[%s1008 + $0x1c8] sm:$0xff]
        %v3776 = vld [vmem:[%s1008 + $0x1d0] sm:$0xff]
        %v3777 = vld [vmem:[%s1008 + $0x1d8] sm:$0xff]
        %v3778 = vld [vmem:[%s1008 + $0x1e0] sm:$0xff]
        %v3779 = vld [vmem:[%s1008 + $0x1e8] sm:$0xff]
        %v3780 = vld [vmem:[%s1008 + $0x1f0] sm:$0xff]
        %v3781 = vld [vmem:[%s1008 + $0x1f8] sm:$0xff]
        %v3782 = vld [vmem:[%s1008 + $0x200] sm:$0xff]
        %v3783 = vld [vmem:[%s1008 + $0x208] sm:$0xff]
        %v3784 = vld [vmem:[%s1008 + $0x210] sm:$0xff]
        %v3785 = vld [vmem:[%s1008 + $0x218] sm:$0xff]
        %v3786 = vld [vmem:[%s1008 + $0x220] sm:$0xff]
        %v3787 = vld [vmem:[%s1008 + $0x228] sm:$0xff]
        %v3788 = vld [vmem:[%s1008 + $0x230] sm:$0xff]
        %v3789 = vld [vmem:[%s1008 + $0x238] sm:$0xff]
        %v3790 = vld [vmem:[%s1008 + $0x240] sm:$0xff]
        %v3791 = vld [vmem:[%s1008 + $0x248] sm:$0xff]
        %v3792 = vld [vmem:[%s1008 + $0x250] sm:$0xff]
        %v3793 = vld [vmem:[%s1008 + $0x258] sm:$0xff]
        %v3794 = vld [vmem:[%s1008 + $0x260] sm:$0xff]
        %v3795 = vld [vmem:[%s1008 + $0x268] sm:$0xff]
        %v3796 = vld [vmem:[%s1008 + $0x270] sm:$0xff]
        %v3797 = vld [vmem:[%s1008 + $0x278] sm:$0xff]
        %v3798 = vld [vmem:[%s1008 + $0x280] sm:$0xff]
        %v3799 = vld [vmem:[%s1008 + $0x288] sm:$0xff]
        %v3800 = vld [vmem:[%s1008 + $0x290] sm:$0xff]
        %v3801 = vld [vmem:[%s1008 + $0x298] sm:$0xff]
        %v3802 = vld [vmem:[%s1008 + $0x2a0] sm:$0xff]
        %v3803 = vld [vmem:[%s1008 + $0x2a8] sm:$0xff]
        %v3804 = vld [vmem:[%s1008 + $0x2b0] sm:$0xff]
        %v3805 = vld [vmem:[%s1008 + $0x2b8] sm:$0xff]
        %v3806 = vld [vmem:[%s1008 + $0x2c0] sm:$0xff]
        %v3807 = vld [vmem:[%s1008 + $0x2c8] sm:$0xff]
        %v3808 = vld [vmem:[%s1008 + $0x2d0] sm:$0xff]
        %v3809 = vld [vmem:[%s1008 + $0x2d8] sm:$0xff]
        %v3810 = vld [vmem:[%s1008 + $0x2e0] sm:$0xff]
        %v3811 = vld [vmem:[%s1008 + $0x2e8] sm:$0xff]
        %v3812 = vld [vmem:[%s1008 + $0x2f0] sm:$0xff]
        %v3813 = vld [vmem:[%s1008 + $0x2f8] sm:$0xff]
        %v3814 = vld [vmem:[%s1008 + $0x300] sm:$0xff]
        %v3815 = vld [vmem:[%s1008 + $0x308] sm:$0xff]
        %v3816 = vld [vmem:[%s1008 + $0x310] sm:$0xff]
        %v3817 = vld [vmem:[%s1008 + $0x318] sm:$0xff]
        %v3818 = vld [vmem:[%s1008 + $0x320] sm:$0xff]
        %v3819 = vld [vmem:[%s1008 + $0x328] sm:$0xff]
        %v3820 = vld [vmem:[%s1008 + $0x330] sm:$0xff]
        %v3821 = vld [vmem:[%s1008 + $0x338] sm:$0xff]
        %v3822 = vld [vmem:[%s1008 + $0x340] sm:$0xff]
        %v3823 = vld [vmem:[%s1008 + $0x348] sm:$0xff]
        %v3824 = vld [vmem:[%s1008 + $0x350] sm:$0xff]
        %v3825 = vld [vmem:[%s1008 + $0x358] sm:$0xff]
        %v3826 = vld [vmem:[%s1008 + $0x360] sm:$0xff]
        %v3827 = vld [vmem:[%s1008 + $0x368] sm:$0xff]
        %v3828 = vld [vmem:[%s1008 + $0x370] sm:$0xff]
        %v3829 = vld [vmem:[%s1008 + $0x378] sm:$0xff]
        %v3830 = vld [vmem:[%s1008 + $0x380] sm:$0xff]
        %v3831 = vld [vmem:[%s1008 + $0x388] sm:$0xff]
        %v3832 = vld [vmem:[%s1008 + $0x390] sm:$0xff]
        %v3833 = vld [vmem:[%s1008 + $0x398] sm:$0xff]
        %v3834 = vld [vmem:[%s1008 + $0x3a0] sm:$0xff]
        %v3835 = vld [vmem:[%s1008 + $0x3a8] sm:$0xff]
        %v3836 = vld [vmem:[%s1008 + $0x3b0] sm:$0xff]
        %v3837 = vld [vmem:[%s1008 + $0x3b8] sm:$0xff]
        %v3838 = vld [vmem:[%s1008 + $0x3c0] sm:$0xff]
        %v3839 = vld [vmem:[%s1008 + $0x3c8] sm:$0xff]
        %v3840 = vld [vmem:[%s1008 + $0x3d0] sm:$0xff]
        %v3841 = vld [vmem:[%s1008 + $0x3d8] sm:$0xff]
        %v3842 = vld [vmem:[%s1008 + $0x3e0] sm:$0xff]
        %v3843 = vld [vmem:[%s1008 + $0x3e8] sm:$0xff]
        %v3844 = vld [vmem:[%s1008 + $0x3f0] sm:$0xff]
        %v3845 = vld [vmem:[%s1008 + $0x3f8] sm:$0xff]
        %3846 = vmatpush.msra.mxu0 %v3838
        %3847 = vmatpush.msra.mxu0 %v3830
        %3848 = vmatpush.msra.mxu0 %v3822
        %3849 = vmatpush.msra.mxu0 %v3814
        %3850 = vmatpush.msra.mxu0 %v3806
        %3851 = vmatpush.msra.mxu0 %v3798
        %3852 = vmatpush.msra.mxu0 %v3790
        %3853 = vmatpush.msra.mxu0 %v3782
        %3854 = vmatpush.msra.mxu0 %v3774
        %3855 = vmatpush.msra.mxu0 %v3766
        %3856 = vmatpush.msra.mxu0 %v3758
        %3857 = vmatpush.msra.mxu0 %v3750
        %3858 = vmatpush.msra.mxu0 %v3742
        %3859 = vmatpush.msra.mxu0 %v3734
        %3860 = vmatpush.msra.mxu0 %v3726
        %3861 = vmatpush.msra.mxu0 %v3718
        %3862 = vmatmul.f32.gmra.mxu0 %v3716
        %v3863 = vpop.f32.mrf.mxu0
        %v3864 = vadd.f32 0.0, %v3863
        %3865 = vdwg.mxu0
        %3866 = vmatpush.msra.mxu0 %v3839
        %3867 = vmatpush.msra.mxu0 %v3831
        %3868 = vmatpush.msra.mxu0 %v3823
        %3869 = vmatpush.msra.mxu0 %v3815
        %3870 = vmatpush.msra.mxu0 %v3807
        %3871 = vmatpush.msra.mxu0 %v3799
        %3872 = vmatpush.msra.mxu0 %v3791
        %3873 = vmatpush.msra.mxu0 %v3783
        %3874 = vmatpush.msra.mxu0 %v3775
        %3875 = vmatpush.msra.mxu0 %v3767
        %3876 = vmatpush.msra.mxu0 %v3759
        %3877 = vmatpush.msra.mxu0 %v3751
        %3878 = vmatpush.msra.mxu0 %v3743
        %3879 = vmatpush.msra.mxu0 %v3735
        %3880 = vmatpush.msra.mxu0 %v3727
        %3881 = vmatpush.msra.mxu0 %v3719
        %3882 = vmatmul.f32.gmra.mxu0 %v3716
        %v3883 = vpop.f32.mrf.mxu0
        %v3884 = vadd.f32 0.0, %v3883
        %3885 = vdwg.mxu0
        %3886 = vmatpush.msra.mxu0 %v3840
        %3887 = vmatpush.msra.mxu0 %v3832
        %3888 = vmatpush.msra.mxu0 %v3824
        %3889 = vmatpush.msra.mxu0 %v3816
        %3890 = vmatpush.msra.mxu0 %v3808
        %3891 = vmatpush.msra.mxu0 %v3800
        %3892 = vmatpush.msra.mxu0 %v3792
        %3893 = vmatpush.msra.mxu0 %v3784
        %3894 = vmatpush.msra.mxu0 %v3776
        %3895 = vmatpush.msra.mxu0 %v3768
        %3896 = vmatpush.msra.mxu0 %v3760
        %3897 = vmatpush.msra.mxu0 %v3752
        %3898 = vmatpush.msra.mxu0 %v3744
        %3899 = vmatpush.msra.mxu0 %v3736
        %3900 = vmatpush.msra.mxu0 %v3728
        %3901 = vmatpush.msra.mxu0 %v3720
        %3902 = vmatmul.f32.gmra.mxu0 %v3716
        %v3903 = vpop.f32.mrf.mxu0
        %v3904 = vadd.f32 0.0, %v3903
        %3905 = vdwg.mxu0
        %3906 = vmatpush.msra.mxu0 %v3841
        %3907 = vmatpush.msra.mxu0 %v3833
        %3908 = vmatpush.msra.mxu0 %v3825
        %3909 = vmatpush.msra.mxu0 %v3817
        %3910 = vmatpush.msra.mxu0 %v3809
        %3911 = vmatpush.msra.mxu0 %v3801
        %3912 = vmatpush.msra.mxu0 %v3793
        %3913 = vmatpush.msra.mxu0 %v3785
        %3914 = vmatpush.msra.mxu0 %v3777
        %3915 = vmatpush.msra.mxu0 %v3769
        %3916 = vmatpush.msra.mxu0 %v3761
        %3917 = vmatpush.msra.mxu0 %v3753
        %3918 = vmatpush.msra.mxu0 %v3745
        %3919 = vmatpush.msra.mxu0 %v3737
        %3920 = vmatpush.msra.mxu0 %v3729
        %3921 = vmatpush.msra.mxu0 %v3721
        %3922 = vmatmul.f32.gmra.mxu0 %v3716
        %v3923 = vpop.f32.mrf.mxu0
        %v3924 = vadd.f32 0.0, %v3923
        %3925 = vdwg.mxu0
        %3926 = vmatpush.msra.mxu0 %v3842
        %3927 = vmatpush.msra.mxu0 %v3834
        %3928 = vmatpush.msra.mxu0 %v3826
        %3929 = vmatpush.msra.mxu0 %v3818
        %3930 = vmatpush.msra.mxu0 %v3810
        %3931 = vmatpush.msra.mxu0 %v3802
        %3932 = vmatpush.msra.mxu0 %v3794
        %3933 = vmatpush.msra.mxu0 %v3786
        %3934 = vmatpush.msra.mxu0 %v3778
        %3935 = vmatpush.msra.mxu0 %v3770
        %3936 = vmatpush.msra.mxu0 %v3762
        %3937 = vmatpush.msra.mxu0 %v3754
        %3938 = vmatpush.msra.mxu0 %v3746
        %3939 = vmatpush.msra.mxu0 %v3738
        %3940 = vmatpush.msra.mxu0 %v3730
        %3941 = vmatpush.msra.mxu0 %v3722
        %3942 = vmatmul.f32.gmra.mxu0 %v3716
        %v3943 = vpop.f32.mrf.mxu0
        %v3944 = vadd.f32 0.0, %v3943
        %3945 = vdwg.mxu0
        %3946 = vmatpush.msra.mxu0 %v3843
        %3947 = vmatpush.msra.mxu0 %v3835
        %3948 = vmatpush.msra.mxu0 %v3827
        %3949 = vmatpush.msra.mxu0 %v3819
        %3950 = vmatpush.msra.mxu0 %v3811
        %3951 = vmatpush.msra.mxu0 %v3803
        %3952 = vmatpush.msra.mxu0 %v3795
        %3953 = vmatpush.msra.mxu0 %v3787
        %3954 = vmatpush.msra.mxu0 %v3779
        %3955 = vmatpush.msra.mxu0 %v3771
        %3956 = vmatpush.msra.mxu0 %v3763
        %3957 = vmatpush.msra.mxu0 %v3755
        %3958 = vmatpush.msra.mxu0 %v3747
        %3959 = vmatpush.msra.mxu0 %v3739
        %3960 = vmatpush.msra.mxu0 %v3731
        %3961 = vmatpush.msra.mxu0 %v3723
        %3962 = vmatmul.f32.gmra.mxu0 %v3716
        %v3963 = vpop.f32.mrf.mxu0
        %v3964 = vadd.f32 0.0, %v3963
        %3965 = vdwg.mxu0
        %3966 = vmatpush.msra.mxu0 %v3844
        %3967 = vmatpush.msra.mxu0 %v3836
        %3968 = vmatpush.msra.mxu0 %v3828
        %3969 = vmatpush.msra.mxu0 %v3820
        %3970 = vmatpush.msra.mxu0 %v3812
        %3971 = vmatpush.msra.mxu0 %v3804
        %3972 = vmatpush.msra.mxu0 %v3796
        %3973 = vmatpush.msra.mxu0 %v3788
        %3974 = vmatpush.msra.mxu0 %v3780
        %3975 = vmatpush.msra.mxu0 %v3772
        %3976 = vmatpush.msra.mxu0 %v3764
        %3977 = vmatpush.msra.mxu0 %v3756
        %3978 = vmatpush.msra.mxu0 %v3748
        %3979 = vmatpush.msra.mxu0 %v3740
        %3980 = vmatpush.msra.mxu0 %v3732
        %3981 = vmatpush.msra.mxu0 %v3724
        %3982 = vmatmul.f32.gmra.mxu0 %v3716
        %v3983 = vpop.f32.mrf.mxu0
        %v3984 = vadd.f32 0.0, %v3983
        %3985 = vdwg.mxu0
        %3986 = vmatpush.msra.mxu0 %v3845
        %3987 = vmatpush.msra.mxu0 %v3837
        %3988 = vmatpush.msra.mxu0 %v3829
        %3989 = vmatpush.msra.mxu0 %v3821
        %3990 = vmatpush.msra.mxu0 %v3813
        %3991 = vmatpush.msra.mxu0 %v3805
        %3992 = vmatpush.msra.mxu0 %v3797
        %3993 = vmatpush.msra.mxu0 %v3789
        %3994 = vmatpush.msra.mxu0 %v3781
        %3995 = vmatpush.msra.mxu0 %v3773
        %3996 = vmatpush.msra.mxu0 %v3765
        %3997 = vmatpush.msra.mxu0 %v3757
        %3998 = vmatpush.msra.mxu0 %v3749
        %3999 = vmatpush.msra.mxu0 %v3741
        %4000 = vmatpush.msra.mxu0 %v3733
        %4001 = vmatpush.msra.mxu0 %v3725
        %4002 = vmatmul.f32.gmra.mxu0 %v3716
        %v4003 = vpop.f32.mrf.mxu0
        %v4004 = vadd.f32 0.0, %v4003
        %4005 = vdwg.mxu0
        %v4006 = vld [vmem:[%s1117] sm:$0xff]
        %v4008 = vperm.slane %v4006, 0
        %v4009 = vperm.slane %v4006, 1
        %v4010 = vperm.slane %v4006, 2
        %v4011 = vperm.slane %v4006, 3
        %v4012 = vperm.slane %v4006, 4
        %v4013 = vperm.slane %v4006, 5
        %v4014 = vperm.slane %v4006, 6
        %v4015 = vperm.slane %v4006, 7
        %v4024 = vmul.f32 %v3864, %v4008
        %v4025 = vmul.f32 %v3884, %v4009
        %v4026 = vmul.f32 %v3904, %v4010
        %v4027 = vmul.f32 %v3924, %v4011
        %v4028 = vmul.f32 %v3944, %v4012
        %v4029 = vmul.f32 %v3964, %v4013
        %v4030 = vmul.f32 %v3984, %v4014
        %v4031 = vmul.f32 %v4004, %v4015
        %v4040 = vrot.slane %v4025, 6
        %v4041 = vrot.slane %v4026, 4
        %v4042 = vrot.slane %v4027, 2
        %v4043 = vrot.slane %v4029, 6
        %v4044 = vrot.slane %v4030, 4
        %v4045 = vrot.slane %v4031, 2
        %vm4046 = vcmask 1041408
        %v4047 = vsel %vm4046, %v4024, %v4040
        %vm4048 = vcmask 1045508
        %v4049 = vsel %vm4048, %v4041, %v4042
        %v4050 = vsel %vm1363, %v4047, %v4049
        %v4051 = vsel %vm4046, %v4028, %v4043
        %v4052 = vsel %vm4048, %v4044, %v4045
        %v4053 = vsel %vm1363, %v4051, %v4052
        %4056 = vst [vmem:[%s1127] sm:$0xff] %v4050
        %4057 = vst [vmem:[%s1127 + $0x8] sm:$0xff] %v4053
        %v4058 = vld [vmem:[%s1] sm:$0xff]
        %v4059 = vld [vmem:[%s1 + $0x8] sm:$0xff]
        %v4060 = vld [vmem:[%s13] sm:$0x1]
        %v4061 = vld [vmem:[%s11] sm:$0xff]
        %v4062 = vld [vmem:[%s11 + $0x8] sm:$0xff]
        %v4063 = vld [vmem:[%s11 + $0x10] sm:$0xff]
        %v4064 = vld [vmem:[%s11 + $0x18] sm:$0xff]
        %v4066 = vsel %vm2317, %v4061, 0
        %v4069 = vsel %vm2317, %v4062, 0
        %v4072 = vsel %vm2317, %v4063, 0
        %v4075 = vsel %vm2317, %v4064, 0
        %4077 = vmatpush.msra.mxu0 0.0
        %4078 = vmatpush.msra.mxu0 0.0
        %4079 = vmatpush.msra.mxu0 0.0
        %4080 = vmatpush.msra.mxu0 0.0
        %4081 = vmatpush.msra.mxu0 0.0
        %4082 = vmatpush.msra.mxu0 0.0
        %4083 = vmatpush.msra.mxu0 0.0
        %4084 = vmatpush.msra.mxu0 0.0
        %4085 = vmatpush.msra.mxu0 0.0
        %4086 = vmatpush.msra.mxu0 0.0
        %4087 = vmatpush.msra.mxu0 0.0
        %4088 = vmatpush.msra.mxu0 0.0
        %4089 = vmatpush.msra.mxu0 0.0
        %4090 = vmatpush.msra.mxu0 0.0
        %4091 = vmatpush.msra.mxu0 %v4059
        %4092 = vmatpush.msra.mxu0 %v4058
        %4093 = vmatmul.f32.gmra.mxu0 %v4066
        %v4094 = vpop.f32.mrf.mxu0
        %v4095 = vadd.f32 0.0, %v4094
        %4096 = vmatmul.f32.gmra.mxu0 %v4069
        %v4097 = vpop.f32.mrf.mxu0
        %v4098 = vadd.f32 0.0, %v4097
        %4099 = vmatmul.f32.gmra.mxu0 %v4072
        %v4100 = vpop.f32.mrf.mxu0
        %v4101 = vadd.f32 0.0, %v4100
        %4102 = vmatmul.f32.gmra.mxu0 %v4075
        %v4103 = vpop.f32.mrf.mxu0
        %v4104 = vadd.f32 0.0, %v4103
        %4105 = vdwg.mxu0
        %v4106 = vld [vmem:[%s12] sm:$0xff]
        %v4107 = vld [vmem:[%s12 + $0x8] sm:$0xff]
        %v4108 = vld [vmem:[%s12 + $0x10] sm:$0xff]
        %v4109 = vld [vmem:[%s12 + $0x18] sm:$0xff]
        %v4111 = vsel %vm2806, %v4095, 0
        %v4114 = vsel %vm2806, %v4098, 0
        %v4117 = vsel %vm2806, %v4101, 0
        %v4120 = vsel %vm2806, %v4104, 0
        %4122 = vmatpush.msra.mxu0 0.0
        %4123 = vmatpush.msra.mxu0 0.0
        %4124 = vmatpush.msra.mxu0 0.0
        %4125 = vmatpush.msra.mxu0 0.0
        %4126 = vmatpush.msra.mxu0 0.0
        %4127 = vmatpush.msra.mxu0 0.0
        %4128 = vmatpush.msra.mxu0 0.0
        %4129 = vmatpush.msra.mxu0 0.0
        %4130 = vmatpush.msra.mxu0 0.0
        %4131 = vmatpush.msra.mxu0 0.0
        %4132 = vmatpush.msra.mxu0 0.0
        %4133 = vmatpush.msra.mxu0 0.0
        %4134 = vmatpush.msra.mxu0 %v4109
        %4135 = vmatpush.msra.mxu0 %v4108
        %4136 = vmatpush.msra.mxu0 %v4107
        %4137 = vmatpush.msra.mxu0 %v4106
        %4138 = vmatmul.f32.gmra.mxu0 %v4111
        %v4139 = vpop.f32.mrf.mxu0
        %v4140 = vadd.f32 0.0, %v4139
        %4141 = vmatmul.f32.gmra.mxu0 %v4114
        %v4142 = vpop.f32.mrf.mxu0
        %v4143 = vadd.f32 0.0, %v4142
        %4144 = vmatmul.f32.gmra.mxu0 %v4117
        %v4145 = vpop.f32.mrf.mxu0
        %v4146 = vadd.f32 0.0, %v4145
        %4147 = vmatmul.f32.gmra.mxu0 %v4120
        %v4148 = vpop.f32.mrf.mxu0
        %v4149 = vadd.f32 0.0, %v4148
        %4150 = vdwg.mxu0
        %v4152 = vperm.slane %v4060, 0
        %v4154 = vadd.f32 %v4152, %v4140
        %v4155 = vadd.f32 %v4152, %v4143
        %v4156 = vadd.f32 %v4152, %v4146
        %v4157 = vadd.f32 %v4152, %v4149
        %s4158 = scalar_lea.vmem %s11, 32
        %v4159 = vld [vmem:[%s4158] sm:$0xff]
        %v4160 = vld [vmem:[%s4158 + $0x8] sm:$0xff]
        %v4161 = vld [vmem:[%s4158 + $0x10] sm:$0xff]
        %v4162 = vld [vmem:[%s4158 + $0x18] sm:$0xff]
        %v4164 = vsel %vm2317, %v4159, 0
        %v4167 = vsel %vm2317, %v4160, 0
        %v4170 = vsel %vm2317, %v4161, 0
        %v4173 = vsel %vm2317, %v4162, 0
        %4175 = vmatpush.msra.mxu0 0.0
        %4176 = vmatpush.msra.mxu0 0.0
        %4177 = vmatpush.msra.mxu0 0.0
        %4178 = vmatpush.msra.mxu0 0.0
        %4179 = vmatpush.msra.mxu0 0.0
        %4180 = vmatpush.msra.mxu0 0.0
        %4181 = vmatpush.msra.mxu0 0.0
        %4182 = vmatpush.msra.mxu0 0.0
        %4183 = vmatpush.msra.mxu0 0.0
        %4184 = vmatpush.msra.mxu0 0.0
        %4185 = vmatpush.msra.mxu0 0.0
        %4186 = vmatpush.msra.mxu0 0.0
        %4187 = vmatpush.msra.mxu0 0.0
        %4188 = vmatpush.msra.mxu0 0.0
        %4189 = vmatpush.msra.mxu0 %v4059
        %4190 = vmatpush.msra.mxu0 %v4058
        %4191 = vmatmul.f32.gmra.mxu0 %v4164
        %v4192 = vpop.f32.mrf.mxu0
        %v4193 = vadd.f32 0.0, %v4192
        %4194 = vmatmul.f32.gmra.mxu0 %v4167
        %v4195 = vpop.f32.mrf.mxu0
        %v4196 = vadd.f32 0.0, %v4195
        %4197 = vmatmul.f32.gmra.mxu0 %v4170
        %v4198 = vpop.f32.mrf.mxu0
        %v4199 = vadd.f32 0.0, %v4198
        %4200 = vmatmul.f32.gmra.mxu0 %v4173
        %v4201 = vpop.f32.mrf.mxu0
        %v4202 = vadd.f32 0.0, %v4201
        %4203 = vdwg.mxu0
        %s4204 = scalar_lea.vmem %s12, 32
        %v4205 = vld [vmem:[%s4204] sm:$0xff]
        %v4206 = vld [vmem:[%s4204 + $0x8] sm:$0xff]
        %v4207 = vld [vmem:[%s4204 + $0x10] sm:$0xff]
        %v4208 = vld [vmem:[%s4204 + $0x18] sm:$0xff]
        %v4210 = vsel %vm2806, %v4193, 0
        %v4213 = vsel %vm2806, %v4196, 0
        %v4216 = vsel %vm2806, %v4199, 0
        %v4219 = vsel %vm2806, %v4202, 0
        %4221 = vmatpush.msra.mxu0 0.0
        %4222 = vmatpush.msra.mxu0 0.0
        %4223 = vmatpush.msra.mxu0 0.0
        %4224 = vmatpush.msra.mxu0 0.0
        %4225 = vmatpush.msra.mxu0 0.0
        %4226 = vmatpush.msra.mxu0 0.0
        %4227 = vmatpush.msra.mxu0 0.0
        %4228 = vmatpush.msra.mxu0 0.0
        %4229 = vmatpush.msra.mxu0 0.0
        %4230 = vmatpush.msra.mxu0 0.0
        %4231 = vmatpush.msra.mxu0 0.0
        %4232 = vmatpush.msra.mxu0 0.0
        %4233 = vmatpush.msra.mxu0 %v4208
        %4234 = vmatpush.msra.mxu0 %v4207
        %4235 = vmatpush.msra.mxu0 %v4206
        %4236 = vmatpush.msra.mxu0 %v4205
        %4237 = vmatmul.f32.gmra.mxu0 %v4210
        %v4238 = vpop.f32.mrf.mxu0
        %v4239 = vadd.f32 0.0, %v4238
        %4240 = vmatmul.f32.gmra.mxu0 %v4213
        %v4241 = vpop.f32.mrf.mxu0
        %v4242 = vadd.f32 0.0, %v4241
        %4243 = vmatmul.f32.gmra.mxu0 %v4216
        %v4244 = vpop.f32.mrf.mxu0
        %v4245 = vadd.f32 0.0, %v4244
        %4246 = vmatmul.f32.gmra.mxu0 %v4219
        %v4247 = vpop.f32.mrf.mxu0
        %v4248 = vadd.f32 0.0, %v4247
        %4249 = vdwg.mxu0
        %v4250 = vadd.f32 %v4154, %v4239
        %v4251 = vadd.f32 %v4155, %v4242
        %v4252 = vadd.f32 %v4156, %v4245
        %v4253 = vadd.f32 %v4157, %v4248
        %s4254 = scalar_lea.vmem %s11, 64
        %v4255 = vld [vmem:[%s4254] sm:$0xff]
        %v4256 = vld [vmem:[%s4254 + $0x8] sm:$0xff]
        %v4257 = vld [vmem:[%s4254 + $0x10] sm:$0xff]
        %v4258 = vld [vmem:[%s4254 + $0x18] sm:$0xff]
        %v4260 = vsel %vm2317, %v4255, 0
        %v4263 = vsel %vm2317, %v4256, 0
        %v4266 = vsel %vm2317, %v4257, 0
        %v4269 = vsel %vm2317, %v4258, 0
        %4271 = vmatpush.msra.mxu0 0.0
        %4272 = vmatpush.msra.mxu0 0.0
        %4273 = vmatpush.msra.mxu0 0.0
        %4274 = vmatpush.msra.mxu0 0.0
        %4275 = vmatpush.msra.mxu0 0.0
        %4276 = vmatpush.msra.mxu0 0.0
        %4277 = vmatpush.msra.mxu0 0.0
        %4278 = vmatpush.msra.mxu0 0.0
        %4279 = vmatpush.msra.mxu0 0.0
        %4280 = vmatpush.msra.mxu0 0.0
        %4281 = vmatpush.msra.mxu0 0.0
        %4282 = vmatpush.msra.mxu0 0.0
        %4283 = vmatpush.msra.mxu0 0.0
        %4284 = vmatpush.msra.mxu0 0.0
        %4285 = vmatpush.msra.mxu0 %v4059
        %4286 = vmatpush.msra.mxu0 %v4058
        %4287 = vmatmul.f32.gmra.mxu0 %v4260
        %v4288 = vpop.f32.mrf.mxu0
        %v4289 = vadd.f32 0.0, %v4288
        %4290 = vmatmul.f32.gmra.mxu0 %v4263
        %v4291 = vpop.f32.mrf.mxu0
        %v4292 = vadd.f32 0.0, %v4291
        %4293 = vmatmul.f32.gmra.mxu0 %v4266
        %v4294 = vpop.f32.mrf.mxu0
        %v4295 = vadd.f32 0.0, %v4294
        %4296 = vmatmul.f32.gmra.mxu0 %v4269
        %v4297 = vpop.f32.mrf.mxu0
        %v4298 = vadd.f32 0.0, %v4297
        %4299 = vdwg.mxu0
        %s4300 = scalar_lea.vmem %s12, 64
        %v4301 = vld [vmem:[%s4300] sm:$0xff]
        %v4302 = vld [vmem:[%s4300 + $0x8] sm:$0xff]
        %v4303 = vld [vmem:[%s4300 + $0x10] sm:$0xff]
        %v4304 = vld [vmem:[%s4300 + $0x18] sm:$0xff]
        %v4306 = vsel %vm2806, %v4289, 0
        %v4309 = vsel %vm2806, %v4292, 0
        %v4312 = vsel %vm2806, %v4295, 0
        %v4315 = vsel %vm2806, %v4298, 0
        %4317 = vmatpush.msra.mxu0 0.0
        %4318 = vmatpush.msra.mxu0 0.0
        %4319 = vmatpush.msra.mxu0 0.0
        %4320 = vmatpush.msra.mxu0 0.0
        %4321 = vmatpush.msra.mxu0 0.0
        %4322 = vmatpush.msra.mxu0 0.0
        %4323 = vmatpush.msra.mxu0 0.0
        %4324 = vmatpush.msra.mxu0 0.0
        %4325 = vmatpush.msra.mxu0 0.0
        %4326 = vmatpush.msra.mxu0 0.0
        %4327 = vmatpush.msra.mxu0 0.0
        %4328 = vmatpush.msra.mxu0 0.0
        %4329 = vmatpush.msra.mxu0 %v4304
        %4330 = vmatpush.msra.mxu0 %v4303
        %4331 = vmatpush.msra.mxu0 %v4302
        %4332 = vmatpush.msra.mxu0 %v4301
        %4333 = vmatmul.f32.gmra.mxu0 %v4306
        %v4334 = vpop.f32.mrf.mxu0
        %v4335 = vadd.f32 0.0, %v4334
        %4336 = vmatmul.f32.gmra.mxu0 %v4309
        %v4337 = vpop.f32.mrf.mxu0
        %v4338 = vadd.f32 0.0, %v4337
        %4339 = vmatmul.f32.gmra.mxu0 %v4312
        %v4340 = vpop.f32.mrf.mxu0
        %v4341 = vadd.f32 0.0, %v4340
        %4342 = vmatmul.f32.gmra.mxu0 %v4315
        %v4343 = vpop.f32.mrf.mxu0
        %v4344 = vadd.f32 0.0, %v4343
        %4345 = vdwg.mxu0
        %v4346 = vadd.f32 %v4250, %v4335
        %v4347 = vadd.f32 %v4251, %v4338
        %v4348 = vadd.f32 %v4252, %v4341
        %v4349 = vadd.f32 %v4253, %v4344
        %vm4350 = vcmp.gt.f32.partialorder %v4346, 0.0
        %vm4351 = vcmp.gt.f32.partialorder %v4347, 0.0
        %vm4352 = vcmp.gt.f32.partialorder %v4348, 0.0
        %vm4353 = vcmp.gt.f32.partialorder %v4349, 0.0
        %v4354 = vmul.f32 %v4346, 0.2
        %v4355 = vmul.f32 %v4347, 0.2
        %v4356 = vmul.f32 %v4348, 0.2
        %v4357 = vmul.f32 %v4349, 0.2
        %v4358 = vsel %vm4350, %v4346, %v4354
        %v4359 = vsel %vm4351, %v4347, %v4355
        %v4360 = vsel %vm4352, %v4348, %v4356
        %v4361 = vsel %vm4353, %v4349, %v4357
        %v4362 = vld [vmem:[%s16] sm:$0x1]
        %v4363 = vld [vmem:[%s14] sm:$0xff]
        %v4364 = vld [vmem:[%s14 + $0x8] sm:$0xff]
        %v4365 = vld [vmem:[%s14 + $0x10] sm:$0xff]
        %v4366 = vld [vmem:[%s14 + $0x18] sm:$0xff]
        %v4368 = vsel %vm2806, %v4363, 0
        %v4371 = vsel %vm2806, %v4364, 0
        %v4374 = vsel %vm2806, %v4365, 0
        %v4377 = vsel %vm2806, %v4366, 0
        %4379 = vmatpush.msra.mxu0 0.0
        %4380 = vmatpush.msra.mxu0 0.0
        %4381 = vmatpush.msra.mxu0 0.0
        %4382 = vmatpush.msra.mxu0 0.0
        %4383 = vmatpush.msra.mxu0 0.0
        %4384 = vmatpush.msra.mxu0 0.0
        %4385 = vmatpush.msra.mxu0 0.0
        %4386 = vmatpush.msra.mxu0 0.0
        %4387 = vmatpush.msra.mxu0 0.0
        %4388 = vmatpush.msra.mxu0 0.0
        %4389 = vmatpush.msra.mxu0 0.0
        %4390 = vmatpush.msra.mxu0 0.0
        %4391 = vmatpush.msra.mxu0 %v4361
        %4392 = vmatpush.msra.mxu0 %v4360
        %4393 = vmatpush.msra.mxu0 %v4359
        %4394 = vmatpush.msra.mxu0 %v4358
        %4395 = vmatmul.f32.gmra.mxu0 %v4368
        %v4396 = vpop.f32.mrf.mxu0
        %v4397 = vadd.f32 0.0, %v4396
        %4398 = vmatmul.f32.gmra.mxu0 %v4371
        %v4399 = vpop.f32.mrf.mxu0
        %v4400 = vadd.f32 0.0, %v4399
        %4401 = vmatmul.f32.gmra.mxu0 %v4374
        %v4402 = vpop.f32.mrf.mxu0
        %v4403 = vadd.f32 0.0, %v4402
        %4404 = vmatmul.f32.gmra.mxu0 %v4377
        %v4405 = vpop.f32.mrf.mxu0
        %v4406 = vadd.f32 0.0, %v4405
        %4407 = vdwg.mxu0
        %v4408 = vld [vmem:[%s15] sm:$0xff]
        %v4409 = vld [vmem:[%s15 + $0x8] sm:$0xff]
        %v4410 = vld [vmem:[%s15 + $0x10] sm:$0xff]
        %v4411 = vld [vmem:[%s15 + $0x18] sm:$0xff]
        %v4413 = vsel %vm2806, %v4397, 0
        %v4416 = vsel %vm2806, %v4400, 0
        %v4419 = vsel %vm2806, %v4403, 0
        %v4422 = vsel %vm2806, %v4406, 0
        %4424 = vmatpush.msra.mxu0 0.0
        %4425 = vmatpush.msra.mxu0 0.0
        %4426 = vmatpush.msra.mxu0 0.0
        %4427 = vmatpush.msra.mxu0 0.0
        %4428 = vmatpush.msra.mxu0 0.0
        %4429 = vmatpush.msra.mxu0 0.0
        %4430 = vmatpush.msra.mxu0 0.0
        %4431 = vmatpush.msra.mxu0 0.0
        %4432 = vmatpush.msra.mxu0 0.0
        %4433 = vmatpush.msra.mxu0 0.0
        %4434 = vmatpush.msra.mxu0 0.0
        %4435 = vmatpush.msra.mxu0 0.0
        %4436 = vmatpush.msra.mxu0 %v4411
        %4437 = vmatpush.msra.mxu0 %v4410
        %4438 = vmatpush.msra.mxu0 %v4409
        %4439 = vmatpush.msra.mxu0 %v4408
        %4440 = vmatmul.f32.gmra.mxu0 %v4413
        %v4441 = vpop.f32.mrf.mxu0
        %v4442 = vadd.f32 0.0, %v4441
        %4443 = vmatmul.f32.gmra.mxu0 %v4416
        %v4444 = vpop.f32.mrf.mxu0
        %v4445 = vadd.f32 0.0, %v4444
        %4446 = vmatmul.f32.gmra.mxu0 %v4419
        %v4447 = vpop.f32.mrf.mxu0
        %v4448 = vadd.f32 0.0, %v4447
        %4449 = vmatmul.f32.gmra.mxu0 %v4422
        %v4450 = vpop.f32.mrf.mxu0
        %v4451 = vadd.f32 0.0, %v4450
        %4452 = vdwg.mxu0
        %v4454 = vperm.slane %v4362, 0
        %v4456 = vadd.f32 %v4454, %v4442
        %v4457 = vadd.f32 %v4454, %v4445
        %v4458 = vadd.f32 %v4454, %v4448
        %v4459 = vadd.f32 %v4454, %v4451
        %s4460 = scalar_lea.vmem %s14, 32
        %v4461 = vld [vmem:[%s4460] sm:$0xff]
        %v4462 = vld [vmem:[%s4460 + $0x8] sm:$0xff]
        %v4463 = vld [vmem:[%s4460 + $0x10] sm:$0xff]
        %v4464 = vld [vmem:[%s4460 + $0x18] sm:$0xff]
        %v4466 = vsel %vm2806, %v4461, 0
        %v4469 = vsel %vm2806, %v4462, 0
        %v4472 = vsel %vm2806, %v4463, 0
        %v4475 = vsel %vm2806, %v4464, 0
        %4477 = vmatpush.msra.mxu0 0.0
        %4478 = vmatpush.msra.mxu0 0.0
        %4479 = vmatpush.msra.mxu0 0.0
        %4480 = vmatpush.msra.mxu0 0.0
        %4481 = vmatpush.msra.mxu0 0.0
        %4482 = vmatpush.msra.mxu0 0.0
        %4483 = vmatpush.msra.mxu0 0.0
        %4484 = vmatpush.msra.mxu0 0.0
        %4485 = vmatpush.msra.mxu0 0.0
        %4486 = vmatpush.msra.mxu0 0.0
        %4487 = vmatpush.msra.mxu0 0.0
        %4488 = vmatpush.msra.mxu0 0.0
        %4489 = vmatpush.msra.mxu0 %v4361
        %4490 = vmatpush.msra.mxu0 %v4360
        %4491 = vmatpush.msra.mxu0 %v4359
        %4492 = vmatpush.msra.mxu0 %v4358
        %4493 = vmatmul.f32.gmra.mxu0 %v4466
        %v4494 = vpop.f32.mrf.mxu0
        %v4495 = vadd.f32 0.0, %v4494
        %4496 = vmatmul.f32.gmra.mxu0 %v4469
        %v4497 = vpop.f32.mrf.mxu0
        %v4498 = vadd.f32 0.0, %v4497
        %4499 = vmatmul.f32.gmra.mxu0 %v4472
        %v4500 = vpop.f32.mrf.mxu0
        %v4501 = vadd.f32 0.0, %v4500
        %4502 = vmatmul.f32.gmra.mxu0 %v4475
        %v4503 = vpop.f32.mrf.mxu0
        %v4504 = vadd.f32 0.0, %v4503
        %4505 = vdwg.mxu0
        %s4506 = scalar_lea.vmem %s15, 32
        %v4507 = vld [vmem:[%s4506] sm:$0xff]
        %v4508 = vld [vmem:[%s4506 + $0x8] sm:$0xff]
        %v4509 = vld [vmem:[%s4506 + $0x10] sm:$0xff]
        %v4510 = vld [vmem:[%s4506 + $0x18] sm:$0xff]
        %v4512 = vsel %vm2806, %v4495, 0
        %v4515 = vsel %vm2806, %v4498, 0
        %v4518 = vsel %vm2806, %v4501, 0
        %v4521 = vsel %vm2806, %v4504, 0
        %4523 = vmatpush.msra.mxu0 0.0
        %4524 = vmatpush.msra.mxu0 0.0
        %4525 = vmatpush.msra.mxu0 0.0
        %4526 = vmatpush.msra.mxu0 0.0
        %4527 = vmatpush.msra.mxu0 0.0
        %4528 = vmatpush.msra.mxu0 0.0
        %4529 = vmatpush.msra.mxu0 0.0
        %4530 = vmatpush.msra.mxu0 0.0
        %4531 = vmatpush.msra.mxu0 0.0
        %4532 = vmatpush.msra.mxu0 0.0
        %4533 = vmatpush.msra.mxu0 0.0
        %4534 = vmatpush.msra.mxu0 0.0
        %4535 = vmatpush.msra.mxu0 %v4510
        %4536 = vmatpush.msra.mxu0 %v4509
        %4537 = vmatpush.msra.mxu0 %v4508
        %4538 = vmatpush.msra.mxu0 %v4507
        %4539 = vmatmul.f32.gmra.mxu0 %v4512
        %v4540 = vpop.f32.mrf.mxu0
        %v4541 = vadd.f32 0.0, %v4540
        %4542 = vmatmul.f32.gmra.mxu0 %v4515
        %v4543 = vpop.f32.mrf.mxu0
        %v4544 = vadd.f32 0.0, %v4543
        %4545 = vmatmul.f32.gmra.mxu0 %v4518
        %v4546 = vpop.f32.mrf.mxu0
        %v4547 = vadd.f32 0.0, %v4546
        %4548 = vmatmul.f32.gmra.mxu0 %v4521
        %v4549 = vpop.f32.mrf.mxu0
        %v4550 = vadd.f32 0.0, %v4549
        %4551 = vdwg.mxu0
        %v4552 = vadd.f32 %v4456, %v4541
        %v4553 = vadd.f32 %v4457, %v4544
        %v4554 = vadd.f32 %v4458, %v4547
        %v4555 = vadd.f32 %v4459, %v4550
        %s4556 = scalar_lea.vmem %s14, 64
        %v4557 = vld [vmem:[%s4556] sm:$0xff]
        %v4558 = vld [vmem:[%s4556 + $0x8] sm:$0xff]
        %v4559 = vld [vmem:[%s4556 + $0x10] sm:$0xff]
        %v4560 = vld [vmem:[%s4556 + $0x18] sm:$0xff]
        %v4562 = vsel %vm2806, %v4557, 0
        %v4565 = vsel %vm2806, %v4558, 0
        %v4568 = vsel %vm2806, %v4559, 0
        %v4571 = vsel %vm2806, %v4560, 0
        %4573 = vmatpush.msra.mxu0 0.0
        %4574 = vmatpush.msra.mxu0 0.0
        %4575 = vmatpush.msra.mxu0 0.0
        %4576 = vmatpush.msra.mxu0 0.0
        %4577 = vmatpush.msra.mxu0 0.0
        %4578 = vmatpush.msra.mxu0 0.0
        %4579 = vmatpush.msra.mxu0 0.0
        %4580 = vmatpush.msra.mxu0 0.0
        %4581 = vmatpush.msra.mxu0 0.0
        %4582 = vmatpush.msra.mxu0 0.0
        %4583 = vmatpush.msra.mxu0 0.0
        %4584 = vmatpush.msra.mxu0 0.0
        %4585 = vmatpush.msra.mxu0 %v4361
        %4586 = vmatpush.msra.mxu0 %v4360
        %4587 = vmatpush.msra.mxu0 %v4359
        %4588 = vmatpush.msra.mxu0 %v4358
        %4589 = vmatmul.f32.gmra.mxu0 %v4562
        %v4590 = vpop.f32.mrf.mxu0
        %v4591 = vadd.f32 0.0, %v4590
        %4592 = vmatmul.f32.gmra.mxu0 %v4565
        %v4593 = vpop.f32.mrf.mxu0
        %v4594 = vadd.f32 0.0, %v4593
        %4595 = vmatmul.f32.gmra.mxu0 %v4568
        %v4596 = vpop.f32.mrf.mxu0
        %v4597 = vadd.f32 0.0, %v4596
        %4598 = vmatmul.f32.gmra.mxu0 %v4571
        %v4599 = vpop.f32.mrf.mxu0
        %v4600 = vadd.f32 0.0, %v4599
        %4601 = vdwg.mxu0
        %s4602 = scalar_lea.vmem %s15, 64
        %v4603 = vld [vmem:[%s4602] sm:$0xff]
        %v4604 = vld [vmem:[%s4602 + $0x8] sm:$0xff]
        %v4605 = vld [vmem:[%s4602 + $0x10] sm:$0xff]
        %v4606 = vld [vmem:[%s4602 + $0x18] sm:$0xff]
        %v4608 = vsel %vm2806, %v4591, 0
        %v4611 = vsel %vm2806, %v4594, 0
        %v4614 = vsel %vm2806, %v4597, 0
        %v4617 = vsel %vm2806, %v4600, 0
        %4619 = vmatpush.msra.mxu0 0.0
        %4620 = vmatpush.msra.mxu0 0.0
        %4621 = vmatpush.msra.mxu0 0.0
        %4622 = vmatpush.msra.mxu0 0.0
        %4623 = vmatpush.msra.mxu0 0.0
        %4624 = vmatpush.msra.mxu0 0.0
        %4625 = vmatpush.msra.mxu0 0.0
        %4626 = vmatpush.msra.mxu0 0.0
        %4627 = vmatpush.msra.mxu0 0.0
        %4628 = vmatpush.msra.mxu0 0.0
        %4629 = vmatpush.msra.mxu0 0.0
        %4630 = vmatpush.msra.mxu0 0.0
        %4631 = vmatpush.msra.mxu0 %v4606
        %4632 = vmatpush.msra.mxu0 %v4605
        %4633 = vmatpush.msra.mxu0 %v4604
        %4634 = vmatpush.msra.mxu0 %v4603
        %4635 = vmatmul.f32.gmra.mxu0 %v4608
        %v4636 = vpop.f32.mrf.mxu0
        %v4637 = vadd.f32 0.0, %v4636
        %4638 = vmatmul.f32.gmra.mxu0 %v4611
        %v4639 = vpop.f32.mrf.mxu0
        %v4640 = vadd.f32 0.0, %v4639
        %4641 = vmatmul.f32.gmra.mxu0 %v4614
        %v4642 = vpop.f32.mrf.mxu0
        %v4643 = vadd.f32 0.0, %v4642
        %4644 = vmatmul.f32.gmra.mxu0 %v4617
        %v4645 = vpop.f32.mrf.mxu0
        %v4646 = vadd.f32 0.0, %v4645
        %4647 = vdwg.mxu0
        %v4648 = vadd.f32 %v4552, %v4637
        %v4649 = vadd.f32 %v4553, %v4640
        %v4650 = vadd.f32 %v4554, %v4643
        %v4651 = vadd.f32 %v4555, %v4646
        %v4652 = vsel %vm2806, %v4648, -inf
        %4653 = vmax.xlane.f32.xlu0 %v4652
        %v4654 = vpop.xlane.xlu0 %4653
        %v4655 = vsel %vm2806, %v4649, -inf
        %4656 = vmax.xlane.f32.xlu0 %v4655
        %v4657 = vpop.xlane.xlu0 %4656
        %v4658 = vsel %vm2806, %v4650, -inf
        %4659 = vmax.xlane.f32.xlu0 %v4658
        %v4660 = vpop.xlane.xlu0 %4659
        %v4661 = vsel %vm2806, %v4651, -inf
        %4662 = vmax.xlane.f32.xlu0 %v4661
        %v4663 = vpop.xlane.xlu0 %4662
        %v4664 = vsub.f32 %v4648, %v4654
        %v4665 = vsub.f32 %v4649, %v4657
        %v4666 = vsub.f32 %v4650, %v4660
        %v4667 = vsub.f32 %v4651, %v4663
        %v4668 = vmul.f32 %v4664, 1.442695
        %v4669 = vpow.pop %v4668
        %v4670 = vmul.f32 %v4665, 1.442695
        %v4671 = vpow.pop %v4670
        %v4672 = vmul.f32 %v4666, 1.442695
        %v4673 = vpow.pop %v4672
        %v4674 = vmul.f32 %v4667, 1.442695
        %v4675 = vpow.pop %v4674
        %v4676 = vsel %vm2806, %v4669, 0.0
        %4677 = vadd.xlane.f32.xlu0 %v4676
        %v4678 = vpop.xlane.xlu0 %4677
        %v4679 = vsel %vm2806, %v4671, 0.0
        %4680 = vadd.xlane.f32.xlu0 %v4679
        %v4681 = vpop.xlane.xlu0 %4680
        %v4682 = vsel %vm2806, %v4673, 0.0
        %4683 = vadd.xlane.f32.xlu0 %v4682
        %v4684 = vpop.xlane.xlu0 %4683
        %v4685 = vsel %vm2806, %v4675, 0.0
        %4686 = vadd.xlane.f32.xlu0 %v4685
        %v4687 = vpop.xlane.xlu0 %4686
        %v4688 = vrcp.pop %v4678
        %v4689 = vmul.f32 %v4678, %v4688
        %v4690 = vsub.f32 1.0, %v4689
        %v4691 = vmul.f32 %v4688, %v4690
        %v4692 = vadd.f32 %v4688, %v4691
        %vm4693 = vweird.f32 %v4678
        %vm4694 = vweird.f32 %v4688
        %vm4695 = vmor %vm4693, %vm4694
        %v4696 = vsel %vm4695, %v4688, %v4692
        %v4697 = vand.u32 2147483647, %v4678
        %vm4698 = vcmp.eq.f32.partialorder %v4697, 8.507059e+37
        %v4699 = vand.u32 %v4678, 2147483648
        %v4700 = vor.u32 1.1754944e-38, %v4699
        %v4701 = vsel %vm4698, %v4700, %v4696
        %v4702 = vmul.f32 %v4669, %v4701
        %v4703 = vrcp.pop %v4681
        %v4704 = vmul.f32 %v4681, %v4703
        %v4705 = vsub.f32 1.0, %v4704
        %v4706 = vmul.f32 %v4703, %v4705
        %v4707 = vadd.f32 %v4703, %v4706
        %vm4708 = vweird.f32 %v4681
        %vm4709 = vweird.f32 %v4703
        %vm4710 = vmor %vm4708, %vm4709
        %v4711 = vsel %vm4710, %v4703, %v4707
        %v4712 = vand.u32 2147483647, %v4681
        %vm4713 = vcmp.eq.f32.partialorder %v4712, 8.507059e+37
        %v4714 = vand.u32 %v4681, 2147483648
        %v4715 = vor.u32 1.1754944e-38, %v4714
        %v4716 = vsel %vm4713, %v4715, %v4711
        %v4717 = vmul.f32 %v4671, %v4716
        %v4718 = vrcp.pop %v4684
        %v4719 = vmul.f32 %v4684, %v4718
        %v4720 = vsub.f32 1.0, %v4719
        %v4721 = vmul.f32 %v4718, %v4720
        %v4722 = vadd.f32 %v4718, %v4721
        %vm4723 = vweird.f32 %v4684
        %vm4724 = vweird.f32 %v4718
        %vm4725 = vmor %vm4723, %vm4724
        %v4726 = vsel %vm4725, %v4718, %v4722
        %v4727 = vand.u32 2147483647, %v4684
        %vm4728 = vcmp.eq.f32.partialorder %v4727, 8.507059e+37
        %v4729 = vand.u32 %v4684, 2147483648
        %v4730 = vor.u32 1.1754944e-38, %v4729
        %v4731 = vsel %vm4728, %v4730, %v4726
        %v4732 = vmul.f32 %v4673, %v4731
        %v4733 = vrcp.pop %v4687
        %v4734 = vmul.f32 %v4687, %v4733
        %v4735 = vsub.f32 1.0, %v4734
        %v4736 = vmul.f32 %v4733, %v4735
        %v4737 = vadd.f32 %v4733, %v4736
        %vm4738 = vweird.f32 %v4687
        %vm4739 = vweird.f32 %v4733
        %vm4740 = vmor %vm4738, %vm4739
        %v4741 = vsel %vm4740, %v4733, %v4737
        %v4742 = vand.u32 2147483647, %v4687
        %vm4743 = vcmp.eq.f32.partialorder %v4742, 8.507059e+37
        %v4744 = vand.u32 %v4687, 2147483648
        %v4745 = vor.u32 1.1754944e-38, %v4744
        %v4746 = vsel %vm4743, %v4745, %v4741
        %v4747 = vmul.f32 %v4675, %v4746
        %v4748 = vld [vmem:[%s17] sm:$0xff]
        %v4749 = vld [vmem:[%s17 + $0x8] sm:$0xff]
        %v4750 = vld [vmem:[%s17 + $0x10] sm:$0xff]
        %v4751 = vld [vmem:[%s17 + $0x18] sm:$0xff]
        %v4753 = vsel %vm2806, %v4702, 0
        %v4756 = vsel %vm2806, %v4717, 0
        %v4759 = vsel %vm2806, %v4732, 0
        %v4762 = vsel %vm2806, %v4747, 0
        %4764 = vmatpush.msra.mxu0 0.0
        %4765 = vmatpush.msra.mxu0 0.0
        %4766 = vmatpush.msra.mxu0 0.0
        %4767 = vmatpush.msra.mxu0 0.0
        %4768 = vmatpush.msra.mxu0 0.0
        %4769 = vmatpush.msra.mxu0 0.0
        %4770 = vmatpush.msra.mxu0 0.0
        %4771 = vmatpush.msra.mxu0 0.0
        %4772 = vmatpush.msra.mxu0 0.0
        %4773 = vmatpush.msra.mxu0 0.0
        %4774 = vmatpush.msra.mxu0 0.0
        %4775 = vmatpush.msra.mxu0 0.0
        %4776 = vmatpush.msra.mxu0 %v4751
        %4777 = vmatpush.msra.mxu0 %v4750
        %4778 = vmatpush.msra.mxu0 %v4749
        %4779 = vmatpush.msra.mxu0 %v4748
        %4780 = vmatmul.f32.gmra.mxu0 %v4753
        %v4781 = vpop.f32.mrf.mxu0
        %v4782 = vadd.f32 0.0, %v4781
        %4783 = vmatmul.f32.gmra.mxu0 %v4756
        %v4784 = vpop.f32.mrf.mxu0
        %v4785 = vadd.f32 0.0, %v4784
        %4786 = vmatmul.f32.gmra.mxu0 %v4759
        %v4787 = vpop.f32.mrf.mxu0
        %v4788 = vadd.f32 0.0, %v4787
        %4789 = vmatmul.f32.gmra.mxu0 %v4762
        %v4790 = vpop.f32.mrf.mxu0
        %v4791 = vadd.f32 0.0, %v4790
        %4792 = vdwg.mxu0
        %v4793 = vld [vmem:[%s1017] sm:$0xff]
        %v4794 = vld [vmem:[%s1017 + $0x8] sm:$0xff]
        %v4795 = vld [vmem:[%s1017 + $0x10] sm:$0xff]
        %v4796 = vld [vmem:[%s1017 + $0x18] sm:$0xff]
        %v4797 = vld [vmem:[%s1017 + $0x20] sm:$0xff]
        %v4798 = vld [vmem:[%s1017 + $0x28] sm:$0xff]
        %v4799 = vld [vmem:[%s1017 + $0x30] sm:$0xff]
        %v4800 = vld [vmem:[%s1017 + $0x38] sm:$0xff]
        %v4801 = vld [vmem:[%s1017 + $0x40] sm:$0xff]
        %v4802 = vld [vmem:[%s1017 + $0x48] sm:$0xff]
        %v4803 = vld [vmem:[%s1017 + $0x50] sm:$0xff]
        %v4804 = vld [vmem:[%s1017 + $0x58] sm:$0xff]
        %v4805 = vld [vmem:[%s1017 + $0x60] sm:$0xff]
        %v4806 = vld [vmem:[%s1017 + $0x68] sm:$0xff]
        %v4807 = vld [vmem:[%s1017 + $0x70] sm:$0xff]
        %v4808 = vld [vmem:[%s1017 + $0x78] sm:$0xff]
        %v4809 = vld [vmem:[%s1017 + $0x80] sm:$0xff]
        %v4810 = vld [vmem:[%s1017 + $0x88] sm:$0xff]
        %v4811 = vld [vmem:[%s1017 + $0x90] sm:$0xff]
        %v4812 = vld [vmem:[%s1017 + $0x98] sm:$0xff]
        %v4813 = vld [vmem:[%s1017 + $0xa0] sm:$0xff]
        %v4814 = vld [vmem:[%s1017 + $0xa8] sm:$0xff]
        %v4815 = vld [vmem:[%s1017 + $0xb0] sm:$0xff]
        %v4816 = vld [vmem:[%s1017 + $0xb8] sm:$0xff]
        %v4817 = vld [vmem:[%s1017 + $0xc0] sm:$0xff]
        %v4818 = vld [vmem:[%s1017 + $0xc8] sm:$0xff]
        %v4819 = vld [vmem:[%s1017 + $0xd0] sm:$0xff]
        %v4820 = vld [vmem:[%s1017 + $0xd8] sm:$0xff]
        %v4821 = vld [vmem:[%s1017 + $0xe0] sm:$0xff]
        %v4822 = vld [vmem:[%s1017 + $0xe8] sm:$0xff]
        %v4823 = vld [vmem:[%s1017 + $0xf0] sm:$0xff]
        %v4824 = vld [vmem:[%s1017 + $0xf8] sm:$0xff]
        %v4825 = vld [vmem:[%s1017 + $0x100] sm:$0xff]
        %v4826 = vld [vmem:[%s1017 + $0x108] sm:$0xff]
        %v4827 = vld [vmem:[%s1017 + $0x110] sm:$0xff]
        %v4828 = vld [vmem:[%s1017 + $0x118] sm:$0xff]
        %v4829 = vld [vmem:[%s1017 + $0x120] sm:$0xff]
        %v4830 = vld [vmem:[%s1017 + $0x128] sm:$0xff]
        %v4831 = vld [vmem:[%s1017 + $0x130] sm:$0xff]
        %v4832 = vld [vmem:[%s1017 + $0x138] sm:$0xff]
        %v4833 = vld [vmem:[%s1017 + $0x140] sm:$0xff]
        %v4834 = vld [vmem:[%s1017 + $0x148] sm:$0xff]
        %v4835 = vld [vmem:[%s1017 + $0x150] sm:$0xff]
        %v4836 = vld [vmem:[%s1017 + $0x158] sm:$0xff]
        %v4837 = vld [vmem:[%s1017 + $0x160] sm:$0xff]
        %v4838 = vld [vmem:[%s1017 + $0x168] sm:$0xff]
        %v4839 = vld [vmem:[%s1017 + $0x170] sm:$0xff]
        %v4840 = vld [vmem:[%s1017 + $0x178] sm:$0xff]
        %v4841 = vld [vmem:[%s1017 + $0x180] sm:$0xff]
        %v4842 = vld [vmem:[%s1017 + $0x188] sm:$0xff]
        %v4843 = vld [vmem:[%s1017 + $0x190] sm:$0xff]
        %v4844 = vld [vmem:[%s1017 + $0x198] sm:$0xff]
        %v4845 = vld [vmem:[%s1017 + $0x1a0] sm:$0xff]
        %v4846 = vld [vmem:[%s1017 + $0x1a8] sm:$0xff]
        %v4847 = vld [vmem:[%s1017 + $0x1b0] sm:$0xff]
        %v4848 = vld [vmem:[%s1017 + $0x1b8] sm:$0xff]
        %v4849 = vld [vmem:[%s1017 + $0x1c0] sm:$0xff]
        %v4850 = vld [vmem:[%s1017 + $0x1c8] sm:$0xff]
        %v4851 = vld [vmem:[%s1017 + $0x1d0] sm:$0xff]
        %v4852 = vld [vmem:[%s1017 + $0x1d8] sm:$0xff]
        %v4853 = vld [vmem:[%s1017 + $0x1e0] sm:$0xff]
        %v4854 = vld [vmem:[%s1017 + $0x1e8] sm:$0xff]
        %v4855 = vld [vmem:[%s1017 + $0x1f0] sm:$0xff]
        %v4856 = vld [vmem:[%s1017 + $0x1f8] sm:$0xff]
        %v4858 = vsel %vm1167, %v4782, 0
        %v4861 = vsel %vm1167, %v4785, 0
        %v4864 = vsel %vm1167, %v4788, 0
        %v4867 = vsel %vm1167, %v4791, 0
        %4869 = vmatpush.msra.mxu0 0.0
        %4870 = vmatpush.msra.mxu0 0.0
        %4871 = vmatpush.msra.mxu0 0.0
        %4872 = vmatpush.msra.mxu0 0.0
        %4873 = vmatpush.msra.mxu0 0.0
        %4874 = vmatpush.msra.mxu0 0.0
        %4875 = vmatpush.msra.mxu0 0.0
        %4876 = vmatpush.msra.mxu0 0.0
        %4877 = vmatpush.msra.mxu0 %v4849
        %4878 = vmatpush.msra.mxu0 %v4841
        %4879 = vmatpush.msra.mxu0 %v4833
        %4880 = vmatpush.msra.mxu0 %v4825
        %4881 = vmatpush.msra.mxu0 %v4817
        %4882 = vmatpush.msra.mxu0 %v4809
        %4883 = vmatpush.msra.mxu0 %v4801
        %4884 = vmatpush.msra.mxu0 %v4793
        %4885 = vmatmul.f32.gmra.mxu0 %v4858
        %v4886 = vpop.f32.mrf.mxu0
        %v4887 = vadd.f32 0.0, %v4886
        %4888 = vmatmul.f32.gmra.mxu0 %v4861
        %v4889 = vpop.f32.mrf.mxu0
        %v4890 = vadd.f32 0.0, %v4889
        %4891 = vmatmul.f32.gmra.mxu0 %v4864
        %v4892 = vpop.f32.mrf.mxu0
        %v4893 = vadd.f32 0.0, %v4892
        %4894 = vmatmul.f32.gmra.mxu0 %v4867
        %v4895 = vpop.f32.mrf.mxu0
        %v4896 = vadd.f32 0.0, %v4895
        %4897 = vdwg.mxu0
        %4898 = vmatpush.msra.mxu0 0.0
        %4899 = vmatpush.msra.mxu0 0.0
        %4900 = vmatpush.msra.mxu0 0.0
        %4901 = vmatpush.msra.mxu0 0.0
        %4902 = vmatpush.msra.mxu0 0.0
        %4903 = vmatpush.msra.mxu0 0.0
        %4904 = vmatpush.msra.mxu0 0.0
        %4905 = vmatpush.msra.mxu0 0.0
        %4906 = vmatpush.msra.mxu0 %v4850
        %4907 = vmatpush.msra.mxu0 %v4842
        %4908 = vmatpush.msra.mxu0 %v4834
        %4909 = vmatpush.msra.mxu0 %v4826
        %4910 = vmatpush.msra.mxu0 %v4818
        %4911 = vmatpush.msra.mxu0 %v4810
        %4912 = vmatpush.msra.mxu0 %v4802
        %4913 = vmatpush.msra.mxu0 %v4794
        %4914 = vmatmul.f32.gmra.mxu0 %v4858
        %v4915 = vpop.f32.mrf.mxu0
        %v4916 = vadd.f32 0.0, %v4915
        %4917 = vmatmul.f32.gmra.mxu0 %v4861
        %v4918 = vpop.f32.mrf.mxu0
        %v4919 = vadd.f32 0.0, %v4918
        %4920 = vmatmul.f32.gmra.mxu0 %v4864
        %v4921 = vpop.f32.mrf.mxu0
        %v4922 = vadd.f32 0.0, %v4921
        %4923 = vmatmul.f32.gmra.mxu0 %v4867
        %v4924 = vpop.f32.mrf.mxu0
        %v4925 = vadd.f32 0.0, %v4924
        %4926 = vdwg.mxu0
        %4927 = vmatpush.msra.mxu0 0.0
        %4928 = vmatpush.msra.mxu0 0.0
        %4929 = vmatpush.msra.mxu0 0.0
        %4930 = vmatpush.msra.mxu0 0.0
        %4931 = vmatpush.msra.mxu0 0.0
        %4932 = vmatpush.msra.mxu0 0.0
        %4933 = vmatpush.msra.mxu0 0.0
        %4934 = vmatpush.msra.mxu0 0.0
        %4935 = vmatpush.msra.mxu0 %v4851
        %4936 = vmatpush.msra.mxu0 %v4843
        %4937 = vmatpush.msra.mxu0 %v4835
        %4938 = vmatpush.msra.mxu0 %v4827
        %4939 = vmatpush.msra.mxu0 %v4819
        %4940 = vmatpush.msra.mxu0 %v4811
        %4941 = vmatpush.msra.mxu0 %v4803
        %4942 = vmatpush.msra.mxu0 %v4795
        %4943 = vmatmul.f32.gmra.mxu0 %v4858
        %v4944 = vpop.f32.mrf.mxu0
        %v4945 = vadd.f32 0.0, %v4944
        %4946 = vmatmul.f32.gmra.mxu0 %v4861
        %v4947 = vpop.f32.mrf.mxu0
        %v4948 = vadd.f32 0.0, %v4947
        %4949 = vmatmul.f32.gmra.mxu0 %v4864
        %v4950 = vpop.f32.mrf.mxu0
        %v4951 = vadd.f32 0.0, %v4950
        %4952 = vmatmul.f32.gmra.mxu0 %v4867
        %v4953 = vpop.f32.mrf.mxu0
        %v4954 = vadd.f32 0.0, %v4953
        %4955 = vdwg.mxu0
        %4956 = vmatpush.msra.mxu0 0.0
        %4957 = vmatpush.msra.mxu0 0.0
        %4958 = vmatpush.msra.mxu0 0.0
        %4959 = vmatpush.msra.mxu0 0.0
        %4960 = vmatpush.msra.mxu0 0.0
        %4961 = vmatpush.msra.mxu0 0.0
        %4962 = vmatpush.msra.mxu0 0.0
        %4963 = vmatpush.msra.mxu0 0.0
        %4964 = vmatpush.msra.mxu0 %v4852
        %4965 = vmatpush.msra.mxu0 %v4844
        %4966 = vmatpush.msra.mxu0 %v4836
        %4967 = vmatpush.msra.mxu0 %v4828
        %4968 = vmatpush.msra.mxu0 %v4820
        %4969 = vmatpush.msra.mxu0 %v4812
        %4970 = vmatpush.msra.mxu0 %v4804
        %4971 = vmatpush.msra.mxu0 %v4796
        %4972 = vmatmul.f32.gmra.mxu0 %v4858
        %v4973 = vpop.f32.mrf.mxu0
        %v4974 = vadd.f32 0.0, %v4973
        %4975 = vmatmul.f32.gmra.mxu0 %v4861
        %v4976 = vpop.f32.mrf.mxu0
        %v4977 = vadd.f32 0.0, %v4976
        %4978 = vmatmul.f32.gmra.mxu0 %v4864
        %v4979 = vpop.f32.mrf.mxu0
        %v4980 = vadd.f32 0.0, %v4979
        %4981 = vmatmul.f32.gmra.mxu0 %v4867
        %v4982 = vpop.f32.mrf.mxu0
        %v4983 = vadd.f32 0.0, %v4982
        %4984 = vdwg.mxu0
        %4985 = vmatpush.msra.mxu0 0.0
        %4986 = vmatpush.msra.mxu0 0.0
        %4987 = vmatpush.msra.mxu0 0.0
        %4988 = vmatpush.msra.mxu0 0.0
        %4989 = vmatpush.msra.mxu0 0.0
        %4990 = vmatpush.msra.mxu0 0.0
        %4991 = vmatpush.msra.mxu0 0.0
        %4992 = vmatpush.msra.mxu0 0.0
        %4993 = vmatpush.msra.mxu0 %v4853
        %4994 = vmatpush.msra.mxu0 %v4845
        %4995 = vmatpush.msra.mxu0 %v4837
        %4996 = vmatpush.msra.mxu0 %v4829
        %4997 = vmatpush.msra.mxu0 %v4821
        %4998 = vmatpush.msra.mxu0 %v4813
        %4999 = vmatpush.msra.mxu0 %v4805
        %5000 = vmatpush.msra.mxu0 %v4797
        %5001 = vmatmul.f32.gmra.mxu0 %v4858
        %v5002 = vpop.f32.mrf.mxu0
        %v5003 = vadd.f32 0.0, %v5002
        %5004 = vmatmul.f32.gmra.mxu0 %v4861
        %v5005 = vpop.f32.mrf.mxu0
        %v5006 = vadd.f32 0.0, %v5005
        %5007 = vmatmul.f32.gmra.mxu0 %v4864
        %v5008 = vpop.f32.mrf.mxu0
        %v5009 = vadd.f32 0.0, %v5008
        %5010 = vmatmul.f32.gmra.mxu0 %v4867
        %v5011 = vpop.f32.mrf.mxu0
        %v5012 = vadd.f32 0.0, %v5011
        %5013 = vdwg.mxu0
        %5014 = vmatpush.msra.mxu0 0.0
        %5015 = vmatpush.msra.mxu0 0.0
        %5016 = vmatpush.msra.mxu0 0.0
        %5017 = vmatpush.msra.mxu0 0.0
        %5018 = vmatpush.msra.mxu0 0.0
        %5019 = vmatpush.msra.mxu0 0.0
        %5020 = vmatpush.msra.mxu0 0.0
        %5021 = vmatpush.msra.mxu0 0.0
        %5022 = vmatpush.msra.mxu0 %v4854
        %5023 = vmatpush.msra.mxu0 %v4846
        %5024 = vmatpush.msra.mxu0 %v4838
        %5025 = vmatpush.msra.mxu0 %v4830
        %5026 = vmatpush.msra.mxu0 %v4822
        %5027 = vmatpush.msra.mxu0 %v4814
        %5028 = vmatpush.msra.mxu0 %v4806
        %5029 = vmatpush.msra.mxu0 %v4798
        %5030 = vmatmul.f32.gmra.mxu0 %v4858
        %v5031 = vpop.f32.mrf.mxu0
        %v5032 = vadd.f32 0.0, %v5031
        %5033 = vmatmul.f32.gmra.mxu0 %v4861
        %v5034 = vpop.f32.mrf.mxu0
        %v5035 = vadd.f32 0.0, %v5034
        %5036 = vmatmul.f32.gmra.mxu0 %v4864
        %v5037 = vpop.f32.mrf.mxu0
        %v5038 = vadd.f32 0.0, %v5037
        %5039 = vmatmul.f32.gmra.mxu0 %v4867
        %v5040 = vpop.f32.mrf.mxu0
        %v5041 = vadd.f32 0.0, %v5040
        %5042 = vdwg.mxu0
        %5043 = vmatpush.msra.mxu0 0.0
        %5044 = vmatpush.msra.mxu0 0.0
        %5045 = vmatpush.msra.mxu0 0.0
        %5046 = vmatpush.msra.mxu0 0.0
        %5047 = vmatpush.msra.mxu0 0.0
        %5048 = vmatpush.msra.mxu0 0.0
        %5049 = vmatpush.msra.mxu0 0.0
        %5050 = vmatpush.msra.mxu0 0.0
        %5051 = vmatpush.msra.mxu0 %v4855
        %5052 = vmatpush.msra.mxu0 %v4847
        %5053 = vmatpush.msra.mxu0 %v4839
        %5054 = vmatpush.msra.mxu0 %v4831
        %5055 = vmatpush.msra.mxu0 %v4823
        %5056 = vmatpush.msra.mxu0 %v4815
        %5057 = vmatpush.msra.mxu0 %v4807
        %5058 = vmatpush.msra.mxu0 %v4799
        %5059 = vmatmul.f32.gmra.mxu0 %v4858
        %v5060 = vpop.f32.mrf.mxu0
        %v5061 = vadd.f32 0.0, %v5060
        %5062 = vmatmul.f32.gmra.mxu0 %v4861
        %v5063 = vpop.f32.mrf.mxu0
        %v5064 = vadd.f32 0.0, %v5063
        %5065 = vmatmul.f32.gmra.mxu0 %v4864
        %v5066 = vpop.f32.mrf.mxu0
        %v5067 = vadd.f32 0.0, %v5066
        %5068 = vmatmul.f32.gmra.mxu0 %v4867
        %v5069 = vpop.f32.mrf.mxu0
        %v5070 = vadd.f32 0.0, %v5069
        %5071 = vdwg.mxu0
        %5072 = vmatpush.msra.mxu0 0.0
        %5073 = vmatpush.msra.mxu0 0.0
        %5074 = vmatpush.msra.mxu0 0.0
        %5075 = vmatpush.msra.mxu0 0.0
        %5076 = vmatpush.msra.mxu0 0.0
        %5077 = vmatpush.msra.mxu0 0.0
        %5078 = vmatpush.msra.mxu0 0.0
        %5079 = vmatpush.msra.mxu0 0.0
        %5080 = vmatpush.msra.mxu0 %v4856
        %5081 = vmatpush.msra.mxu0 %v4848
        %5082 = vmatpush.msra.mxu0 %v4840
        %5083 = vmatpush.msra.mxu0 %v4832
        %5084 = vmatpush.msra.mxu0 %v4824
        %5085 = vmatpush.msra.mxu0 %v4816
        %5086 = vmatpush.msra.mxu0 %v4808
        %5087 = vmatpush.msra.mxu0 %v4800
        %5088 = vmatmul.f32.gmra.mxu0 %v4858
        %v5089 = vpop.f32.mrf.mxu0
        %v5090 = vadd.f32 0.0, %v5089
        %5091 = vmatmul.f32.gmra.mxu0 %v4861
        %v5092 = vpop.f32.mrf.mxu0
        %v5093 = vadd.f32 0.0, %v5092
        %5094 = vmatmul.f32.gmra.mxu0 %v4864
        %v5095 = vpop.f32.mrf.mxu0
        %v5096 = vadd.f32 0.0, %v5095
        %5097 = vmatmul.f32.gmra.mxu0 %v4867
        %v5098 = vpop.f32.mrf.mxu0
        %v5099 = vadd.f32 0.0, %v5098
        %5100 = vdwg.mxu0
        %v5101 = vld [vmem:[%s1024] sm:$0xff]
        %v5102 = vld [vmem:[%s1024 + $0x8] sm:$0xff]
        %v5103 = vld [vmem:[%s1024 + $0x10] sm:$0xff]
        %v5104 = vld [vmem:[%s1024 + $0x18] sm:$0xff]
        %v5105 = vld [vmem:[%s1024 + $0x20] sm:$0xff]
        %v5106 = vld [vmem:[%s1024 + $0x28] sm:$0xff]
        %v5107 = vld [vmem:[%s1024 + $0x30] sm:$0xff]
        %v5108 = vld [vmem:[%s1024 + $0x38] sm:$0xff]
        %v5109 = vld [vmem:[%s1024 + $0x40] sm:$0xff]
        %v5110 = vld [vmem:[%s1024 + $0x48] sm:$0xff]
        %v5111 = vld [vmem:[%s1024 + $0x50] sm:$0xff]
        %v5112 = vld [vmem:[%s1024 + $0x58] sm:$0xff]
        %v5113 = vld [vmem:[%s1024 + $0x60] sm:$0xff]
        %v5114 = vld [vmem:[%s1024 + $0x68] sm:$0xff]
        %v5115 = vld [vmem:[%s1024 + $0x70] sm:$0xff]
        %v5116 = vld [vmem:[%s1024 + $0x78] sm:$0xff]
        %v5117 = vld [vmem:[%s1024 + $0x80] sm:$0xff]
        %v5118 = vld [vmem:[%s1024 + $0x88] sm:$0xff]
        %v5119 = vld [vmem:[%s1024 + $0x90] sm:$0xff]
        %v5120 = vld [vmem:[%s1024 + $0x98] sm:$0xff]
        %v5121 = vld [vmem:[%s1024 + $0xa0] sm:$0xff]
        %v5122 = vld [vmem:[%s1024 + $0xa8] sm:$0xff]
        %v5123 = vld [vmem:[%s1024 + $0xb0] sm:$0xff]
        %v5124 = vld [vmem:[%s1024 + $0xb8] sm:$0xff]
        %v5125 = vld [vmem:[%s1024 + $0xc0] sm:$0xff]
        %v5126 = vld [vmem:[%s1024 + $0xc8] sm:$0xff]
        %v5127 = vld [vmem:[%s1024 + $0xd0] sm:$0xff]
        %v5128 = vld [vmem:[%s1024 + $0xd8] sm:$0xff]
        %v5129 = vld [vmem:[%s1024 + $0xe0] sm:$0xff]
        %v5130 = vld [vmem:[%s1024 + $0xe8] sm:$0xff]
        %v5131 = vld [vmem:[%s1024 + $0xf0] sm:$0xff]
        %v5132 = vld [vmem:[%s1024 + $0xf8] sm:$0xff]
        %v5133 = vmul.f32 %v4887, %v5101
        %v5134 = vmul.f32 %v4916, %v5102
        %v5135 = vmul.f32 %v4945, %v5103
        %v5136 = vmul.f32 %v4974, %v5104
        %v5137 = vmul.f32 %v5003, %v5105
        %v5138 = vmul.f32 %v5032, %v5106
        %v5139 = vmul.f32 %v5061, %v5107
        %v5140 = vmul.f32 %v5090, %v5108
        %v5141 = vmul.f32 %v4890, %v5109
        %v5142 = vmul.f32 %v4919, %v5110
        %v5143 = vmul.f32 %v4948, %v5111
        %v5144 = vmul.f32 %v4977, %v5112
        %v5145 = vmul.f32 %v5006, %v5113
        %v5146 = vmul.f32 %v5035, %v5114
        %v5147 = vmul.f32 %v5064, %v5115
        %v5148 = vmul.f32 %v5093, %v5116
        %v5149 = vmul.f32 %v4893, %v5117
        %v5150 = vmul.f32 %v4922, %v5118
        %v5151 = vmul.f32 %v4951, %v5119
        %v5152 = vmul.f32 %v4980, %v5120
        %v5153 = vmul.f32 %v5009, %v5121
        %v5154 = vmul.f32 %v5038, %v5122
        %v5155 = vmul.f32 %v5067, %v5123
        %v5156 = vmul.f32 %v5096, %v5124
        %v5157 = vmul.f32 %v4896, %v5125
        %v5158 = vmul.f32 %v4925, %v5126
        %v5159 = vmul.f32 %v4954, %v5127
        %v5160 = vmul.f32 %v4983, %v5128
        %v5161 = vmul.f32 %v5012, %v5129
        %v5162 = vmul.f32 %v5041, %v5130
        %v5163 = vmul.f32 %v5070, %v5131
        %v5164 = vmul.f32 %v5099, %v5132
        %v5165 = vld [vmem:[%s18] sm:$0x3]
        %v5167 = vsel %vm2806, %v5165, 0
        %5169 = vmatpush.msra.mxu0 0.0
        %5170 = vmatpush.msra.mxu0 0.0
        %5171 = vmatpush.msra.mxu0 0.0
        %5172 = vmatpush.msra.mxu0 0.0
        %5173 = vmatpush.msra.mxu0 0.0
        %5174 = vmatpush.msra.mxu0 0.0
        %5175 = vmatpush.msra.mxu0 0.0
        %5176 = vmatpush.msra.mxu0 0.0
        %5177 = vmatpush.msra.mxu0 0.0
        %5178 = vmatpush.msra.mxu0 0.0
        %5179 = vmatpush.msra.mxu0 0.0
        %5180 = vmatpush.msra.mxu0 0.0
        %5181 = vmatpush.msra.mxu0 %v5157
        %5182 = vmatpush.msra.mxu0 %v5149
        %5183 = vmatpush.msra.mxu0 %v5141
        %5184 = vmatpush.msra.mxu0 %v5133
        %5185 = vmatmul.f32.gmra.mxu0 %v5167
        %v5186 = vpop.f32.mrf.mxu0
        %v5187 = vadd.f32 0.0, %v5186
        %5188 = vdwg.mxu0
        %5189 = vmatpush.msra.mxu0 0.0
        %5190 = vmatpush.msra.mxu0 0.0
        %5191 = vmatpush.msra.mxu0 0.0
        %5192 = vmatpush.msra.mxu0 0.0
        %5193 = vmatpush.msra.mxu0 0.0
        %5194 = vmatpush.msra.mxu0 0.0
        %5195 = vmatpush.msra.mxu0 0.0
        %5196 = vmatpush.msra.mxu0 0.0
        %5197 = vmatpush.msra.mxu0 0.0
        %5198 = vmatpush.msra.mxu0 0.0
        %5199 = vmatpush.msra.mxu0 0.0
        %5200 = vmatpush.msra.mxu0 0.0
        %5201 = vmatpush.msra.mxu0 %v5158
        %5202 = vmatpush.msra.mxu0 %v5150
        %5203 = vmatpush.msra.mxu0 %v5142
        %5204 = vmatpush.msra.mxu0 %v5134
        %5205 = vmatmul.f32.gmra.mxu0 %v5167
        %v5206 = vpop.f32.mrf.mxu0
        %v5207 = vadd.f32 0.0, %v5206
        %5208 = vdwg.mxu0
        %5209 = vmatpush.msra.mxu0 0.0
        %5210 = vmatpush.msra.mxu0 0.0
        %5211 = vmatpush.msra.mxu0 0.0
        %5212 = vmatpush.msra.mxu0 0.0
        %5213 = vmatpush.msra.mxu0 0.0
        %5214 = vmatpush.msra.mxu0 0.0
        %5215 = vmatpush.msra.mxu0 0.0
        %5216 = vmatpush.msra.mxu0 0.0
        %5217 = vmatpush.msra.mxu0 0.0
        %5218 = vmatpush.msra.mxu0 0.0
        %5219 = vmatpush.msra.mxu0 0.0
        %5220 = vmatpush.msra.mxu0 0.0
        %5221 = vmatpush.msra.mxu0 %v5159
        %5222 = vmatpush.msra.mxu0 %v5151
        %5223 = vmatpush.msra.mxu0 %v5143
        %5224 = vmatpush.msra.mxu0 %v5135
        %5225 = vmatmul.f32.gmra.mxu0 %v5167
        %v5226 = vpop.f32.mrf.mxu0
        %v5227 = vadd.f32 0.0, %v5226
        %5228 = vdwg.mxu0
        %5229 = vmatpush.msra.mxu0 0.0
        %5230 = vmatpush.msra.mxu0 0.0
        %5231 = vmatpush.msra.mxu0 0.0
        %5232 = vmatpush.msra.mxu0 0.0
        %5233 = vmatpush.msra.mxu0 0.0
        %5234 = vmatpush.msra.mxu0 0.0
        %5235 = vmatpush.msra.mxu0 0.0
        %5236 = vmatpush.msra.mxu0 0.0
        %5237 = vmatpush.msra.mxu0 0.0
        %5238 = vmatpush.msra.mxu0 0.0
        %5239 = vmatpush.msra.mxu0 0.0
        %5240 = vmatpush.msra.mxu0 0.0
        %5241 = vmatpush.msra.mxu0 %v5160
        %5242 = vmatpush.msra.mxu0 %v5152
        %5243 = vmatpush.msra.mxu0 %v5144
        %5244 = vmatpush.msra.mxu0 %v5136
        %5245 = vmatmul.f32.gmra.mxu0 %v5167
        %v5246 = vpop.f32.mrf.mxu0
        %v5247 = vadd.f32 0.0, %v5246
        %5248 = vdwg.mxu0
        %5249 = vmatpush.msra.mxu0 0.0
        %5250 = vmatpush.msra.mxu0 0.0
        %5251 = vmatpush.msra.mxu0 0.0
        %5252 = vmatpush.msra.mxu0 0.0
        %5253 = vmatpush.msra.mxu0 0.0
        %5254 = vmatpush.msra.mxu0 0.0
        %5255 = vmatpush.msra.mxu0 0.0
        %5256 = vmatpush.msra.mxu0 0.0
        %5257 = vmatpush.msra.mxu0 0.0
        %5258 = vmatpush.msra.mxu0 0.0
        %5259 = vmatpush.msra.mxu0 0.0
        %5260 = vmatpush.msra.mxu0 0.0
        %5261 = vmatpush.msra.mxu0 %v5161
        %5262 = vmatpush.msra.mxu0 %v5153
        %5263 = vmatpush.msra.mxu0 %v5145
        %5264 = vmatpush.msra.mxu0 %v5137
        %5265 = vmatmul.f32.gmra.mxu0 %v5167
        %v5266 = vpop.f32.mrf.mxu0
        %v5267 = vadd.f32 0.0, %v5266
        %5268 = vdwg.mxu0
        %5269 = vmatpush.msra.mxu0 0.0
        %5270 = vmatpush.msra.mxu0 0.0
        %5271 = vmatpush.msra.mxu0 0.0
        %5272 = vmatpush.msra.mxu0 0.0
        %5273 = vmatpush.msra.mxu0 0.0
        %5274 = vmatpush.msra.mxu0 0.0
        %5275 = vmatpush.msra.mxu0 0.0
        %5276 = vmatpush.msra.mxu0 0.0
        %5277 = vmatpush.msra.mxu0 0.0
        %5278 = vmatpush.msra.mxu0 0.0
        %5279 = vmatpush.msra.mxu0 0.0
        %5280 = vmatpush.msra.mxu0 0.0
        %5281 = vmatpush.msra.mxu0 %v5162
        %5282 = vmatpush.msra.mxu0 %v5154
        %5283 = vmatpush.msra.mxu0 %v5146
        %5284 = vmatpush.msra.mxu0 %v5138
        %5285 = vmatmul.f32.gmra.mxu0 %v5167
        %v5286 = vpop.f32.mrf.mxu0
        %v5287 = vadd.f32 0.0, %v5286
        %5288 = vdwg.mxu0
        %5289 = vmatpush.msra.mxu0 0.0
        %5290 = vmatpush.msra.mxu0 0.0
        %5291 = vmatpush.msra.mxu0 0.0
        %5292 = vmatpush.msra.mxu0 0.0
        %5293 = vmatpush.msra.mxu0 0.0
        %5294 = vmatpush.msra.mxu0 0.0
        %5295 = vmatpush.msra.mxu0 0.0
        %5296 = vmatpush.msra.mxu0 0.0
        %5297 = vmatpush.msra.mxu0 0.0
        %5298 = vmatpush.msra.mxu0 0.0
        %5299 = vmatpush.msra.mxu0 0.0
        %5300 = vmatpush.msra.mxu0 0.0
        %5301 = vmatpush.msra.mxu0 %v5163
        %5302 = vmatpush.msra.mxu0 %v5155
        %5303 = vmatpush.msra.mxu0 %v5147
        %5304 = vmatpush.msra.mxu0 %v5139
        %5305 = vmatmul.f32.gmra.mxu0 %v5167
        %v5306 = vpop.f32.mrf.mxu0
        %v5307 = vadd.f32 0.0, %v5306
        %5308 = vdwg.mxu0
        %5309 = vmatpush.msra.mxu0 0.0
        %5310 = vmatpush.msra.mxu0 0.0
        %5311 = vmatpush.msra.mxu0 0.0
        %5312 = vmatpush.msra.mxu0 0.0
        %5313 = vmatpush.msra.mxu0 0.0
        %5314 = vmatpush.msra.mxu0 0.0
        %5315 = vmatpush.msra.mxu0 0.0
        %5316 = vmatpush.msra.mxu0 0.0
        %5317 = vmatpush.msra.mxu0 0.0
        %5318 = vmatpush.msra.mxu0 0.0
        %5319 = vmatpush.msra.mxu0 0.0
        %5320 = vmatpush.msra.mxu0 0.0
        %5321 = vmatpush.msra.mxu0 %v5164
        %5322 = vmatpush.msra.mxu0 %v5156
        %5323 = vmatpush.msra.mxu0 %v5148
        %5324 = vmatpush.msra.mxu0 %v5140
        %5325 = vmatmul.f32.gmra.mxu0 %v5167
        %v5326 = vpop.f32.mrf.mxu0
        %v5327 = vadd.f32 0.0, %v5326
        %5328 = vdwg.mxu0
        %v5337 = vrot.slane %v5207, 6
        %v5338 = vrot.slane %v5227, 4
        %v5339 = vrot.slane %v5247, 2
        %v5340 = vrot.slane %v5287, 6
        %v5341 = vrot.slane %v5307, 4
        %v5342 = vrot.slane %v5327, 2
        %v5343 = vsel %vm4046, %v5187, %v5337
        %v5344 = vsel %vm4048, %v5338, %v5339
        %v5345 = vsel %vm1363, %v5343, %v5344
        %v5346 = vsel %vm4046, %v5267, %v5340
        %v5347 = vsel %vm4048, %v5341, %v5342
        %v5348 = vsel %vm1363, %v5346, %v5347
        %5351 = vst [vmem:[%s1133] sm:$0xff] %v5345
        %5352 = vst [vmem:[%s1133 + $0x8] sm:$0xff] %v5348
        %p5353 = scmp.lt.s32.totalorder %s41, 1
        %s5354 = scalar_select %p5353, %s41, 1
        %s5355 = smul.addr %s5354, 2
        %s5356 = scalar_lea.vmem %s23, %s5355
        %s5357 = smul.u32 8, %s41
        %p5358 = scmp.lt.s32.totalorder %s5357, 15
        %s5359 = scalar_select %p5358, %s5357, 15
        %s5360 = smul.addr %s5359, 2
        %s5361 = scalar_lea.vmem %s24, %s5360
        %s5362 = smul.u32 8, %s41
        %p5363 = scmp.lt.s32.totalorder %s5362, 15
        %s5364 = scalar_select %p5363, %s5362, 15
        %s5365 = smul.addr %s5364, 2
        %s5366 = scalar_lea.vmem %s25, %s5365
        // Predicated region
        $region171: #{segment_generator_forward.1} parent=149 // pred_check
          %p5367 = pneg %p562
        $region172: #{segment_generator_forward.1} parent=149 // pred_check_branch
          %5369 = sbr.rel (%p5367) target = $region174
        $region173: #{segment_generator_forward.1} parent=149 // pred_region
          _
        $region174: #{segment_generator_forward.1} parent=149 // pred_fallthru
          _
        // Predicated region
        $region175: #{segment_generator_forward.1} parent=149 // pred_check
          %p5370 = pneg %p588
        $region176: #{segment_generator_forward.1} parent=149 // pred_check_branch
          %5372 = sbr.rel (%p5370) target = $region178
        $region177: #{segment_generator_forward.1} parent=149 // pred_region
          %s5373 = smul.u32 8, %s41
        $region178: #{segment_generator_forward.1} parent=149 // pred_fallthru
          _
        // Predicated region
        $region179: #{segment_generator_forward.1} parent=149 // pred_check
          %p5374 = pneg %p614
        $region180: #{segment_generator_forward.1} parent=149 // pred_check_branch
          %5376 = sbr.rel (%p5374) target = $region182
        $region181: #{segment_generator_forward.1} parent=149 // pred_region
          %s5377 = smul.u32 8, %s41
        $region182: #{segment_generator_forward.1} parent=149 // pred_fallthru
          _
      $region150: #{segment_generator_forward.1} parent=5 // pred_fallthru
        _
      %p5378 = scmp.le.s32.totalorder 2, %s36
      // Predicated region
      $region183: #{segment_generator_forward.1} parent=5 // pred_check
        %p5379 = pneg %p5378
      $region184: #{segment_generator_forward.1} parent=5 // pred_check_branch
        %5381 = sbr.rel (%p5379) target = $region186
      $region185: #{segment_generator_forward.1} parent=5 // pred_region
        %s5382 = ssub.s32 %s36, 2
        // Predicated region
        $region187: #{segment_generator_forward.1} parent=185 // pred_check
          %p5383 = pneg %p568
        $region188: #{segment_generator_forward.1} parent=185 // pred_check_branch
          %5385 = sbr.rel (%p5383) target = $region190
        $region189: #{segment_generator_forward.1} parent=185 // pred_region
          %p5386 = scmp.lt.s32.totalorder %s42, 1
          %s5387 = scalar_select %p5386, %s42, 1
          %s5388 = smul.addr %s5387, 2
          %s5389 = scalar_lea.vmem %s23, %s5388
        $region190: #{segment_generator_forward.1} parent=185 // pred_fallthru
          _
        // Predicated region
        $region191: #{segment_generator_forward.1} parent=185 // pred_check
          %p5390 = pneg %p594
        $region192: #{segment_generator_forward.1} parent=185 // pred_check_branch
          %5392 = sbr.rel (%p5390) target = $region194
        $region193: #{segment_generator_forward.1} parent=185 // pred_region
          %s5393 = smul.u32 8, %s42
          %p5394 = scmp.lt.s32.totalorder %s5393, 15
          %s5395 = scalar_select %p5394, %s5393, 15
          %s5396 = smul.addr %s5395, 2
          %s5397 = scalar_lea.vmem %s24, %s5396
        $region194: #{segment_generator_forward.1} parent=185 // pred_fallthru
          _
        // Predicated region
        $region195: #{segment_generator_forward.1} parent=185 // pred_check
          %p5398 = pneg %p620
        $region196: #{segment_generator_forward.1} parent=185 // pred_check_branch
          %5400 = sbr.rel (%p5398) target = $region198
        $region197: #{segment_generator_forward.1} parent=185 // pred_region
          %s5401 = smul.u32 8, %s42
          %p5402 = scmp.lt.s32.totalorder %s5401, 15
          %s5403 = scalar_select %p5402, %s5401, 15
          %s5404 = smul.addr %s5403, 2
          %s5405 = scalar_lea.vmem %s25, %s5404
        $region198: #{segment_generator_forward.1} parent=185 // pred_fallthru
          _
      $region186: #{segment_generator_forward.1} parent=5 // pred_fallthru
        _
    $region6: #{segment_generator_forward.1} parent=1 // loop_footer
      %s40 = sadd.s32 1, %s36
    $region7: #{segment_generator_forward.1} parent=1 // loop_footer_branch
      %35 = sbr.rel target = $region3
    $region8: #{segment_generator_forward.1} parent=1 // loop_exit
      _
    %5406 = vsyncpa [#allocation4], 1
    %s5407 = scalar_lea.sflag [#allocation4], 1
    %5408 = vsyncpa %s5407, 1
    %5409 = vsyncpa [#allocation6], 1

// kernel: reverse.3
$region0: #{reverse.3}
  %s0 = inlined_call_operand.vmem [shape: f32[2,2048], index: 0, kind: input, shape index: {}]
  %s1 = inlined_call_operand.vmem [shape: f32[2,2048], index: 1, kind: output, shape index: {}]
  %v2 = vlaneseq
  %v3 = vsub.s32 127, %v2
  %4 = vset.pattern.permute.xlu0 %v3
  $region1: #{reverse.3} parent=0
    #allocation0 [shape = 'u8[4096]{0}', space=vmem, size = 0x1000, scoped, tag = 'operand span for operand 0']
    #allocation1 [shape = 'u8[2048]{0}', space=vmem, size = 0x800, scoped, tag = 'packed  for operand 0']
    #allocation2 [shape = 'u8[4096]{0}', space=vmem, size = 0x1000, scoped, tag = 'operand span for operand 1']
    #allocation3 [shape = 'u8[2048]{0}', space=vmem, size = 0x800, scoped, tag = 'packed  for operand 1']
    loop: start=0, step=1, limit=18
    $region2: #{reverse.3} parent=1 // loop_pre_header
      _
    $region3: #{reverse.3} parent=1 // loop_header
      %s6 = sphi 0, %s10
      %p7 = scmp.ge.s32.totalorder %s6, 18
      %s13 = sphi 0, %s25
      %s14 = sphi 0, %s21
      %s15 = sphi 0, %s13
      %s16 = sphi 0, %s14
      %s17 = sphi 0, %s15
      %s18 = sphi 0, %s16
    $region4: #{reverse.3} parent=1 // loop_header_branch
      %9 = sbr.rel (%p7) target = $region8
    $region5: #{reverse.3} parent=1 // loop_body
      %s11 = ssub.s32 %s6, 1
      %s12 = ssub.s32 %s6, 2
      %s19 = sadd.s32 1, %s14
      %p20 = scmp.ge.s32.totalorder %s19, 16
      %s21 = scalar_select %p20, 0, %s19
      %s22 = sadd.s32 1, %s13
      %s23 = scalar_select %p20, %s22, %s13
      %p24 = scmp.ge.s32.totalorder %s23, 1
      %s25 = scalar_select %p24, 0, %s23
      %p26 = scmp.le.s32.totalorder 1, %s6
      %p27 = scmp.lt.s32.totalorder %s6, 17
      %p28 = pnand %p26, %p27
      %p29 = pneg %p28
      // Predicated region
      $region9: #{reverse.3} parent=5 // pred_check
        _
      $region10: #{reverse.3} parent=5 // pred_check_branch
        %31 = sbr.rel (%p28) target = $region12
      $region11: #{reverse.3} parent=5 // pred_region
        %s32 = ssub.s32 %s6, 1
      $region12: #{reverse.3} parent=5 // pred_fallthru
        _
      %p33 = scmp.lt.s32.totalorder %s6, 16
      // Predicated region
      $region13: #{reverse.3} parent=5 // pred_check
        %p34 = pneg %p33
      $region14: #{reverse.3} parent=5 // pred_check_branch
        %36 = sbr.rel (%p34) target = $region16
      $region15: #{reverse.3} parent=5 // pred_region
        %s37 = sand.u32 %s6, 1
        %s38 = sand.u32 %s6, 1
        %s39 = smul.addr %s38, 2
        %s40 = scalar_lea.vmem [#allocation1], %s39
        %s41 = ssub.s32 15, %s14
        %s42 = smul.addr %s13, 16
        %s43 = sadd.s32 %s41, %s42
        %s44 = smul.addr %s43, 2
        %s45 = scalar_lea.vmem %s0, %s44
        // Predicated region
        $region17: #{reverse.3} parent=15 // pred_check
          _
        $region18: #{reverse.3} parent=15 // pred_check_branch
          %47 = sbr.rel (0) target = $region20
        $region19: #{reverse.3} parent=15 // pred_region
          // Predicated region
          $region21: #{reverse.3} parent=19 // pred_check
            _
          $region22: #{reverse.3} parent=19 // pred_check_branch
            %49 = sbr.rel target = $region24
          $region23: #{reverse.3} parent=19 // pred_region
            // Predicated region
            $region36: #{reverse.3} parent=23 // pred_check
              _
            $region37: #{reverse.3} parent=23 // pred_check_branch
              %65 = sbr.rel (0) target = $region39
            $region38: #{reverse.3} parent=23 // pred_region
              %s67 = ssub.s32 4, 1
              loop: start=0, step=1, limit=1
              $region40: #{reverse.3} parent=38 // loop_pre_header
                _
              $region41: #{reverse.3} parent=38 // loop_header
                %s69 = sphi 0, %s73
                %p70 = scmp.ge.s32.totalorder %s69, 1
                %s74 = sphi %s45, %s45
                %s75 = sphi %s40, %s40
              $region42: #{reverse.3} parent=38 // loop_header_branch
                %72 = sbr.rel (%p70) target = $region46
              $region43: #{reverse.3} parent=38 // loop_body
                %v76 = vld [vmem:[%s74] sm:%s67]
                %77 = vst [vmem:[%s75] sm:%s67] %v76
              $region44: #{reverse.3} parent=38 // loop_footer
                %s73 = sadd.s32 1, %s69
              $region45: #{reverse.3} parent=38 // loop_footer_branch
                %68 = sbr.rel target = $region41
              $region46: #{reverse.3} parent=38 // loop_exit
                _
            $region39: #{reverse.3} parent=23 // pred_fallthru
              _
          $region24: #{reverse.3} parent=19 // pred_fallthru
            _
          // Predicated region
          $region25: #{reverse.3} parent=19 // pred_check
            _
          $region26: #{reverse.3} parent=19 // pred_check_branch
            %51 = sbr.rel (0) target = $region28
          $region27: #{reverse.3} parent=19 // pred_region
            %s53 = ssub.s32 4, 1
            loop: start=0, step=1, limit=1
            $region29: #{reverse.3} parent=27 // loop_pre_header
              _
            $region30: #{reverse.3} parent=27 // loop_header
              %s55 = sphi 0, %s59
              %p56 = scmp.ge.s32.totalorder %s55, 1
              %s60 = sphi %s45, %s45
              %s61 = sphi %s40, %s40
            $region31: #{reverse.3} parent=27 // loop_header_branch
              %58 = sbr.rel (%p56) target = $region35
            $region32: #{reverse.3} parent=27 // loop_body
              %v62 = vld [vmem:[%s60] sm:%s53]
              %63 = vst [vmem:[%s61] sm:%s53] %v62
            $region33: #{reverse.3} parent=27 // loop_footer
              %s59 = sadd.s32 1, %s55
            $region34: #{reverse.3} parent=27 // loop_footer_branch
              %54 = sbr.rel target = $region30
            $region35: #{reverse.3} parent=27 // loop_exit
              _
          $region28: #{reverse.3} parent=19 // pred_fallthru
            _
        $region20: #{reverse.3} parent=15 // pred_fallthru
          _
        %78 = vnop
      $region16: #{reverse.3} parent=5 // pred_fallthru
        _
      %p79 = scmp.le.s32.totalorder 1, %s6
      %p80 = scmp.lt.s32.totalorder %s6, 17
      %p81 = pnand %p79, %p80
      %p82 = pneg %p81
      // Predicated region
      $region47: #{reverse.3} parent=5 // pred_check
        _
      $region48: #{reverse.3} parent=5 // pred_check_branch
        %84 = sbr.rel (%p81) target = $region50
      $region49: #{reverse.3} parent=5 // pred_region
        %s85 = ssub.s32 %s6, 1
        %s86 = sand.u32 %s11, 1
        %s87 = sand.u32 %s11, 1
        %s88 = smul.addr %s87, 2
        %s89 = scalar_lea.vmem [#allocation1], %s88
        %s90 = sand.u32 %s11, 1
        %s91 = sand.u32 %s11, 1
        %s92 = smul.addr %s91, 2
        %s93 = scalar_lea.vmem [#allocation1], %s92
        %s94 = sand.u32 %s11, 1
        %s95 = sand.u32 %s11, 1
        %s96 = smul.addr %s95, 2
        %s97 = scalar_lea.vmem [#allocation3], %s96
        %s99 = ssub.s32 4, 1
        %v100 = vld [vmem:[%s93] sm:%s99]
        %101 = vst [vmem:[#allocation0] sm:%s99] %v100
        %s102 = ssub.s32 15, %s16
        %v103 = vld [vmem:[#allocation0] sm:$0xff]
        %104 = vperm.xlu0 %4, %v103
        %v105 = vpop.permute.xlu0 %104
        %106 = vst [vmem:[#allocation2] sm:$0xff] %v105
        %s108 = ssub.s32 4, 1
        %v109 = vld [vmem:[#allocation2] sm:%s108]
        %s111 = ssub.s32 4, 1
        %112 = vst [vmem:[%s97] sm:%s111] %v109
        %s113 = sand.u32 %s11, 1
        %s114 = sand.u32 %s11, 1
        %s115 = smul.addr %s114, 2
        %s116 = scalar_lea.vmem [#allocation3], %s115
        %s117 = smul.addr %s15, 16
        %s118 = sadd.s32 %s16, %s117
        %s119 = smul.addr %s118, 2
        %s120 = scalar_lea.vmem %s1, %s119
        // Predicated region
        $region51: #{reverse.3} parent=49 // pred_check
          _
        $region52: #{reverse.3} parent=49 // pred_check_branch
          %122 = sbr.rel (0) target = $region54
        $region53: #{reverse.3} parent=49 // pred_region
          // Predicated region
          $region55: #{reverse.3} parent=53 // pred_check
            _
          $region56: #{reverse.3} parent=53 // pred_check_branch
            %124 = sbr.rel target = $region58
          $region57: #{reverse.3} parent=53 // pred_region
            // Predicated region
            $region70: #{reverse.3} parent=57 // pred_check
              _
            $region71: #{reverse.3} parent=57 // pred_check_branch
              %140 = sbr.rel (0) target = $region73
            $region72: #{reverse.3} parent=57 // pred_region
              %s142 = ssub.s32 4, 1
              loop: start=0, step=1, limit=1
              $region74: #{reverse.3} parent=72 // loop_pre_header
                _
              $region75: #{reverse.3} parent=72 // loop_header
                %s144 = sphi 0, %s148
                %p145 = scmp.ge.s32.totalorder %s144, 1
                %s149 = sphi %s116, %s116
                %s150 = sphi %s120, %s120
              $region76: #{reverse.3} parent=72 // loop_header_branch
                %147 = sbr.rel (%p145) target = $region80
              $region77: #{reverse.3} parent=72 // loop_body
                %v151 = vld [vmem:[%s149] sm:%s142]
                %152 = vst [vmem:[%s150] sm:%s142] %v151
              $region78: #{reverse.3} parent=72 // loop_footer
                %s148 = sadd.s32 1, %s144
              $region79: #{reverse.3} parent=72 // loop_footer_branch
                %143 = sbr.rel target = $region75
              $region80: #{reverse.3} parent=72 // loop_exit
                _
            $region73: #{reverse.3} parent=57 // pred_fallthru
              _
          $region58: #{reverse.3} parent=53 // pred_fallthru
            _
          // Predicated region
          $region59: #{reverse.3} parent=53 // pred_check
            _
          $region60: #{reverse.3} parent=53 // pred_check_branch
            %126 = sbr.rel (0) target = $region62
          $region61: #{reverse.3} parent=53 // pred_region
            %s128 = ssub.s32 4, 1
            loop: start=0, step=1, limit=1
            $region63: #{reverse.3} parent=61 // loop_pre_header
              _
            $region64: #{reverse.3} parent=61 // loop_header
              %s130 = sphi 0, %s134
              %p131 = scmp.ge.s32.totalorder %s130, 1
              %s135 = sphi %s116, %s116
              %s136 = sphi %s120, %s120
            $region65: #{reverse.3} parent=61 // loop_header_branch
              %133 = sbr.rel (%p131) target = $region69
            $region66: #{reverse.3} parent=61 // loop_body
              %v137 = vld [vmem:[%s135] sm:%s128]
              %138 = vst [vmem:[%s136] sm:%s128] %v137
            $region67: #{reverse.3} parent=61 // loop_footer
              %s134 = sadd.s32 1, %s130
            $region68: #{reverse.3} parent=61 // loop_footer_branch
              %129 = sbr.rel target = $region64
            $region69: #{reverse.3} parent=61 // loop_exit
              _
          $region62: #{reverse.3} parent=53 // pred_fallthru
            _
        $region54: #{reverse.3} parent=49 // pred_fallthru
          _
        %153 = vnop
      $region50: #{reverse.3} parent=5 // pred_fallthru
        _
      %p154 = scmp.le.s32.totalorder 2, %s6
      // Predicated region
      $region81: #{reverse.3} parent=5 // pred_check
        %p155 = pneg %p154
      $region82: #{reverse.3} parent=5 // pred_check_branch
        %157 = sbr.rel (%p155) target = $region84
      $region83: #{reverse.3} parent=5 // pred_region
        %s158 = ssub.s32 %s6, 2
        %s159 = sand.u32 %s12, 1
        %s160 = sand.u32 %s12, 1
        %s161 = smul.addr %s160, 2
        %s162 = scalar_lea.vmem [#allocation3], %s161
      $region84: #{reverse.3} parent=5 // pred_fallthru
        _
    $region6: #{reverse.3} parent=1 // loop_footer
      %s10 = sadd.s32 1, %s6
    $region7: #{reverse.3} parent=1 // loop_footer_branch
      %5 = sbr.rel target = $region3
    $region8: #{reverse.3} parent=1 // loop_exit
      _

</llo_original>
